<compile_context>
chip_gen: v7x
topology: tpu7x:2x2x1
jax: 0.10.0
libtpu: 0.0.40
codegen_flags: <defaults>
</compile_context>

<pallas_src>
import functools

import jax
import jax.numpy as jnp
from jax import lax
from jax.experimental import pallas as pl
from jax.experimental.pallas import tpu as pltpu


DILATIONS = (2, 4, 8)
KSIZE = 7


def _largek_kernel(x_ref, row_ref, col_ref, ws_ref, bs_ref, dww_ref, dwb_ref,
                   wm_ref, bm_ref, o_ref, y_sc, z_sc, *,
                   C, H, W, dilations, ksize, n_acc=4):
    """One batch image per grid step.  Layout: (channels, H*W), spatial on lanes."""
    K = ksize
    KK = K * K
    HW = H * W
    half = K // 2
    f32 = jnp.float32

    xv = x_ref[0].astype(f32)                        # (C, HW)
    row = row_ref[...]                               # (1, HW) int32: flat -> row
    col = col_ref[...]                               # (1, HW) int32: flat -> col

    # ---- hoisted 1x1 channel_split: ONE (3C,C)@(C,HW) MXU dot, bias once ----
    y_sc[...] = (jnp.dot(ws_ref[...].astype(f32), xv,
                         preferred_element_type=f32)
                 + bs_ref[...].astype(f32))          # (3C, HW)

    def axis_ok(plane, off, extent):
        # validity of (index + off) in [0, extent); trivially-true halves are
        # dropped at trace time (off == 0 -> no mask at all).
        if off > 0:
            return plane < (extent - off)
        if off < 0:
            return plane >= (-off)
        return None

    for r, d in enumerate(dilations):
        yb = y_sc[pl.ds(r * C, C), :]                # (C, HW)

        row_ok = [axis_ok(row, (ki - half) * d, H) for ki in range(K)]
        col_ok = [axis_ok(col, (kj - half) * d, W) for kj in range(K)]

        # ---- dilated depthwise KxK conv: live taps only, 4 accumulators ----
        accs = [None] * n_acc
        t = 0
        for ki in range(K):
            a = (ki - half) * d
            if abs(a) >= H:
                continue                             # tap row never inside image
            for kj in range(K):
                b = (kj - half) * d
                if abs(b) >= W:
                    continue                         # tap col never inside image
                s = a * W + b                        # flat lane offset of source
                # |s| < HW for every live tap; the row/col masks zero every lane
                # whose rolled source wrapped around or crossed a row edge, which
                # reproduces the module's zero "same" padding exactly.
                src = pltpu.roll(yb, shift=(-s) % HW, axis=1) if s else yb
                rok, cok = row_ok[ki], col_ok[kj]
                if rok is not None and cok is not None:
                    cond = rok & cok
                else:
                    cond = rok if rok is not None else cok
                if cond is not None:
                    src = jnp.where(cond, src, 0.0)
                w_tap = dww_ref[:, pl.ds(r * KK + ki * K + kj, 1)].astype(f32)
                contrib = src * w_tap                # (C,HW) * (C,1)
                k = t % n_acc
                accs[k] = contrib if accs[k] is None else accs[k] + contrib
                t += 1

        dwb_r = dwb_ref[:, pl.ds(r, 1)].astype(f32)  # (C, 1)
        zb = None
        for acc in accs:
            if acc is not None:
                zb = acc if zb is None else zb + acc
        if zb is None:                               # (never hit at these shapes)
            zb = jnp.zeros((C, HW), f32) + dwb_r
        else:
            zb = zb + dwb_r
        z_sc[pl.ds(r * C, C), :] = zb                # stack branches -> (3C, HW)

    # ---- hoisted 1x1 channel_mix: ONE (C,3C)@(3C,HW) MXU dot, bias once ----
    out = jnp.dot(wm_ref[...].astype(f32), z_sc[...],
                  preferred_element_type=f32) + bm_ref[...].astype(f32)
    o_ref[0] = out.astype(o_ref.dtype)


def largek_forward(x, w_split, b_split, dw_w, dw_b, w_mix, b_mix,
                   dilations=DILATIONS):
    """Fused LargeK forward.

    x:       (N, C, H, W)
    w_split: (3C, C, 1, 1)    b_split: (3C,)
    dw_w:    (3, C, 1, K, K)  dw_b:    (3, C)   (one depthwise conv per branch)
    w_mix:   (C, 3C, 1, 1)    b_mix:   (C,)
    """
    N, C, H, W = x.shape
    HW = H * W
    nb = len(dilations)
    K = dw_w.shape[-1]
    f32 = jnp.float32

    x2 = x.reshape(N, C, HW)

    # 1x1 split / mix weights as plain matrices (single MXU dot each).
    ws = w_split[:, :, 0, 0].astype(f32)                        # (3C, C)
    bs = b_split.reshape(nb * C, 1).astype(f32)                 # (3C, 1)
    wm = w_mix[:, :, 0, 0].astype(f32)                          # (C, 3C)
    bm = b_mix.reshape(C, 1).astype(f32)                        # (C, 1)

    # Depthwise weights: channels on sublanes, tap index on lanes -> (C, 3*K*K)
    # (avoids 147 per-tap (C,1) blocks each padded to a full (8,128) tile).
    dww = jnp.transpose(dw_w[:, :, 0, :, :].reshape(nb, C, K * K),
                        (1, 0, 2)).reshape(C, nb * K * K).astype(f32)
    dwb = jnp.transpose(dw_b, (1, 0)).astype(f32)               # (C, nb)

    # Tiny int32 row/col index planes; the per-tap border masks are generated
    # in-kernel from these (replaces 147 precomputed (1,HW) f32 masks).
    row = jnp.repeat(jnp.arange(H, dtype=jnp.int32), W).reshape(1, HW)
    col = jnp.tile(jnp.arange(W, dtype=jnp.int32), H).reshape(1, HW)

    kernel = functools.partial(_largek_kernel, C=C, H=H, W=W,
                               dilations=tuple(dilations), ksize=K)

    out = pl.pallas_call(
        kernel,
        out_shape=jax.ShapeDtypeStruct((N, C, HW), x.dtype),
        grid_spec=pltpu.PrefetchScalarGridSpec(
            num_scalar_prefetch=0,
            grid=(N,),
            in_specs=[
                pl.BlockSpec((1, C, HW), lambda i: (i, 0, 0)),         # x
                pl.BlockSpec((1, HW), lambda i: (0, 0)),               # row plane
                pl.BlockSpec((1, HW), lambda i: (0, 0)),               # col plane
                pl.BlockSpec((nb * C, C), lambda i: (0, 0)),           # ws
                pl.BlockSpec((nb * C, 1), lambda i: (0, 0)),           # bs
                pl.BlockSpec((C, nb * K * K), lambda i: (0, 0)),       # dww
                pl.BlockSpec((C, nb), lambda i: (0, 0)),               # dwb
                pl.BlockSpec((C, nb * C), lambda i: (0, 0)),           # wm
                pl.BlockSpec((C, 1), lambda i: (0, 0)),                # bm
            ],
            out_specs=pl.BlockSpec((1, C, HW), lambda i: (i, 0, 0)),
            scratch_shapes=[pltpu.VMEM((nb * C, HW), jnp.float32),     # y (3C,HW)
                            pltpu.VMEM((nb * C, HW), jnp.float32)],    # z (3C,HW)
        ),
        compiler_params=pltpu.CompilerParams(
            dimension_semantics=("parallel",)),
    )(x2, row, col, ws, bs, dww, dwb, wm, bm)
    return out.reshape(N, C, H, W)


def largek_reference(x, w_split, b_split, dw_w, dw_b, w_mix, b_mix,
                     dilations=DILATIONS):
    """Pure-JAX reference using lax.conv_general_dilated (NCHW)."""
    C = x.shape[1]
    K = dw_w.shape[-1]
    half = K // 2
    dn = ('NCHW', 'OIHW', 'NCHW')
    y = lax.conv_general_dilated(x, w_split, (1, 1), 'VALID',
                                 dimension_numbers=dn,
                                 precision=lax.Precision.HIGHEST)
    y = y + b_split.reshape(1, -1, 1, 1)
    parts = []
    for r, d in enumerate(dilations):
        yb = y[:, r * C:(r + 1) * C]
        p = half * d
        zb = lax.conv_general_dilated(yb, dw_w[r], (1, 1),
                                      padding=((p, p), (p, p)),
                                      rhs_dilation=(d, d),
                                      feature_group_count=C,
                                      dimension_numbers=dn,
                                      precision=lax.Precision.HIGHEST)
        parts.append(zb + dw_b[r].reshape(1, -1, 1, 1))
    z = jnp.concatenate(parts, axis=1)
    out = lax.conv_general_dilated(z, w_mix, (1, 1), 'VALID',
                                   dimension_numbers=dn,
                                   precision=lax.Precision.HIGHEST)
    return out + b_mix.reshape(1, -1, 1, 1)


if __name__ == "__main__":
    key = jax.random.PRNGKey(0)
    ks = jax.random.split(key, 7)

    N, C, H, W = 2, 4, 16, 16          # batch=2, dim=4, spatial=16
    x = jax.random.normal(ks[0], (N, C, H, W), jnp.float32)

    w_split = jax.random.normal(ks[1], (3 * C, C, 1, 1), jnp.float32) * 0.2
    b_split = jax.random.normal(ks[2], (3 * C,), jnp.float32) * 0.1
    dw_w = jax.random.normal(ks[3], (3, C, 1, KSIZE, KSIZE), jnp.float32) * 0.1
    dw_b = jax.random.normal(ks[4], (3, C), jnp.float32) * 0.1
    w_mix = jax.random.normal(ks[5], (C, 3 * C, 1, 1), jnp.float32) * 0.2
    b_mix = jax.random.normal(ks[6], (C,), jnp.float32) * 0.1

    out = largek_forward(x, w_split, b_split, dw_w, dw_b, w_mix, b_mix)
    out = jax.block_until_ready(out)

    ref = largek_reference(x, w_split, b_split, dw_w, dw_b, w_mix, b_mix)
    assert out.shape == (N, C, H, W)
    assert jnp.allclose(out, ref, atol=1e-4, rtol=1e-4), "mismatch vs reference"

    print("KERNEL_OK")
</pallas_src>

<mosaic_0001>
module attributes {stable_mosaic.version = 11 : i64} {
  func.func @_largek_kernel(%arg0: i32, %arg1: memref<1x4x256xf32, #tpu.memory_space<vmem>>, %arg2: memref<1x256xi32, #tpu.memory_space<vmem>>, %arg3: memref<1x256xi32, #tpu.memory_space<vmem>>, %arg4: memref<12x4xf32, #tpu.memory_space<vmem>>, %arg5: memref<12x1xf32, #tpu.memory_space<vmem>>, %arg6: memref<4x147xf32, #tpu.memory_space<vmem>>, %arg7: memref<4x3xf32, #tpu.memory_space<vmem>>, %arg8: memref<4x12xf32, #tpu.memory_space<vmem>>, %arg9: memref<4x1xf32, #tpu.memory_space<vmem>>, %arg10: memref<1x4x256xf32, #tpu.memory_space<vmem>>, %arg11: memref<12x256xf32, #tpu.memory_space<vmem>>, %arg12: memref<12x256xf32, #tpu.memory_space<vmem>>) attributes {dimension_semantics = [#tpu.dimension_semantics<parallel>], iteration_bounds = array<i64: 2>, scalar_prefetch = 0 : i64, scratch_operands = 2 : i64, tpu.core_type = #tpu.core_type<tc>, window_params = [{transform_indices = @transform_0, window_bounds = array<i64: 1, 4, 256>}, {pipeline_mode = #tpu.pipeline_mode<synchronous>, transform_indices = @transform_1, window_bounds = array<i64: 1, 256>}, {pipeline_mode = #tpu.pipeline_mode<synchronous>, transform_indices = @transform_2, window_bounds = array<i64: 1, 256>}, {pipeline_mode = #tpu.pipeline_mode<synchronous>, transform_indices = @transform_3, window_bounds = array<i64: 12, 4>}, {pipeline_mode = #tpu.pipeline_mode<synchronous>, transform_indices = @transform_4, window_bounds = array<i64: 12, 1>}, {pipeline_mode = #tpu.pipeline_mode<synchronous>, transform_indices = @transform_5, window_bounds = array<i64: 4, 147>}, {pipeline_mode = #tpu.pipeline_mode<synchronous>, transform_indices = @transform_6, window_bounds = array<i64: 4, 3>}, {pipeline_mode = #tpu.pipeline_mode<synchronous>, transform_indices = @transform_7, window_bounds = array<i64: 4, 12>}, {pipeline_mode = #tpu.pipeline_mode<synchronous>, transform_indices = @transform_8, window_bounds = array<i64: 4, 1>}, {transform_indices = @transform_9, window_bounds = array<i64: 1, 4, 256>}]} {
    %c0 = arith.constant 0 : index
    %c0_0 = arith.constant 0 : index
    %c0_1 = arith.constant 0 : index
    %0 = vector.load %arg1[%c0, %c0_0, %c0_1] : memref<1x4x256xf32, #tpu.memory_space<vmem>>, vector<1x4x256xf32>
    %1 = vector.shape_cast %0 : vector<1x4x256xf32> to vector<4x256xf32>
    %c0_2 = arith.constant 0 : index
    %c0_3 = arith.constant 0 : index
    %2 = vector.load %arg2[%c0_2, %c0_3] : memref<1x256xi32, #tpu.memory_space<vmem>>, vector<1x256xi32>
    %c0_4 = arith.constant 0 : index
    %c0_5 = arith.constant 0 : index
    %3 = vector.load %arg3[%c0_4, %c0_5] : memref<1x256xi32, #tpu.memory_space<vmem>>, vector<1x256xi32>
    %c0_6 = arith.constant 0 : index
    %c0_7 = arith.constant 0 : index
    %4 = vector.load %arg4[%c0_6, %c0_7] : memref<12x4xf32, #tpu.memory_space<vmem>>, vector<12x4xf32>
    %cst = arith.constant dense<0.000000e+00> : vector<12x256xf32>
    %5 = tpu.matmul %4, %1, %cst {dimension_numbers = #tpu.dot_dimension_numbers<[1], [0], [0], [1], [0, 0, 1, 1], [], []>} : vector<12x4xf32>, vector<4x256xf32>, vector<12x256xf32> -> vector<12x256xf32>
    %c0_8 = arith.constant 0 : index
    %c0_9 = arith.constant 0 : index
    %6 = vector.load %arg5[%c0_8, %c0_9] : memref<12x1xf32, #tpu.memory_space<vmem>>, vector<12x1xf32>
    %7 = vector.broadcast %6 : vector<12x1xf32> to vector<12x256xf32>
    %8 = arith.addf %5, %7 : vector<12x256xf32>
    %c0_10 = arith.constant 0 : index
    %c0_11 = arith.constant 0 : index
    %9 = vector.load %arg11[%c0_10, %c0_11] : memref<12x256xf32, #tpu.memory_space<vmem>>, vector<12x256xf32>
    tpu.vector_store %arg11[%c0_10, %c0_11], %8 {strides = array<i32>} : memref<12x256xf32, #tpu.memory_space<vmem>>, vector<12x256xf32>,
    %c0_12 = arith.constant 0 : index
    %c0_13 = arith.constant 0 : index
    %10 = vector.load %arg11[%c0_12, %c0_13] : memref<12x256xf32, #tpu.memory_space<vmem>>, vector<4x256xf32>
    %c6_i32 = arith.constant 6 : i32
    %11 = vector.broadcast %c6_i32 : i32 to vector<1x256xi32>
    %12 = arith.cmpi sge, %2, %11 : vector<1x256xi32>
    %c4_i32 = arith.constant 4 : i32
    %13 = vector.broadcast %c4_i32 : i32 to vector<1x256xi32>
    %14 = arith.cmpi sge, %2, %13 : vector<1x256xi32>
    %c2_i32 = arith.constant 2 : i32
    %15 = vector.broadcast %c2_i32 : i32 to vector<1x256xi32>
    %16 = arith.cmpi sge, %2, %15 : vector<1x256xi32>
    %c14_i32 = arith.constant 14 : i32
    %17 = vector.broadcast %c14_i32 : i32 to vector<1x256xi32>
    %18 = arith.cmpi slt, %2, %17 : vector<1x256xi32>
    %c12_i32 = arith.constant 12 : i32
    %19 = vector.broadcast %c12_i32 : i32 to vector<1x256xi32>
    %20 = arith.cmpi slt, %2, %19 : vector<1x256xi32>
    %c10_i32 = arith.constant 10 : i32
    %21 = vector.broadcast %c10_i32 : i32 to vector<1x256xi32>
    %22 = arith.cmpi slt, %2, %21 : vector<1x256xi32>
    %c6_i32_14 = arith.constant 6 : i32
    %23 = vector.broadcast %c6_i32_14 : i32 to vector<1x256xi32>
    %24 = arith.cmpi sge, %3, %23 : vector<1x256xi32>
    %c4_i32_15 = arith.constant 4 : i32
    %25 = vector.broadcast %c4_i32_15 : i32 to vector<1x256xi32>
    %26 = arith.cmpi sge, %3, %25 : vector<1x256xi32>
    %c2_i32_16 = arith.constant 2 : i32
    %27 = vector.broadcast %c2_i32_16 : i32 to vector<1x256xi32>
    %28 = arith.cmpi sge, %3, %27 : vector<1x256xi32>
    %c14_i32_17 = arith.constant 14 : i32
    %29 = vector.broadcast %c14_i32_17 : i32 to vector<1x256xi32>
    %30 = arith.cmpi slt, %3, %29 : vector<1x256xi32>
    %c12_i32_18 = arith.constant 12 : i32
    %31 = vector.broadcast %c12_i32_18 : i32 to vector<1x256xi32>
    %32 = arith.cmpi slt, %3, %31 : vector<1x256xi32>
    %c10_i32_19 = arith.constant 10 : i32
    %33 = vector.broadcast %c10_i32_19 : i32 to vector<1x256xi32>
    %34 = arith.cmpi slt, %3, %33 : vector<1x256xi32>
    %c102_i32 = arith.constant 102 : i32
    %35 = tpu.dynamic_rotate %10 by %c102_i32 dim 1 : vector<4x256xf32>, i32 -> vector<4x256xf32>
    %36 = arith.andi %12, %24 : vector<1x256xi1>
    %cst_20 = arith.constant 0.000000e+00 : f32
    %37 = vector.shape_cast %36 : vector<1x256xi1> to vector<1x256xi1>
    %38 = vector.broadcast %37 : vector<1x256xi1> to vector<4x256xi1>
    %39 = vector.broadcast %cst_20 : f32 to vector<4x256xf32>
    %40 = arith.select %38, %35, %39 : vector<4x256xi1>, vector<4x256xf32>
    %c0_21 = arith.constant 0 : index
    %c0_22 = arith.constant 0 : index
    %41 = vector.load %arg6[%c0_21, %c0_22] : memref<4x147xf32, #tpu.memory_space<vmem>>, vector<4x1xf32>
    %42 = vector.broadcast %41 : vector<4x1xf32> to vector<4x256xf32>
    %43 = arith.mulf %40, %42 : vector<4x256xf32>
    %c100_i32 = arith.constant 100 : i32
    %44 = tpu.dynamic_rotate %10 by %c100_i32 dim 1 : vector<4x256xf32>, i32 -> vector<4x256xf32>
    %45 = arith.andi %12, %26 : vector<1x256xi1>
    %cst_23 = arith.constant 0.000000e+00 : f32
    %46 = vector.shape_cast %45 : vector<1x256xi1> to vector<1x256xi1>
    %47 = vector.broadcast %46 : vector<1x256xi1> to vector<4x256xi1>
    %48 = vector.broadcast %cst_23 : f32 to vector<4x256xf32>
    %49 = arith.select %47, %44, %48 : vector<4x256xi1>, vector<4x256xf32>
    %c0_24 = arith.constant 0 : index
    %c1 = arith.constant 1 : index
    %50 = vector.load %arg6[%c0_24, %c1] : memref<4x147xf32, #tpu.memory_space<vmem>>, vector<4x1xf32>
    %51 = vector.broadcast %50 : vector<4x1xf32> to vector<4x256xf32>
    %52 = arith.mulf %49, %51 : vector<4x256xf32>
    %c98_i32 = arith.constant 98 : i32
    %53 = tpu.dynamic_rotate %10 by %c98_i32 dim 1 : vector<4x256xf32>, i32 -> vector<4x256xf32>
    %54 = arith.andi %12, %28 : vector<1x256xi1>
    %cst_25 = arith.constant 0.000000e+00 : f32
    %55 = vector.shape_cast %54 : vector<1x256xi1> to vector<1x256xi1>
    %56 = vector.broadcast %55 : vector<1x256xi1> to vector<4x256xi1>
    %57 = vector.broadcast %cst_25 : f32 to vector<4x256xf32>
    %58 = arith.select %56, %53, %57 : vector<4x256xi1>, vector<4x256xf32>
    %c0_26 = arith.constant 0 : index
    %c2 = arith.constant 2 : index
    %59 = vector.load %arg6[%c0_26, %c2] : memref<4x147xf32, #tpu.memory_space<vmem>>, vector<4x1xf32>
    %60 = vector.broadcast %59 : vector<4x1xf32> to vector<4x256xf32>
    %61 = arith.mulf %58, %60 : vector<4x256xf32>
    %c96_i32 = arith.constant 96 : i32
    %62 = tpu.dynamic_rotate %10 by %c96_i32 dim 1 : vector<4x256xf32>, i32 -> vector<4x256xf32>
    %cst_27 = arith.constant 0.000000e+00 : f32
    %63 = vector.shape_cast %12 : vector<1x256xi1> to vector<1x256xi1>
    %64 = vector.broadcast %63 : vector<1x256xi1> to vector<4x256xi1>
    %65 = vector.broadcast %cst_27 : f32 to vector<4x256xf32>
    %66 = arith.select %64, %62, %65 : vector<4x256xi1>, vector<4x256xf32>
    %c0_28 = arith.constant 0 : index
    %c3 = arith.constant 3 : index
    %67 = vector.load %arg6[%c0_28, %c3] : memref<4x147xf32, #tpu.memory_space<vmem>>, vector<4x1xf32>
    %68 = vector.broadcast %67 : vector<4x1xf32> to vector<4x256xf32>
    %69 = arith.mulf %66, %68 : vector<4x256xf32>
    %c94_i32 = arith.constant 94 : i32
    %70 = tpu.dynamic_rotate %10 by %c94_i32 dim 1 : vector<4x256xf32>, i32 -> vector<4x256xf32>
    %71 = arith.andi %12, %30 : vector<1x256xi1>
    %cst_29 = arith.constant 0.000000e+00 : f32
    %72 = vector.shape_cast %71 : vector<1x256xi1> to vector<1x256xi1>
    %73 = vector.broadcast %72 : vector<1x256xi1> to vector<4x256xi1>
    %74 = vector.broadcast %cst_29 : f32 to vector<4x256xf32>
    %75 = arith.select %73, %70, %74 : vector<4x256xi1>, vector<4x256xf32>
    %c0_30 = arith.constant 0 : index
    %c4 = arith.constant 4 : index
    %76 = vector.load %arg6[%c0_30, %c4] : memref<4x147xf32, #tpu.memory_space<vmem>>, vector<4x1xf32>
    %77 = vector.broadcast %76 : vector<4x1xf32> to vector<4x256xf32>
    %78 = arith.mulf %75, %77 : vector<4x256xf32>
    %79 = arith.addf %43, %78 : vector<4x256xf32>
    %c92_i32 = arith.constant 92 : i32
    %80 = tpu.dynamic_rotate %10 by %c92_i32 dim 1 : vector<4x256xf32>, i32 -> vector<4x256xf32>
    %81 = arith.andi %12, %32 : vector<1x256xi1>
    %cst_31 = arith.constant 0.000000e+00 : f32
    %82 = vector.shape_cast %81 : vector<1x256xi1> to vector<1x256xi1>
    %83 = vector.broadcast %82 : vector<1x256xi1> to vector<4x256xi1>
    %84 = vector.broadcast %cst_31 : f32 to vector<4x256xf32>
    %85 = arith.select %83, %80, %84 : vector<4x256xi1>, vector<4x256xf32>
    %c0_32 = arith.constant 0 : index
    %c5 = arith.constant 5 : index
    %86 = vector.load %arg6[%c0_32, %c5] : memref<4x147xf32, #tpu.memory_space<vmem>>, vector<4x1xf32>
    %87 = vector.broadcast %86 : vector<4x1xf32> to vector<4x256xf32>
    %88 = arith.mulf %85, %87 : vector<4x256xf32>
    %89 = arith.addf %52, %88 : vector<4x256xf32>
    %c90_i32 = arith.constant 90 : i32
    %90 = tpu.dynamic_rotate %10 by %c90_i32 dim 1 : vector<4x256xf32>, i32 -> vector<4x256xf32>
    %91 = arith.andi %12, %34 : vector<1x256xi1>
    %cst_33 = arith.constant 0.000000e+00 : f32
    %92 = vector.shape_cast %91 : vector<1x256xi1> to vector<1x256xi1>
    %93 = vector.broadcast %92 : vector<1x256xi1> to vector<4x256xi1>
    %94 = vector.broadcast %cst_33 : f32 to vector<4x256xf32>
    %95 = arith.select %93, %90, %94 : vector<4x256xi1>, vector<4x256xf32>
    %c0_34 = arith.constant 0 : index
    %c6 = arith.constant 6 : index
    %96 = vector.load %arg6[%c0_34, %c6] : memref<4x147xf32, #tpu.memory_space<vmem>>, vector<4x1xf32>
    %97 = vector.broadcast %96 : vector<4x1xf32> to vector<4x256xf32>
    %98 = arith.mulf %95, %97 : vector<4x256xf32>
    %99 = arith.addf %61, %98 : vector<4x256xf32>
    %c70_i32 = arith.constant 70 : i32
    %100 = tpu.dynamic_rotate %10 by %c70_i32 dim 1 : vector<4x256xf32>, i32 -> vector<4x256xf32>
    %101 = arith.andi %14, %24 : vector<1x256xi1>
    %cst_35 = arith.constant 0.000000e+00 : f32
    %102 = vector.shape_cast %101 : vector<1x256xi1> to vector<1x256xi1>
    %103 = vector.broadcast %102 : vector<1x256xi1> to vector<4x256xi1>
    %104 = vector.broadcast %cst_35 : f32 to vector<4x256xf32>
    %105 = arith.select %103, %100, %104 : vector<4x256xi1>, vector<4x256xf32>
    %c0_36 = arith.constant 0 : index
    %c7 = arith.constant 7 : index
    %106 = vector.load %arg6[%c0_36, %c7] : memref<4x147xf32, #tpu.memory_space<vmem>>, vector<4x1xf32>
    %107 = vector.broadcast %106 : vector<4x1xf32> to vector<4x256xf32>
    %108 = arith.mulf %105, %107 : vector<4x256xf32>
    %109 = arith.addf %69, %108 : vector<4x256xf32>
    %c68_i32 = arith.constant 68 : i32
    %110 = tpu.dynamic_rotate %10 by %c68_i32 dim 1 : vector<4x256xf32>, i32 -> vector<4x256xf32>
    %111 = arith.andi %14, %26 : vector<1x256xi1>
    %cst_37 = arith.constant 0.000000e+00 : f32
    %112 = vector.shape_cast %111 : vector<1x256xi1> to vector<1x256xi1>
    %113 = vector.broadcast %112 : vector<1x256xi1> to vector<4x256xi1>
    %114 = vector.broadcast %cst_37 : f32 to vector<4x256xf32>
    %115 = arith.select %113, %110, %114 : vector<4x256xi1>, vector<4x256xf32>
    %c0_38 = arith.constant 0 : index
    %c8 = arith.constant 8 : index
    %116 = vector.load %arg6[%c0_38, %c8] : memref<4x147xf32, #tpu.memory_space<vmem>>, vector<4x1xf32>
    %117 = vector.broadcast %116 : vector<4x1xf32> to vector<4x256xf32>
    %118 = arith.mulf %115, %117 : vector<4x256xf32>
    %119 = arith.addf %79, %118 : vector<4x256xf32>
    %c66_i32 = arith.constant 66 : i32
    %120 = tpu.dynamic_rotate %10 by %c66_i32 dim 1 : vector<4x256xf32>, i32 -> vector<4x256xf32>
    %121 = arith.andi %14, %28 : vector<1x256xi1>
    %cst_39 = arith.constant 0.000000e+00 : f32
    %122 = vector.shape_cast %121 : vector<1x256xi1> to vector<1x256xi1>
    %123 = vector.broadcast %122 : vector<1x256xi1> to vector<4x256xi1>
    %124 = vector.broadcast %cst_39 : f32 to vector<4x256xf32>
    %125 = arith.select %123, %120, %124 : vector<4x256xi1>, vector<4x256xf32>
    %c0_40 = arith.constant 0 : index
    %c9 = arith.constant 9 : index
    %126 = vector.load %arg6[%c0_40, %c9] : memref<4x147xf32, #tpu.memory_space<vmem>>, vector<4x1xf32>
    %127 = vector.broadcast %126 : vector<4x1xf32> to vector<4x256xf32>
    %128 = arith.mulf %125, %127 : vector<4x256xf32>
    %129 = arith.addf %89, %128 : vector<4x256xf32>
    %c64_i32 = arith.constant 64 : i32
    %130 = tpu.dynamic_rotate %10 by %c64_i32 dim 1 : vector<4x256xf32>, i32 -> vector<4x256xf32>
    %cst_41 = arith.constant 0.000000e+00 : f32
    %131 = vector.shape_cast %14 : vector<1x256xi1> to vector<1x256xi1>
    %132 = vector.broadcast %131 : vector<1x256xi1> to vector<4x256xi1>
    %133 = vector.broadcast %cst_41 : f32 to vector<4x256xf32>
    %134 = arith.select %132, %130, %133 : vector<4x256xi1>, vector<4x256xf32>
    %c0_42 = arith.constant 0 : index
    %c10 = arith.constant 10 : index
    %135 = vector.load %arg6[%c0_42, %c10] : memref<4x147xf32, #tpu.memory_space<vmem>>, vector<4x1xf32>
    %136 = vector.broadcast %135 : vector<4x1xf32> to vector<4x256xf32>
    %137 = arith.mulf %134, %136 : vector<4x256xf32>
    %138 = arith.addf %99, %137 : vector<4x256xf32>
    %c62_i32 = arith.constant 62 : i32
    %139 = tpu.dynamic_rotate %10 by %c62_i32 dim 1 : vector<4x256xf32>, i32 -> vector<4x256xf32>
    %140 = arith.andi %14, %30 : vector<1x256xi1>
    %cst_43 = arith.constant 0.000000e+00 : f32
    %141 = vector.shape_cast %140 : vector<1x256xi1> to vector<1x256xi1>
    %142 = vector.broadcast %141 : vector<1x256xi1> to vector<4x256xi1>
    %143 = vector.broadcast %cst_43 : f32 to vector<4x256xf32>
    %144 = arith.select %142, %139, %143 : vector<4x256xi1>, vector<4x256xf32>
    %c0_44 = arith.constant 0 : index
    %c11 = arith.constant 11 : index
    %145 = vector.load %arg6[%c0_44, %c11] : memref<4x147xf32, #tpu.memory_space<vmem>>, vector<4x1xf32>
    %146 = vector.broadcast %145 : vector<4x1xf32> to vector<4x256xf32>
    %147 = arith.mulf %144, %146 : vector<4x256xf32>
    %148 = arith.addf %109, %147 : vector<4x256xf32>
    %c60_i32 = arith.constant 60 : i32
    %149 = tpu.dynamic_rotate %10 by %c60_i32 dim 1 : vector<4x256xf32>, i32 -> vector<4x256xf32>
    %150 = arith.andi %14, %32 : vector<1x256xi1>
    %cst_45 = arith.constant 0.000000e+00 : f32
    %151 = vector.shape_cast %150 : vector<1x256xi1> to vector<1x256xi1>
    %152 = vector.broadcast %151 : vector<1x256xi1> to vector<4x256xi1>
    %153 = vector.broadcast %cst_45 : f32 to vector<4x256xf32>
    %154 = arith.select %152, %149, %153 : vector<4x256xi1>, vector<4x256xf32>
    %c0_46 = arith.constant 0 : index
    %c12 = arith.constant 12 : index
    %155 = vector.load %arg6[%c0_46, %c12] : memref<4x147xf32, #tpu.memory_space<vmem>>, vector<4x1xf32>
    %156 = vector.broadcast %155 : vector<4x1xf32> to vector<4x256xf32>
    %157 = arith.mulf %154, %156 : vector<4x256xf32>
    %158 = arith.addf %119, %157 : vector<4x256xf32>
    %c58_i32 = arith.constant 58 : i32
    %159 = tpu.dynamic_rotate %10 by %c58_i32 dim 1 : vector<4x256xf32>, i32 -> vector<4x256xf32>
    %160 = arith.andi %14, %34 : vector<1x256xi1>
    %cst_47 = arith.constant 0.000000e+00 : f32
    %161 = vector.shape_cast %160 : vector<1x256xi1> to vector<1x256xi1>
    %162 = vector.broadcast %161 : vector<1x256xi1> to vector<4x256xi1>
    %163 = vector.broadcast %cst_47 : f32 to vector<4x256xf32>
    %164 = arith.select %162, %159, %163 : vector<4x256xi1>, vector<4x256xf32>
    %c0_48 = arith.constant 0 : index
    %c13 = arith.constant 13 : index
    %165 = vector.load %arg6[%c0_48, %c13] : memref<4x147xf32, #tpu.memory_space<vmem>>, vector<4x1xf32>
    %166 = vector.broadcast %165 : vector<4x1xf32> to vector<4x256xf32>
    %167 = arith.mulf %164, %166 : vector<4x256xf32>
    %168 = arith.addf %129, %167 : vector<4x256xf32>
    %c38_i32 = arith.constant 38 : i32
    %169 = tpu.dynamic_rotate %10 by %c38_i32 dim 1 : vector<4x256xf32>, i32 -> vector<4x256xf32>
    %170 = arith.andi %16, %24 : vector<1x256xi1>
    %cst_49 = arith.constant 0.000000e+00 : f32
    %171 = vector.shape_cast %170 : vector<1x256xi1> to vector<1x256xi1>
    %172 = vector.broadcast %171 : vector<1x256xi1> to vector<4x256xi1>
    %173 = vector.broadcast %cst_49 : f32 to vector<4x256xf32>
    %174 = arith.select %172, %169, %173 : vector<4x256xi1>, vector<4x256xf32>
    %c0_50 = arith.constant 0 : index
    %c14 = arith.constant 14 : index
    %175 = vector.load %arg6[%c0_50, %c14] : memref<4x147xf32, #tpu.memory_space<vmem>>, vector<4x1xf32>
    %176 = vector.broadcast %175 : vector<4x1xf32> to vector<4x256xf32>
    %177 = arith.mulf %174, %176 : vector<4x256xf32>
    %178 = arith.addf %138, %177 : vector<4x256xf32>
    %c36_i32 = arith.constant 36 : i32
    %179 = tpu.dynamic_rotate %10 by %c36_i32 dim 1 : vector<4x256xf32>, i32 -> vector<4x256xf32>
    %180 = arith.andi %16, %26 : vector<1x256xi1>
    %cst_51 = arith.constant 0.000000e+00 : f32
    %181 = vector.shape_cast %180 : vector<1x256xi1> to vector<1x256xi1>
    %182 = vector.broadcast %181 : vector<1x256xi1> to vector<4x256xi1>
    %183 = vector.broadcast %cst_51 : f32 to vector<4x256xf32>
    %184 = arith.select %182, %179, %183 : vector<4x256xi1>, vector<4x256xf32>
    %c0_52 = arith.constant 0 : index
    %c15 = arith.constant 15 : index
    %185 = vector.load %arg6[%c0_52, %c15] : memref<4x147xf32, #tpu.memory_space<vmem>>, vector<4x1xf32>
    %186 = vector.broadcast %185 : vector<4x1xf32> to vector<4x256xf32>
    %187 = arith.mulf %184, %186 : vector<4x256xf32>
    %188 = arith.addf %148, %187 : vector<4x256xf32>
    %c34_i32 = arith.constant 34 : i32
    %189 = tpu.dynamic_rotate %10 by %c34_i32 dim 1 : vector<4x256xf32>, i32 -> vector<4x256xf32>
    %190 = arith.andi %16, %28 : vector<1x256xi1>
    %cst_53 = arith.constant 0.000000e+00 : f32
    %191 = vector.shape_cast %190 : vector<1x256xi1> to vector<1x256xi1>
    %192 = vector.broadcast %191 : vector<1x256xi1> to vector<4x256xi1>
    %193 = vector.broadcast %cst_53 : f32 to vector<4x256xf32>
    %194 = arith.select %192, %189, %193 : vector<4x256xi1>, vector<4x256xf32>
    %c0_54 = arith.constant 0 : index
    %c16 = arith.constant 16 : index
    %195 = vector.load %arg6[%c0_54, %c16] : memref<4x147xf32, #tpu.memory_space<vmem>>, vector<4x1xf32>
    %196 = vector.broadcast %195 : vector<4x1xf32> to vector<4x256xf32>
    %197 = arith.mulf %194, %196 : vector<4x256xf32>
    %198 = arith.addf %158, %197 : vector<4x256xf32>
    %c32_i32 = arith.constant 32 : i32
    %199 = tpu.dynamic_rotate %10 by %c32_i32 dim 1 : vector<4x256xf32>, i32 -> vector<4x256xf32>
    %cst_55 = arith.constant 0.000000e+00 : f32
    %200 = vector.shape_cast %16 : vector<1x256xi1> to vector<1x256xi1>
    %201 = vector.broadcast %200 : vector<1x256xi1> to vector<4x256xi1>
    %202 = vector.broadcast %cst_55 : f32 to vector<4x256xf32>
    %203 = arith.select %201, %199, %202 : vector<4x256xi1>, vector<4x256xf32>
    %c0_56 = arith.constant 0 : index
    %c17 = arith.constant 17 : index
    %204 = vector.load %arg6[%c0_56, %c17] : memref<4x147xf32, #tpu.memory_space<vmem>>, vector<4x1xf32>
    %205 = vector.broadcast %204 : vector<4x1xf32> to vector<4x256xf32>
    %206 = arith.mulf %203, %205 : vector<4x256xf32>
    %207 = arith.addf %168, %206 : vector<4x256xf32>
    %c30_i32 = arith.constant 30 : i32
    %208 = tpu.dynamic_rotate %10 by %c30_i32 dim 1 : vector<4x256xf32>, i32 -> vector<4x256xf32>
    %209 = arith.andi %16, %30 : vector<1x256xi1>
    %cst_57 = arith.constant 0.000000e+00 : f32
    %210 = vector.shape_cast %209 : vector<1x256xi1> to vector<1x256xi1>
    %211 = vector.broadcast %210 : vector<1x256xi1> to vector<4x256xi1>
    %212 = vector.broadcast %cst_57 : f32 to vector<4x256xf32>
    %213 = arith.select %211, %208, %212 : vector<4x256xi1>, vector<4x256xf32>
    %c0_58 = arith.constant 0 : index
    %c18 = arith.constant 18 : index
    %214 = vector.load %arg6[%c0_58, %c18] : memref<4x147xf32, #tpu.memory_space<vmem>>, vector<4x1xf32>
    %215 = vector.broadcast %214 : vector<4x1xf32> to vector<4x256xf32>
    %216 = arith.mulf %213, %215 : vector<4x256xf32>
    %217 = arith.addf %178, %216 : vector<4x256xf32>
    %c28_i32 = arith.constant 28 : i32
    %218 = tpu.dynamic_rotate %10 by %c28_i32 dim 1 : vector<4x256xf32>, i32 -> vector<4x256xf32>
    %219 = arith.andi %16, %32 : vector<1x256xi1>
    %cst_59 = arith.constant 0.000000e+00 : f32
    %220 = vector.shape_cast %219 : vector<1x256xi1> to vector<1x256xi1>
    %221 = vector.broadcast %220 : vector<1x256xi1> to vector<4x256xi1>
    %222 = vector.broadcast %cst_59 : f32 to vector<4x256xf32>
    %223 = arith.select %221, %218, %222 : vector<4x256xi1>, vector<4x256xf32>
    %c0_60 = arith.constant 0 : index
    %c19 = arith.constant 19 : index
    %224 = vector.load %arg6[%c0_60, %c19] : memref<4x147xf32, #tpu.memory_space<vmem>>, vector<4x1xf32>
    %225 = vector.broadcast %224 : vector<4x1xf32> to vector<4x256xf32>
    %226 = arith.mulf %223, %225 : vector<4x256xf32>
    %227 = arith.addf %188, %226 : vector<4x256xf32>
    %c26_i32 = arith.constant 26 : i32
    %228 = tpu.dynamic_rotate %10 by %c26_i32 dim 1 : vector<4x256xf32>, i32 -> vector<4x256xf32>
    %229 = arith.andi %16, %34 : vector<1x256xi1>
    %cst_61 = arith.constant 0.000000e+00 : f32
    %230 = vector.shape_cast %229 : vector<1x256xi1> to vector<1x256xi1>
    %231 = vector.broadcast %230 : vector<1x256xi1> to vector<4x256xi1>
    %232 = vector.broadcast %cst_61 : f32 to vector<4x256xf32>
    %233 = arith.select %231, %228, %232 : vector<4x256xi1>, vector<4x256xf32>
    %c0_62 = arith.constant 0 : index
    %c20 = arith.constant 20 : index
    %234 = vector.load %arg6[%c0_62, %c20] : memref<4x147xf32, #tpu.memory_space<vmem>>, vector<4x1xf32>
    %235 = vector.broadcast %234 : vector<4x1xf32> to vector<4x256xf32>
    %236 = arith.mulf %233, %235 : vector<4x256xf32>
    %237 = arith.addf %198, %236 : vector<4x256xf32>
    %c6_i32_63 = arith.constant 6 : i32
    %238 = tpu.dynamic_rotate %10 by %c6_i32_63 dim 1 : vector<4x256xf32>, i32 -> vector<4x256xf32>
    %cst_64 = arith.constant 0.000000e+00 : f32
    %239 = vector.shape_cast %24 : vector<1x256xi1> to vector<1x256xi1>
    %240 = vector.broadcast %239 : vector<1x256xi1> to vector<4x256xi1>
    %241 = vector.broadcast %cst_64 : f32 to vector<4x256xf32>
    %242 = arith.select %240, %238, %241 : vector<4x256xi1>, vector<4x256xf32>
    %c0_65 = arith.constant 0 : index
    %c21 = arith.constant 21 : index
    %243 = vector.load %arg6[%c0_65, %c21] : memref<4x147xf32, #tpu.memory_space<vmem>>, vector<4x1xf32>
    %244 = vector.broadcast %243 : vector<4x1xf32> to vector<4x256xf32>
    %245 = arith.mulf %242, %244 : vector<4x256xf32>
    %246 = arith.addf %207, %245 : vector<4x256xf32>
    %c4_i32_66 = arith.constant 4 : i32
    %247 = tpu.dynamic_rotate %10 by %c4_i32_66 dim 1 : vector<4x256xf32>, i32 -> vector<4x256xf32>
    %cst_67 = arith.constant 0.000000e+00 : f32
    %248 = vector.shape_cast %26 : vector<1x256xi1> to vector<1x256xi1>
    %249 = vector.broadcast %248 : vector<1x256xi1> to vector<4x256xi1>
    %250 = vector.broadcast %cst_67 : f32 to vector<4x256xf32>
    %251 = arith.select %249, %247, %250 : vector<4x256xi1>, vector<4x256xf32>
    %c0_68 = arith.constant 0 : index
    %c22 = arith.constant 22 : index
    %252 = vector.load %arg6[%c0_68, %c22] : memref<4x147xf32, #tpu.memory_space<vmem>>, vector<4x1xf32>
    %253 = vector.broadcast %252 : vector<4x1xf32> to vector<4x256xf32>
    %254 = arith.mulf %251, %253 : vector<4x256xf32>
    %255 = arith.addf %217, %254 : vector<4x256xf32>
    %c2_i32_69 = arith.constant 2 : i32
    %256 = tpu.dynamic_rotate %10 by %c2_i32_69 dim 1 : vector<4x256xf32>, i32 -> vector<4x256xf32>
    %cst_70 = arith.constant 0.000000e+00 : f32
    %257 = vector.shape_cast %28 : vector<1x256xi1> to vector<1x256xi1>
    %258 = vector.broadcast %257 : vector<1x256xi1> to vector<4x256xi1>
    %259 = vector.broadcast %cst_70 : f32 to vector<4x256xf32>
    %260 = arith.select %258, %256, %259 : vector<4x256xi1>, vector<4x256xf32>
    %c0_71 = arith.constant 0 : index
    %c23 = arith.constant 23 : index
    %261 = vector.load %arg6[%c0_71, %c23] : memref<4x147xf32, #tpu.memory_space<vmem>>, vector<4x1xf32>
    %262 = vector.broadcast %261 : vector<4x1xf32> to vector<4x256xf32>
    %263 = arith.mulf %260, %262 : vector<4x256xf32>
    %264 = arith.addf %227, %263 : vector<4x256xf32>
    %c0_72 = arith.constant 0 : index
    %c24 = arith.constant 24 : index
    %265 = vector.load %arg6[%c0_72, %c24] : memref<4x147xf32, #tpu.memory_space<vmem>>, vector<4x1xf32>
    %266 = vector.broadcast %265 : vector<4x1xf32> to vector<4x256xf32>
    %267 = arith.mulf %10, %266 : vector<4x256xf32>
    %268 = arith.addf %237, %267 : vector<4x256xf32>
    %c254_i32 = arith.constant 254 : i32
    %269 = tpu.dynamic_rotate %10 by %c254_i32 dim 1 : vector<4x256xf32>, i32 -> vector<4x256xf32>
    %cst_73 = arith.constant 0.000000e+00 : f32
    %270 = vector.shape_cast %30 : vector<1x256xi1> to vector<1x256xi1>
    %271 = vector.broadcast %270 : vector<1x256xi1> to vector<4x256xi1>
    %272 = vector.broadcast %cst_73 : f32 to vector<4x256xf32>
    %273 = arith.select %271, %269, %272 : vector<4x256xi1>, vector<4x256xf32>
    %c0_74 = arith.constant 0 : index
    %c25 = arith.constant 25 : index
    %274 = vector.load %arg6[%c0_74, %c25] : memref<4x147xf32, #tpu.memory_space<vmem>>, vector<4x1xf32>
    %275 = vector.broadcast %274 : vector<4x1xf32> to vector<4x256xf32>
    %276 = arith.mulf %273, %275 : vector<4x256xf32>
    %277 = arith.addf %246, %276 : vector<4x256xf32>
    %c252_i32 = arith.constant 252 : i32
    %278 = tpu.dynamic_rotate %10 by %c252_i32 dim 1 : vector<4x256xf32>, i32 -> vector<4x256xf32>
    %cst_75 = arith.constant 0.000000e+00 : f32
    %279 = vector.shape_cast %32 : vector<1x256xi1> to vector<1x256xi1>
    %280 = vector.broadcast %279 : vector<1x256xi1> to vector<4x256xi1>
    %281 = vector.broadcast %cst_75 : f32 to vector<4x256xf32>
    %282 = arith.select %280, %278, %281 : vector<4x256xi1>, vector<4x256xf32>
    %c0_76 = arith.constant 0 : index
    %c26 = arith.constant 26 : index
    %283 = vector.load %arg6[%c0_76, %c26] : memref<4x147xf32, #tpu.memory_space<vmem>>, vector<4x1xf32>
    %284 = vector.broadcast %283 : vector<4x1xf32> to vector<4x256xf32>
    %285 = arith.mulf %282, %284 : vector<4x256xf32>
    %286 = arith.addf %255, %285 : vector<4x256xf32>
    %c250_i32 = arith.constant 250 : i32
    %287 = tpu.dynamic_rotate %10 by %c250_i32 dim 1 : vector<4x256xf32>, i32 -> vector<4x256xf32>
    %cst_77 = arith.constant 0.000000e+00 : f32
    %288 = vector.shape_cast %34 : vector<1x256xi1> to vector<1x256xi1>
    %289 = vector.broadcast %288 : vector<1x256xi1> to vector<4x256xi1>
    %290 = vector.broadcast %cst_77 : f32 to vector<4x256xf32>
    %291 = arith.select %289, %287, %290 : vector<4x256xi1>, vector<4x256xf32>
    %c0_78 = arith.constant 0 : index
    %c27 = arith.constant 27 : index
    %292 = vector.load %arg6[%c0_78, %c27] : memref<4x147xf32, #tpu.memory_space<vmem>>, vector<4x1xf32>
    %293 = vector.broadcast %292 : vector<4x1xf32> to vector<4x256xf32>
    %294 = arith.mulf %291, %293 : vector<4x256xf32>
    %295 = arith.addf %264, %294 : vector<4x256xf32>
    %c230_i32 = arith.constant 230 : i32
    %296 = tpu.dynamic_rotate %10 by %c230_i32 dim 1 : vector<4x256xf32>, i32 -> vector<4x256xf32>
    %297 = arith.andi %18, %24 : vector<1x256xi1>
    %cst_79 = arith.constant 0.000000e+00 : f32
    %298 = vector.shape_cast %297 : vector<1x256xi1> to vector<1x256xi1>
    %299 = vector.broadcast %298 : vector<1x256xi1> to vector<4x256xi1>
    %300 = vector.broadcast %cst_79 : f32 to vector<4x256xf32>
    %301 = arith.select %299, %296, %300 : vector<4x256xi1>, vector<4x256xf32>
    %c0_80 = arith.constant 0 : index
    %c28 = arith.constant 28 : index
    %302 = vector.load %arg6[%c0_80, %c28] : memref<4x147xf32, #tpu.memory_space<vmem>>, vector<4x1xf32>
    %303 = vector.broadcast %302 : vector<4x1xf32> to vector<4x256xf32>
    %304 = arith.mulf %301, %303 : vector<4x256xf32>
    %305 = arith.addf %268, %304 : vector<4x256xf32>
    %c228_i32 = arith.constant 228 : i32
    %306 = tpu.dynamic_rotate %10 by %c228_i32 dim 1 : vector<4x256xf32>, i32 -> vector<4x256xf32>
    %307 = arith.andi %18, %26 : vector<1x256xi1>
    %cst_81 = arith.constant 0.000000e+00 : f32
    %308 = vector.shape_cast %307 : vector<1x256xi1> to vector<1x256xi1>
    %309 = vector.broadcast %308 : vector<1x256xi1> to vector<4x256xi1>
    %310 = vector.broadcast %cst_81 : f32 to vector<4x256xf32>
    %311 = arith.select %309, %306, %310 : vector<4x256xi1>, vector<4x256xf32>
    %c0_82 = arith.constant 0 : index
    %c29 = arith.constant 29 : index
    %312 = vector.load %arg6[%c0_82, %c29] : memref<4x147xf32, #tpu.memory_space<vmem>>, vector<4x1xf32>
    %313 = vector.broadcast %312 : vector<4x1xf32> to vector<4x256xf32>
    %314 = arith.mulf %311, %313 : vector<4x256xf32>
    %315 = arith.addf %277, %314 : vector<4x256xf32>
    %c226_i32 = arith.constant 226 : i32
    %316 = tpu.dynamic_rotate %10 by %c226_i32 dim 1 : vector<4x256xf32>, i32 -> vector<4x256xf32>
    %317 = arith.andi %18, %28 : vector<1x256xi1>
    %cst_83 = arith.constant 0.000000e+00 : f32
    %318 = vector.shape_cast %317 : vector<1x256xi1> to vector<1x256xi1>
    %319 = vector.broadcast %318 : vector<1x256xi1> to vector<4x256xi1>
    %320 = vector.broadcast %cst_83 : f32 to vector<4x256xf32>
    %321 = arith.select %319, %316, %320 : vector<4x256xi1>, vector<4x256xf32>
    %c0_84 = arith.constant 0 : index
    %c30 = arith.constant 30 : index
    %322 = vector.load %arg6[%c0_84, %c30] : memref<4x147xf32, #tpu.memory_space<vmem>>, vector<4x1xf32>
    %323 = vector.broadcast %322 : vector<4x1xf32> to vector<4x256xf32>
    %324 = arith.mulf %321, %323 : vector<4x256xf32>
    %325 = arith.addf %286, %324 : vector<4x256xf32>
    %c224_i32 = arith.constant 224 : i32
    %326 = tpu.dynamic_rotate %10 by %c224_i32 dim 1 : vector<4x256xf32>, i32 -> vector<4x256xf32>
    %cst_85 = arith.constant 0.000000e+00 : f32
    %327 = vector.shape_cast %18 : vector<1x256xi1> to vector<1x256xi1>
    %328 = vector.broadcast %327 : vector<1x256xi1> to vector<4x256xi1>
    %329 = vector.broadcast %cst_85 : f32 to vector<4x256xf32>
    %330 = arith.select %328, %326, %329 : vector<4x256xi1>, vector<4x256xf32>
    %c0_86 = arith.constant 0 : index
    %c31 = arith.constant 31 : index
    %331 = vector.load %arg6[%c0_86, %c31] : memref<4x147xf32, #tpu.memory_space<vmem>>, vector<4x1xf32>
    %332 = vector.broadcast %331 : vector<4x1xf32> to vector<4x256xf32>
    %333 = arith.mulf %330, %332 : vector<4x256xf32>
    %334 = arith.addf %295, %333 : vector<4x256xf32>
    %c222_i32 = arith.constant 222 : i32
    %335 = tpu.dynamic_rotate %10 by %c222_i32 dim 1 : vector<4x256xf32>, i32 -> vector<4x256xf32>
    %336 = arith.andi %18, %30 : vector<1x256xi1>
    %cst_87 = arith.constant 0.000000e+00 : f32
    %337 = vector.shape_cast %336 : vector<1x256xi1> to vector<1x256xi1>
    %338 = vector.broadcast %337 : vector<1x256xi1> to vector<4x256xi1>
    %339 = vector.broadcast %cst_87 : f32 to vector<4x256xf32>
    %340 = arith.select %338, %335, %339 : vector<4x256xi1>, vector<4x256xf32>
    %c0_88 = arith.constant 0 : index
    %c32 = arith.constant 32 : index
    %341 = vector.load %arg6[%c0_88, %c32] : memref<4x147xf32, #tpu.memory_space<vmem>>, vector<4x1xf32>
    %342 = vector.broadcast %341 : vector<4x1xf32> to vector<4x256xf32>
    %343 = arith.mulf %340, %342 : vector<4x256xf32>
    %344 = arith.addf %305, %343 : vector<4x256xf32>
    %c220_i32 = arith.constant 220 : i32
    %345 = tpu.dynamic_rotate %10 by %c220_i32 dim 1 : vector<4x256xf32>, i32 -> vector<4x256xf32>
    %346 = arith.andi %18, %32 : vector<1x256xi1>
    %cst_89 = arith.constant 0.000000e+00 : f32
    %347 = vector.shape_cast %346 : vector<1x256xi1> to vector<1x256xi1>
    %348 = vector.broadcast %347 : vector<1x256xi1> to vector<4x256xi1>
    %349 = vector.broadcast %cst_89 : f32 to vector<4x256xf32>
    %350 = arith.select %348, %345, %349 : vector<4x256xi1>, vector<4x256xf32>
    %c0_90 = arith.constant 0 : index
    %c33 = arith.constant 33 : index
    %351 = vector.load %arg6[%c0_90, %c33] : memref<4x147xf32, #tpu.memory_space<vmem>>, vector<4x1xf32>
    %352 = vector.broadcast %351 : vector<4x1xf32> to vector<4x256xf32>
    %353 = arith.mulf %350, %352 : vector<4x256xf32>
    %354 = arith.addf %315, %353 : vector<4x256xf32>
    %c218_i32 = arith.constant 218 : i32
    %355 = tpu.dynamic_rotate %10 by %c218_i32 dim 1 : vector<4x256xf32>, i32 -> vector<4x256xf32>
    %356 = arith.andi %18, %34 : vector<1x256xi1>
    %cst_91 = arith.constant 0.000000e+00 : f32
    %357 = vector.shape_cast %356 : vector<1x256xi1> to vector<1x256xi1>
    %358 = vector.broadcast %357 : vector<1x256xi1> to vector<4x256xi1>
    %359 = vector.broadcast %cst_91 : f32 to vector<4x256xf32>
    %360 = arith.select %358, %355, %359 : vector<4x256xi1>, vector<4x256xf32>
    %c0_92 = arith.constant 0 : index
    %c34 = arith.constant 34 : index
    %361 = vector.load %arg6[%c0_92, %c34] : memref<4x147xf32, #tpu.memory_space<vmem>>, vector<4x1xf32>
    %362 = vector.broadcast %361 : vector<4x1xf32> to vector<4x256xf32>
    %363 = arith.mulf %360, %362 : vector<4x256xf32>
    %364 = arith.addf %325, %363 : vector<4x256xf32>
    %c198_i32 = arith.constant 198 : i32
    %365 = tpu.dynamic_rotate %10 by %c198_i32 dim 1 : vector<4x256xf32>, i32 -> vector<4x256xf32>
    %366 = arith.andi %20, %24 : vector<1x256xi1>
    %cst_93 = arith.constant 0.000000e+00 : f32
    %367 = vector.shape_cast %366 : vector<1x256xi1> to vector<1x256xi1>
    %368 = vector.broadcast %367 : vector<1x256xi1> to vector<4x256xi1>
    %369 = vector.broadcast %cst_93 : f32 to vector<4x256xf32>
    %370 = arith.select %368, %365, %369 : vector<4x256xi1>, vector<4x256xf32>
    %c0_94 = arith.constant 0 : index
    %c35 = arith.constant 35 : index
    %371 = vector.load %arg6[%c0_94, %c35] : memref<4x147xf32, #tpu.memory_space<vmem>>, vector<4x1xf32>
    %372 = vector.broadcast %371 : vector<4x1xf32> to vector<4x256xf32>
    %373 = arith.mulf %370, %372 : vector<4x256xf32>
    %374 = arith.addf %334, %373 : vector<4x256xf32>
    %c196_i32 = arith.constant 196 : i32
    %375 = tpu.dynamic_rotate %10 by %c196_i32 dim 1 : vector<4x256xf32>, i32 -> vector<4x256xf32>
    %376 = arith.andi %20, %26 : vector<1x256xi1>
    %cst_95 = arith.constant 0.000000e+00 : f32
    %377 = vector.shape_cast %376 : vector<1x256xi1> to vector<1x256xi1>
    %378 = vector.broadcast %377 : vector<1x256xi1> to vector<4x256xi1>
    %379 = vector.broadcast %cst_95 : f32 to vector<4x256xf32>
    %380 = arith.select %378, %375, %379 : vector<4x256xi1>, vector<4x256xf32>
    %c0_96 = arith.constant 0 : index
    %c36 = arith.constant 36 : index
    %381 = vector.load %arg6[%c0_96, %c36] : memref<4x147xf32, #tpu.memory_space<vmem>>, vector<4x1xf32>
    %382 = vector.broadcast %381 : vector<4x1xf32> to vector<4x256xf32>
    %383 = arith.mulf %380, %382 : vector<4x256xf32>
    %384 = arith.addf %344, %383 : vector<4x256xf32>
    %c194_i32 = arith.constant 194 : i32
    %385 = tpu.dynamic_rotate %10 by %c194_i32 dim 1 : vector<4x256xf32>, i32 -> vector<4x256xf32>
    %386 = arith.andi %20, %28 : vector<1x256xi1>
    %cst_97 = arith.constant 0.000000e+00 : f32
    %387 = vector.shape_cast %386 : vector<1x256xi1> to vector<1x256xi1>
    %388 = vector.broadcast %387 : vector<1x256xi1> to vector<4x256xi1>
    %389 = vector.broadcast %cst_97 : f32 to vector<4x256xf32>
    %390 = arith.select %388, %385, %389 : vector<4x256xi1>, vector<4x256xf32>
    %c0_98 = arith.constant 0 : index
    %c37 = arith.constant 37 : index
    %391 = vector.load %arg6[%c0_98, %c37] : memref<4x147xf32, #tpu.memory_space<vmem>>, vector<4x1xf32>
    %392 = vector.broadcast %391 : vector<4x1xf32> to vector<4x256xf32>
    %393 = arith.mulf %390, %392 : vector<4x256xf32>
    %394 = arith.addf %354, %393 : vector<4x256xf32>
    %c192_i32 = arith.constant 192 : i32
    %395 = tpu.dynamic_rotate %10 by %c192_i32 dim 1 : vector<4x256xf32>, i32 -> vector<4x256xf32>
    %cst_99 = arith.constant 0.000000e+00 : f32
    %396 = vector.shape_cast %20 : vector<1x256xi1> to vector<1x256xi1>
    %397 = vector.broadcast %396 : vector<1x256xi1> to vector<4x256xi1>
    %398 = vector.broadcast %cst_99 : f32 to vector<4x256xf32>
    %399 = arith.select %397, %395, %398 : vector<4x256xi1>, vector<4x256xf32>
    %c0_100 = arith.constant 0 : index
    %c38 = arith.constant 38 : index
    %400 = vector.load %arg6[%c0_100, %c38] : memref<4x147xf32, #tpu.memory_space<vmem>>, vector<4x1xf32>
    %401 = vector.broadcast %400 : vector<4x1xf32> to vector<4x256xf32>
    %402 = arith.mulf %399, %401 : vector<4x256xf32>
    %403 = arith.addf %364, %402 : vector<4x256xf32>
    %c190_i32 = arith.constant 190 : i32
    %404 = tpu.dynamic_rotate %10 by %c190_i32 dim 1 : vector<4x256xf32>, i32 -> vector<4x256xf32>
    %405 = arith.andi %20, %30 : vector<1x256xi1>
    %cst_101 = arith.constant 0.000000e+00 : f32
    %406 = vector.shape_cast %405 : vector<1x256xi1> to vector<1x256xi1>
    %407 = vector.broadcast %406 : vector<1x256xi1> to vector<4x256xi1>
    %408 = vector.broadcast %cst_101 : f32 to vector<4x256xf32>
    %409 = arith.select %407, %404, %408 : vector<4x256xi1>, vector<4x256xf32>
    %c0_102 = arith.constant 0 : index
    %c39 = arith.constant 39 : index
    %410 = vector.load %arg6[%c0_102, %c39] : memref<4x147xf32, #tpu.memory_space<vmem>>, vector<4x1xf32>
    %411 = vector.broadcast %410 : vector<4x1xf32> to vector<4x256xf32>
    %412 = arith.mulf %409, %411 : vector<4x256xf32>
    %413 = arith.addf %374, %412 : vector<4x256xf32>
    %c188_i32 = arith.constant 188 : i32
    %414 = tpu.dynamic_rotate %10 by %c188_i32 dim 1 : vector<4x256xf32>, i32 -> vector<4x256xf32>
    %415 = arith.andi %20, %32 : vector<1x256xi1>
    %cst_103 = arith.constant 0.000000e+00 : f32
    %416 = vector.shape_cast %415 : vector<1x256xi1> to vector<1x256xi1>
    %417 = vector.broadcast %416 : vector<1x256xi1> to vector<4x256xi1>
    %418 = vector.broadcast %cst_103 : f32 to vector<4x256xf32>
    %419 = arith.select %417, %414, %418 : vector<4x256xi1>, vector<4x256xf32>
    %c0_104 = arith.constant 0 : index
    %c40 = arith.constant 40 : index
    %420 = vector.load %arg6[%c0_104, %c40] : memref<4x147xf32, #tpu.memory_space<vmem>>, vector<4x1xf32>
    %421 = vector.broadcast %420 : vector<4x1xf32> to vector<4x256xf32>
    %422 = arith.mulf %419, %421 : vector<4x256xf32>
    %423 = arith.addf %384, %422 : vector<4x256xf32>
    %c186_i32 = arith.constant 186 : i32
    %424 = tpu.dynamic_rotate %10 by %c186_i32 dim 1 : vector<4x256xf32>, i32 -> vector<4x256xf32>
    %425 = arith.andi %20, %34 : vector<1x256xi1>
    %cst_105 = arith.constant 0.000000e+00 : f32
    %426 = vector.shape_cast %425 : vector<1x256xi1> to vector<1x256xi1>
    %427 = vector.broadcast %426 : vector<1x256xi1> to vector<4x256xi1>
    %428 = vector.broadcast %cst_105 : f32 to vector<4x256xf32>
    %429 = arith.select %427, %424, %428 : vector<4x256xi1>, vector<4x256xf32>
    %c0_106 = arith.constant 0 : index
    %c41 = arith.constant 41 : index
    %430 = vector.load %arg6[%c0_106, %c41] : memref<4x147xf32, #tpu.memory_space<vmem>>, vector<4x1xf32>
    %431 = vector.broadcast %430 : vector<4x1xf32> to vector<4x256xf32>
    %432 = arith.mulf %429, %431 : vector<4x256xf32>
    %433 = arith.addf %394, %432 : vector<4x256xf32>
    %c166_i32 = arith.constant 166 : i32
    %434 = tpu.dynamic_rotate %10 by %c166_i32 dim 1 : vector<4x256xf32>, i32 -> vector<4x256xf32>
    %435 = arith.andi %22, %24 : vector<1x256xi1>
    %cst_107 = arith.constant 0.000000e+00 : f32
    %436 = vector.shape_cast %435 : vector<1x256xi1> to vector<1x256xi1>
    %437 = vector.broadcast %436 : vector<1x256xi1> to vector<4x256xi1>
    %438 = vector.broadcast %cst_107 : f32 to vector<4x256xf32>
    %439 = arith.select %437, %434, %438 : vector<4x256xi1>, vector<4x256xf32>
    %c0_108 = arith.constant 0 : index
    %c42 = arith.constant 42 : index
    %440 = vector.load %arg6[%c0_108, %c42] : memref<4x147xf32, #tpu.memory_space<vmem>>, vector<4x1xf32>
    %441 = vector.broadcast %440 : vector<4x1xf32> to vector<4x256xf32>
    %442 = arith.mulf %439, %441 : vector<4x256xf32>
    %443 = arith.addf %403, %442 : vector<4x256xf32>
    %c164_i32 = arith.constant 164 : i32
    %444 = tpu.dynamic_rotate %10 by %c164_i32 dim 1 : vector<4x256xf32>, i32 -> vector<4x256xf32>
    %445 = arith.andi %22, %26 : vector<1x256xi1>
    %cst_109 = arith.constant 0.000000e+00 : f32
    %446 = vector.shape_cast %445 : vector<1x256xi1> to vector<1x256xi1>
    %447 = vector.broadcast %446 : vector<1x256xi1> to vector<4x256xi1>
    %448 = vector.broadcast %cst_109 : f32 to vector<4x256xf32>
    %449 = arith.select %447, %444, %448 : vector<4x256xi1>, vector<4x256xf32>
    %c0_110 = arith.constant 0 : index
    %c43 = arith.constant 43 : index
    %450 = vector.load %arg6[%c0_110, %c43] : memref<4x147xf32, #tpu.memory_space<vmem>>, vector<4x1xf32>
    %451 = vector.broadcast %450 : vector<4x1xf32> to vector<4x256xf32>
    %452 = arith.mulf %449, %451 : vector<4x256xf32>
    %453 = arith.addf %413, %452 : vector<4x256xf32>
    %c162_i32 = arith.constant 162 : i32
    %454 = tpu.dynamic_rotate %10 by %c162_i32 dim 1 : vector<4x256xf32>, i32 -> vector<4x256xf32>
    %455 = arith.andi %22, %28 : vector<1x256xi1>
    %cst_111 = arith.constant 0.000000e+00 : f32
    %456 = vector.shape_cast %455 : vector<1x256xi1> to vector<1x256xi1>
    %457 = vector.broadcast %456 : vector<1x256xi1> to vector<4x256xi1>
    %458 = vector.broadcast %cst_111 : f32 to vector<4x256xf32>
    %459 = arith.select %457, %454, %458 : vector<4x256xi1>, vector<4x256xf32>
    %c0_112 = arith.constant 0 : index
    %c44 = arith.constant 44 : index
    %460 = vector.load %arg6[%c0_112, %c44] : memref<4x147xf32, #tpu.memory_space<vmem>>, vector<4x1xf32>
    %461 = vector.broadcast %460 : vector<4x1xf32> to vector<4x256xf32>
    %462 = arith.mulf %459, %461 : vector<4x256xf32>
    %463 = arith.addf %423, %462 : vector<4x256xf32>
    %c160_i32 = arith.constant 160 : i32
    %464 = tpu.dynamic_rotate %10 by %c160_i32 dim 1 : vector<4x256xf32>, i32 -> vector<4x256xf32>
    %cst_113 = arith.constant 0.000000e+00 : f32
    %465 = vector.shape_cast %22 : vector<1x256xi1> to vector<1x256xi1>
    %466 = vector.broadcast %465 : vector<1x256xi1> to vector<4x256xi1>
    %467 = vector.broadcast %cst_113 : f32 to vector<4x256xf32>
    %468 = arith.select %466, %464, %467 : vector<4x256xi1>, vector<4x256xf32>
    %c0_114 = arith.constant 0 : index
    %c45 = arith.constant 45 : index
    %469 = vector.load %arg6[%c0_114, %c45] : memref<4x147xf32, #tpu.memory_space<vmem>>, vector<4x1xf32>
    %470 = vector.broadcast %469 : vector<4x1xf32> to vector<4x256xf32>
    %471 = arith.mulf %468, %470 : vector<4x256xf32>
    %472 = arith.addf %433, %471 : vector<4x256xf32>
    %c158_i32 = arith.constant 158 : i32
    %473 = tpu.dynamic_rotate %10 by %c158_i32 dim 1 : vector<4x256xf32>, i32 -> vector<4x256xf32>
    %474 = arith.andi %22, %30 : vector<1x256xi1>
    %cst_115 = arith.constant 0.000000e+00 : f32
    %475 = vector.shape_cast %474 : vector<1x256xi1> to vector<1x256xi1>
    %476 = vector.broadcast %475 : vector<1x256xi1> to vector<4x256xi1>
    %477 = vector.broadcast %cst_115 : f32 to vector<4x256xf32>
    %478 = arith.select %476, %473, %477 : vector<4x256xi1>, vector<4x256xf32>
    %c0_116 = arith.constant 0 : index
    %c46 = arith.constant 46 : index
    %479 = vector.load %arg6[%c0_116, %c46] : memref<4x147xf32, #tpu.memory_space<vmem>>, vector<4x1xf32>
    %480 = vector.broadcast %479 : vector<4x1xf32> to vector<4x256xf32>
    %481 = arith.mulf %478, %480 : vector<4x256xf32>
    %482 = arith.addf %443, %481 : vector<4x256xf32>
    %c156_i32 = arith.constant 156 : i32
    %483 = tpu.dynamic_rotate %10 by %c156_i32 dim 1 : vector<4x256xf32>, i32 -> vector<4x256xf32>
    %484 = arith.andi %22, %32 : vector<1x256xi1>
    %cst_117 = arith.constant 0.000000e+00 : f32
    %485 = vector.shape_cast %484 : vector<1x256xi1> to vector<1x256xi1>
    %486 = vector.broadcast %485 : vector<1x256xi1> to vector<4x256xi1>
    %487 = vector.broadcast %cst_117 : f32 to vector<4x256xf32>
    %488 = arith.select %486, %483, %487 : vector<4x256xi1>, vector<4x256xf32>
    %c0_118 = arith.constant 0 : index
    %c47 = arith.constant 47 : index
    %489 = vector.load %arg6[%c0_118, %c47] : memref<4x147xf32, #tpu.memory_space<vmem>>, vector<4x1xf32>
    %490 = vector.broadcast %489 : vector<4x1xf32> to vector<4x256xf32>
    %491 = arith.mulf %488, %490 : vector<4x256xf32>
    %492 = arith.addf %453, %491 : vector<4x256xf32>
    %c154_i32 = arith.constant 154 : i32
    %493 = tpu.dynamic_rotate %10 by %c154_i32 dim 1 : vector<4x256xf32>, i32 -> vector<4x256xf32>
    %494 = arith.andi %22, %34 : vector<1x256xi1>
    %cst_119 = arith.constant 0.000000e+00 : f32
    %495 = vector.shape_cast %494 : vector<1x256xi1> to vector<1x256xi1>
    %496 = vector.broadcast %495 : vector<1x256xi1> to vector<4x256xi1>
    %497 = vector.broadcast %cst_119 : f32 to vector<4x256xf32>
    %498 = arith.select %496, %493, %497 : vector<4x256xi1>, vector<4x256xf32>
    %c0_120 = arith.constant 0 : index
    %c48 = arith.constant 48 : index
    %499 = vector.load %arg6[%c0_120, %c48] : memref<4x147xf32, #tpu.memory_space<vmem>>, vector<4x1xf32>
    %500 = vector.broadcast %499 : vector<4x1xf32> to vector<4x256xf32>
    %501 = arith.mulf %498, %500 : vector<4x256xf32>
    %502 = arith.addf %463, %501 : vector<4x256xf32>
    %c0_121 = arith.constant 0 : index
    %c0_122 = arith.constant 0 : index
    %503 = vector.load %arg7[%c0_121, %c0_122] : memref<4x3xf32, #tpu.memory_space<vmem>>, vector<4x1xf32>
    %504 = arith.addf %502, %472 : vector<4x256xf32>
    %505 = arith.addf %504, %482 : vector<4x256xf32>
    %506 = arith.addf %505, %492 : vector<4x256xf32>
    %507 = vector.broadcast %503 : vector<4x1xf32> to vector<4x256xf32>
    %508 = arith.addf %506, %507 : vector<4x256xf32>
    %c0_123 = arith.constant 0 : index
    %c0_124 = arith.constant 0 : index
    %509 = vector.load %arg12[%c0_123, %c0_124] : memref<12x256xf32, #tpu.memory_space<vmem>>, vector<4x256xf32>
    tpu.vector_store %arg12[%c0_123, %c0_124], %508 {strides = array<i32>} : memref<12x256xf32, #tpu.memory_space<vmem>>, vector<4x256xf32>,
    %c4_125 = arith.constant 4 : index
    %c0_126 = arith.constant 0 : index
    %510 = vector.load %arg11[%c4_125, %c0_126] : memref<12x256xf32, #tpu.memory_space<vmem>>, vector<4x256xf32>
    %c12_i32_127 = arith.constant 12 : i32
    %511 = vector.broadcast %c12_i32_127 : i32 to vector<1x256xi32>
    %512 = arith.cmpi sge, %2, %511 : vector<1x256xi32>
    %c8_i32 = arith.constant 8 : i32
    %513 = vector.broadcast %c8_i32 : i32 to vector<1x256xi32>
    %514 = arith.cmpi sge, %2, %513 : vector<1x256xi32>
    %c4_i32_128 = arith.constant 4 : i32
    %515 = vector.broadcast %c4_i32_128 : i32 to vector<1x256xi32>
    %516 = arith.cmpi sge, %2, %515 : vector<1x256xi32>
    %c12_i32_129 = arith.constant 12 : i32
    %517 = vector.broadcast %c12_i32_129 : i32 to vector<1x256xi32>
    %518 = arith.cmpi slt, %2, %517 : vector<1x256xi32>
    %c8_i32_130 = arith.constant 8 : i32
    %519 = vector.broadcast %c8_i32_130 : i32 to vector<1x256xi32>
    %520 = arith.cmpi slt, %2, %519 : vector<1x256xi32>
    %c4_i32_131 = arith.constant 4 : i32
    %521 = vector.broadcast %c4_i32_131 : i32 to vector<1x256xi32>
    %522 = arith.cmpi slt, %2, %521 : vector<1x256xi32>
    %c12_i32_132 = arith.constant 12 : i32
    %523 = vector.broadcast %c12_i32_132 : i32 to vector<1x256xi32>
    %524 = arith.cmpi sge, %3, %523 : vector<1x256xi32>
    %c8_i32_133 = arith.constant 8 : i32
    %525 = vector.broadcast %c8_i32_133 : i32 to vector<1x256xi32>
    %526 = arith.cmpi sge, %3, %525 : vector<1x256xi32>
    %c4_i32_134 = arith.constant 4 : i32
    %527 = vector.broadcast %c4_i32_134 : i32 to vector<1x256xi32>
    %528 = arith.cmpi sge, %3, %527 : vector<1x256xi32>
    %c12_i32_135 = arith.constant 12 : i32
    %529 = vector.broadcast %c12_i32_135 : i32 to vector<1x256xi32>
    %530 = arith.cmpi slt, %3, %529 : vector<1x256xi32>
    %c8_i32_136 = arith.constant 8 : i32
    %531 = vector.broadcast %c8_i32_136 : i32 to vector<1x256xi32>
    %532 = arith.cmpi slt, %3, %531 : vector<1x256xi32>
    %c4_i32_137 = arith.constant 4 : i32
    %533 = vector.broadcast %c4_i32_137 : i32 to vector<1x256xi32>
    %534 = arith.cmpi slt, %3, %533 : vector<1x256xi32>
    %c204_i32 = arith.constant 204 : i32
    %535 = tpu.dynamic_rotate %510 by %c204_i32 dim 1 : vector<4x256xf32>, i32 -> vector<4x256xf32>
    %536 = arith.andi %512, %524 : vector<1x256xi1>
    %cst_138 = arith.constant 0.000000e+00 : f32
    %537 = vector.shape_cast %536 : vector<1x256xi1> to vector<1x256xi1>
    %538 = vector.broadcast %537 : vector<1x256xi1> to vector<4x256xi1>
    %539 = vector.broadcast %cst_138 : f32 to vector<4x256xf32>
    %540 = arith.select %538, %535, %539 : vector<4x256xi1>, vector<4x256xf32>
    %c0_139 = arith.constant 0 : index
    %c49 = arith.constant 49 : index
    %541 = vector.load %arg6[%c0_139, %c49] : memref<4x147xf32, #tpu.memory_space<vmem>>, vector<4x1xf32>
    %542 = vector.broadcast %541 : vector<4x1xf32> to vector<4x256xf32>
    %543 = arith.mulf %540, %542 : vector<4x256xf32>
    %c200_i32 = arith.constant 200 : i32
    %544 = tpu.dynamic_rotate %510 by %c200_i32 dim 1 : vector<4x256xf32>, i32 -> vector<4x256xf32>
    %545 = arith.andi %512, %526 : vector<1x256xi1>
    %cst_140 = arith.constant 0.000000e+00 : f32
    %546 = vector.shape_cast %545 : vector<1x256xi1> to vector<1x256xi1>
    %547 = vector.broadcast %546 : vector<1x256xi1> to vector<4x256xi1>
    %548 = vector.broadcast %cst_140 : f32 to vector<4x256xf32>
    %549 = arith.select %547, %544, %548 : vector<4x256xi1>, vector<4x256xf32>
    %c0_141 = arith.constant 0 : index
    %c50 = arith.constant 50 : index
    %550 = vector.load %arg6[%c0_141, %c50] : memref<4x147xf32, #tpu.memory_space<vmem>>, vector<4x1xf32>
    %551 = vector.broadcast %550 : vector<4x1xf32> to vector<4x256xf32>
    %552 = arith.mulf %549, %551 : vector<4x256xf32>
    %c196_i32_142 = arith.constant 196 : i32
    %553 = tpu.dynamic_rotate %510 by %c196_i32_142 dim 1 : vector<4x256xf32>, i32 -> vector<4x256xf32>
    %554 = arith.andi %512, %528 : vector<1x256xi1>
    %cst_143 = arith.constant 0.000000e+00 : f32
    %555 = vector.shape_cast %554 : vector<1x256xi1> to vector<1x256xi1>
    %556 = vector.broadcast %555 : vector<1x256xi1> to vector<4x256xi1>
    %557 = vector.broadcast %cst_143 : f32 to vector<4x256xf32>
    %558 = arith.select %556, %553, %557 : vector<4x256xi1>, vector<4x256xf32>
    %c0_144 = arith.constant 0 : index
    %c51 = arith.constant 51 : index
    %559 = vector.load %arg6[%c0_144, %c51] : memref<4x147xf32, #tpu.memory_space<vmem>>, vector<4x1xf32>
    %560 = vector.broadcast %559 : vector<4x1xf32> to vector<4x256xf32>
    %561 = arith.mulf %558, %560 : vector<4x256xf32>
    %c192_i32_145 = arith.constant 192 : i32
    %562 = tpu.dynamic_rotate %510 by %c192_i32_145 dim 1 : vector<4x256xf32>, i32 -> vector<4x256xf32>
    %cst_146 = arith.constant 0.000000e+00 : f32
    %563 = vector.shape_cast %512 : vector<1x256xi1> to vector<1x256xi1>
    %564 = vector.broadcast %563 : vector<1x256xi1> to vector<4x256xi1>
    %565 = vector.broadcast %cst_146 : f32 to vector<4x256xf32>
    %566 = arith.select %564, %562, %565 : vector<4x256xi1>, vector<4x256xf32>
    %c0_147 = arith.constant 0 : index
    %c52 = arith.constant 52 : index
    %567 = vector.load %arg6[%c0_147, %c52] : memref<4x147xf32, #tpu.memory_space<vmem>>, vector<4x1xf32>
    %568 = vector.broadcast %567 : vector<4x1xf32> to vector<4x256xf32>
    %569 = arith.mulf %566, %568 : vector<4x256xf32>
    %c188_i32_148 = arith.constant 188 : i32
    %570 = tpu.dynamic_rotate %510 by %c188_i32_148 dim 1 : vector<4x256xf32>, i32 -> vector<4x256xf32>
    %571 = arith.andi %512, %530 : vector<1x256xi1>
    %cst_149 = arith.constant 0.000000e+00 : f32
    %572 = vector.shape_cast %571 : vector<1x256xi1> to vector<1x256xi1>
    %573 = vector.broadcast %572 : vector<1x256xi1> to vector<4x256xi1>
    %574 = vector.broadcast %cst_149 : f32 to vector<4x256xf32>
    %575 = arith.select %573, %570, %574 : vector<4x256xi1>, vector<4x256xf32>
    %c0_150 = arith.constant 0 : index
    %c53 = arith.constant 53 : index
    %576 = vector.load %arg6[%c0_150, %c53] : memref<4x147xf32, #tpu.memory_space<vmem>>, vector<4x1xf32>
    %577 = vector.broadcast %576 : vector<4x1xf32> to vector<4x256xf32>
    %578 = arith.mulf %575, %577 : vector<4x256xf32>
    %579 = arith.addf %543, %578 : vector<4x256xf32>
    %c184_i32 = arith.constant 184 : i32
    %580 = tpu.dynamic_rotate %510 by %c184_i32 dim 1 : vector<4x256xf32>, i32 -> vector<4x256xf32>
    %581 = arith.andi %512, %532 : vector<1x256xi1>
    %cst_151 = arith.constant 0.000000e+00 : f32
    %582 = vector.shape_cast %581 : vector<1x256xi1> to vector<1x256xi1>
    %583 = vector.broadcast %582 : vector<1x256xi1> to vector<4x256xi1>
    %584 = vector.broadcast %cst_151 : f32 to vector<4x256xf32>
    %585 = arith.select %583, %580, %584 : vector<4x256xi1>, vector<4x256xf32>
    %c0_152 = arith.constant 0 : index
    %c54 = arith.constant 54 : index
    %586 = vector.load %arg6[%c0_152, %c54] : memref<4x147xf32, #tpu.memory_space<vmem>>, vector<4x1xf32>
    %587 = vector.broadcast %586 : vector<4x1xf32> to vector<4x256xf32>
    %588 = arith.mulf %585, %587 : vector<4x256xf32>
    %589 = arith.addf %552, %588 : vector<4x256xf32>
    %c180_i32 = arith.constant 180 : i32
    %590 = tpu.dynamic_rotate %510 by %c180_i32 dim 1 : vector<4x256xf32>, i32 -> vector<4x256xf32>
    %591 = arith.andi %512, %534 : vector<1x256xi1>
    %cst_153 = arith.constant 0.000000e+00 : f32
    %592 = vector.shape_cast %591 : vector<1x256xi1> to vector<1x256xi1>
    %593 = vector.broadcast %592 : vector<1x256xi1> to vector<4x256xi1>
    %594 = vector.broadcast %cst_153 : f32 to vector<4x256xf32>
    %595 = arith.select %593, %590, %594 : vector<4x256xi1>, vector<4x256xf32>
    %c0_154 = arith.constant 0 : index
    %c55 = arith.constant 55 : index
    %596 = vector.load %arg6[%c0_154, %c55] : memref<4x147xf32, #tpu.memory_space<vmem>>, vector<4x1xf32>
    %597 = vector.broadcast %596 : vector<4x1xf32> to vector<4x256xf32>
    %598 = arith.mulf %595, %597 : vector<4x256xf32>
    %599 = arith.addf %561, %598 : vector<4x256xf32>
    %c140_i32 = arith.constant 140 : i32
    %600 = tpu.dynamic_rotate %510 by %c140_i32 dim 1 : vector<4x256xf32>, i32 -> vector<4x256xf32>
    %601 = arith.andi %514, %524 : vector<1x256xi1>
    %cst_155 = arith.constant 0.000000e+00 : f32
    %602 = vector.shape_cast %601 : vector<1x256xi1> to vector<1x256xi1>
    %603 = vector.broadcast %602 : vector<1x256xi1> to vector<4x256xi1>
    %604 = vector.broadcast %cst_155 : f32 to vector<4x256xf32>
    %605 = arith.select %603, %600, %604 : vector<4x256xi1>, vector<4x256xf32>
    %c0_156 = arith.constant 0 : index
    %c56 = arith.constant 56 : index
    %606 = vector.load %arg6[%c0_156, %c56] : memref<4x147xf32, #tpu.memory_space<vmem>>, vector<4x1xf32>
    %607 = vector.broadcast %606 : vector<4x1xf32> to vector<4x256xf32>
    %608 = arith.mulf %605, %607 : vector<4x256xf32>
    %609 = arith.addf %569, %608 : vector<4x256xf32>
    %c136_i32 = arith.constant 136 : i32
    %610 = tpu.dynamic_rotate %510 by %c136_i32 dim 1 : vector<4x256xf32>, i32 -> vector<4x256xf32>
    %611 = arith.andi %514, %526 : vector<1x256xi1>
    %cst_157 = arith.constant 0.000000e+00 : f32
    %612 = vector.shape_cast %611 : vector<1x256xi1> to vector<1x256xi1>
    %613 = vector.broadcast %612 : vector<1x256xi1> to vector<4x256xi1>
    %614 = vector.broadcast %cst_157 : f32 to vector<4x256xf32>
    %615 = arith.select %613, %610, %614 : vector<4x256xi1>, vector<4x256xf32>
    %c0_158 = arith.constant 0 : index
    %c57 = arith.constant 57 : index
    %616 = vector.load %arg6[%c0_158, %c57] : memref<4x147xf32, #tpu.memory_space<vmem>>, vector<4x1xf32>
    %617 = vector.broadcast %616 : vector<4x1xf32> to vector<4x256xf32>
    %618 = arith.mulf %615, %617 : vector<4x256xf32>
    %619 = arith.addf %579, %618 : vector<4x256xf32>
    %c132_i32 = arith.constant 132 : i32
    %620 = tpu.dynamic_rotate %510 by %c132_i32 dim 1 : vector<4x256xf32>, i32 -> vector<4x256xf32>
    %621 = arith.andi %514, %528 : vector<1x256xi1>
    %cst_159 = arith.constant 0.000000e+00 : f32
    %622 = vector.shape_cast %621 : vector<1x256xi1> to vector<1x256xi1>
    %623 = vector.broadcast %622 : vector<1x256xi1> to vector<4x256xi1>
    %624 = vector.broadcast %cst_159 : f32 to vector<4x256xf32>
    %625 = arith.select %623, %620, %624 : vector<4x256xi1>, vector<4x256xf32>
    %c0_160 = arith.constant 0 : index
    %c58 = arith.constant 58 : index
    %626 = vector.load %arg6[%c0_160, %c58] : memref<4x147xf32, #tpu.memory_space<vmem>>, vector<4x1xf32>
    %627 = vector.broadcast %626 : vector<4x1xf32> to vector<4x256xf32>
    %628 = arith.mulf %625, %627 : vector<4x256xf32>
    %629 = arith.addf %589, %628 : vector<4x256xf32>
    %c128_i32 = arith.constant 128 : i32
    %630 = tpu.dynamic_rotate %510 by %c128_i32 dim 1 : vector<4x256xf32>, i32 -> vector<4x256xf32>
    %cst_161 = arith.constant 0.000000e+00 : f32
    %631 = vector.shape_cast %514 : vector<1x256xi1> to vector<1x256xi1>
    %632 = vector.broadcast %631 : vector<1x256xi1> to vector<4x256xi1>
    %633 = vector.broadcast %cst_161 : f32 to vector<4x256xf32>
    %634 = arith.select %632, %630, %633 : vector<4x256xi1>, vector<4x256xf32>
    %c0_162 = arith.constant 0 : index
    %c59 = arith.constant 59 : index
    %635 = vector.load %arg6[%c0_162, %c59] : memref<4x147xf32, #tpu.memory_space<vmem>>, vector<4x1xf32>
    %636 = vector.broadcast %635 : vector<4x1xf32> to vector<4x256xf32>
    %637 = arith.mulf %634, %636 : vector<4x256xf32>
    %638 = arith.addf %599, %637 : vector<4x256xf32>
    %c124_i32 = arith.constant 124 : i32
    %639 = tpu.dynamic_rotate %510 by %c124_i32 dim 1 : vector<4x256xf32>, i32 -> vector<4x256xf32>
    %640 = arith.andi %514, %530 : vector<1x256xi1>
    %cst_163 = arith.constant 0.000000e+00 : f32
    %641 = vector.shape_cast %640 : vector<1x256xi1> to vector<1x256xi1>
    %642 = vector.broadcast %641 : vector<1x256xi1> to vector<4x256xi1>
    %643 = vector.broadcast %cst_163 : f32 to vector<4x256xf32>
    %644 = arith.select %642, %639, %643 : vector<4x256xi1>, vector<4x256xf32>
    %c0_164 = arith.constant 0 : index
    %c60 = arith.constant 60 : index
    %645 = vector.load %arg6[%c0_164, %c60] : memref<4x147xf32, #tpu.memory_space<vmem>>, vector<4x1xf32>
    %646 = vector.broadcast %645 : vector<4x1xf32> to vector<4x256xf32>
    %647 = arith.mulf %644, %646 : vector<4x256xf32>
    %648 = arith.addf %609, %647 : vector<4x256xf32>
    %c120_i32 = arith.constant 120 : i32
    %649 = tpu.dynamic_rotate %510 by %c120_i32 dim 1 : vector<4x256xf32>, i32 -> vector<4x256xf32>
    %650 = arith.andi %514, %532 : vector<1x256xi1>
    %cst_165 = arith.constant 0.000000e+00 : f32
    %651 = vector.shape_cast %650 : vector<1x256xi1> to vector<1x256xi1>
    %652 = vector.broadcast %651 : vector<1x256xi1> to vector<4x256xi1>
    %653 = vector.broadcast %cst_165 : f32 to vector<4x256xf32>
    %654 = arith.select %652, %649, %653 : vector<4x256xi1>, vector<4x256xf32>
    %c0_166 = arith.constant 0 : index
    %c61 = arith.constant 61 : index
    %655 = vector.load %arg6[%c0_166, %c61] : memref<4x147xf32, #tpu.memory_space<vmem>>, vector<4x1xf32>
    %656 = vector.broadcast %655 : vector<4x1xf32> to vector<4x256xf32>
    %657 = arith.mulf %654, %656 : vector<4x256xf32>
    %658 = arith.addf %619, %657 : vector<4x256xf32>
    %c116_i32 = arith.constant 116 : i32
    %659 = tpu.dynamic_rotate %510 by %c116_i32 dim 1 : vector<4x256xf32>, i32 -> vector<4x256xf32>
    %660 = arith.andi %514, %534 : vector<1x256xi1>
    %cst_167 = arith.constant 0.000000e+00 : f32
    %661 = vector.shape_cast %660 : vector<1x256xi1> to vector<1x256xi1>
    %662 = vector.broadcast %661 : vector<1x256xi1> to vector<4x256xi1>
    %663 = vector.broadcast %cst_167 : f32 to vector<4x256xf32>
    %664 = arith.select %662, %659, %663 : vector<4x256xi1>, vector<4x256xf32>
    %c0_168 = arith.constant 0 : index
    %c62 = arith.constant 62 : index
    %665 = vector.load %arg6[%c0_168, %c62] : memref<4x147xf32, #tpu.memory_space<vmem>>, vector<4x1xf32>
    %666 = vector.broadcast %665 : vector<4x1xf32> to vector<4x256xf32>
    %667 = arith.mulf %664, %666 : vector<4x256xf32>
    %668 = arith.addf %629, %667 : vector<4x256xf32>
    %c76_i32 = arith.constant 76 : i32
    %669 = tpu.dynamic_rotate %510 by %c76_i32 dim 1 : vector<4x256xf32>, i32 -> vector<4x256xf32>
    %670 = arith.andi %516, %524 : vector<1x256xi1>
    %cst_169 = arith.constant 0.000000e+00 : f32
    %671 = vector.shape_cast %670 : vector<1x256xi1> to vector<1x256xi1>
    %672 = vector.broadcast %671 : vector<1x256xi1> to vector<4x256xi1>
    %673 = vector.broadcast %cst_169 : f32 to vector<4x256xf32>
    %674 = arith.select %672, %669, %673 : vector<4x256xi1>, vector<4x256xf32>
    %c0_170 = arith.constant 0 : index
    %c63 = arith.constant 63 : index
    %675 = vector.load %arg6[%c0_170, %c63] : memref<4x147xf32, #tpu.memory_space<vmem>>, vector<4x1xf32>
    %676 = vector.broadcast %675 : vector<4x1xf32> to vector<4x256xf32>
    %677 = arith.mulf %674, %676 : vector<4x256xf32>
    %678 = arith.addf %638, %677 : vector<4x256xf32>
    %c72_i32 = arith.constant 72 : i32
    %679 = tpu.dynamic_rotate %510 by %c72_i32 dim 1 : vector<4x256xf32>, i32 -> vector<4x256xf32>
    %680 = arith.andi %516, %526 : vector<1x256xi1>
    %cst_171 = arith.constant 0.000000e+00 : f32
    %681 = vector.shape_cast %680 : vector<1x256xi1> to vector<1x256xi1>
    %682 = vector.broadcast %681 : vector<1x256xi1> to vector<4x256xi1>
    %683 = vector.broadcast %cst_171 : f32 to vector<4x256xf32>
    %684 = arith.select %682, %679, %683 : vector<4x256xi1>, vector<4x256xf32>
    %c0_172 = arith.constant 0 : index
    %c64 = arith.constant 64 : index
    %685 = vector.load %arg6[%c0_172, %c64] : memref<4x147xf32, #tpu.memory_space<vmem>>, vector<4x1xf32>
    %686 = vector.broadcast %685 : vector<4x1xf32> to vector<4x256xf32>
    %687 = arith.mulf %684, %686 : vector<4x256xf32>
    %688 = arith.addf %648, %687 : vector<4x256xf32>
    %c68_i32_173 = arith.constant 68 : i32
    %689 = tpu.dynamic_rotate %510 by %c68_i32_173 dim 1 : vector<4x256xf32>, i32 -> vector<4x256xf32>
    %690 = arith.andi %516, %528 : vector<1x256xi1>
    %cst_174 = arith.constant 0.000000e+00 : f32
    %691 = vector.shape_cast %690 : vector<1x256xi1> to vector<1x256xi1>
    %692 = vector.broadcast %691 : vector<1x256xi1> to vector<4x256xi1>
    %693 = vector.broadcast %cst_174 : f32 to vector<4x256xf32>
    %694 = arith.select %692, %689, %693 : vector<4x256xi1>, vector<4x256xf32>
    %c0_175 = arith.constant 0 : index
    %c65 = arith.constant 65 : index
    %695 = vector.load %arg6[%c0_175, %c65] : memref<4x147xf32, #tpu.memory_space<vmem>>, vector<4x1xf32>
    %696 = vector.broadcast %695 : vector<4x1xf32> to vector<4x256xf32>
    %697 = arith.mulf %694, %696 : vector<4x256xf32>
    %698 = arith.addf %658, %697 : vector<4x256xf32>
    %c64_i32_176 = arith.constant 64 : i32
    %699 = tpu.dynamic_rotate %510 by %c64_i32_176 dim 1 : vector<4x256xf32>, i32 -> vector<4x256xf32>
    %cst_177 = arith.constant 0.000000e+00 : f32
    %700 = vector.shape_cast %516 : vector<1x256xi1> to vector<1x256xi1>
    %701 = vector.broadcast %700 : vector<1x256xi1> to vector<4x256xi1>
    %702 = vector.broadcast %cst_177 : f32 to vector<4x256xf32>
    %703 = arith.select %701, %699, %702 : vector<4x256xi1>, vector<4x256xf32>
    %c0_178 = arith.constant 0 : index
    %c66 = arith.constant 66 : index
    %704 = vector.load %arg6[%c0_178, %c66] : memref<4x147xf32, #tpu.memory_space<vmem>>, vector<4x1xf32>
    %705 = vector.broadcast %704 : vector<4x1xf32> to vector<4x256xf32>
    %706 = arith.mulf %703, %705 : vector<4x256xf32>
    %707 = arith.addf %668, %706 : vector<4x256xf32>
    %c60_i32_179 = arith.constant 60 : i32
    %708 = tpu.dynamic_rotate %510 by %c60_i32_179 dim 1 : vector<4x256xf32>, i32 -> vector<4x256xf32>
    %709 = arith.andi %516, %530 : vector<1x256xi1>
    %cst_180 = arith.constant 0.000000e+00 : f32
    %710 = vector.shape_cast %709 : vector<1x256xi1> to vector<1x256xi1>
    %711 = vector.broadcast %710 : vector<1x256xi1> to vector<4x256xi1>
    %712 = vector.broadcast %cst_180 : f32 to vector<4x256xf32>
    %713 = arith.select %711, %708, %712 : vector<4x256xi1>, vector<4x256xf32>
    %c0_181 = arith.constant 0 : index
    %c67 = arith.constant 67 : index
    %714 = vector.load %arg6[%c0_181, %c67] : memref<4x147xf32, #tpu.memory_space<vmem>>, vector<4x1xf32>
    %715 = vector.broadcast %714 : vector<4x1xf32> to vector<4x256xf32>
    %716 = arith.mulf %713, %715 : vector<4x256xf32>
    %717 = arith.addf %678, %716 : vector<4x256xf32>
    %c56_i32 = arith.constant 56 : i32
    %718 = tpu.dynamic_rotate %510 by %c56_i32 dim 1 : vector<4x256xf32>, i32 -> vector<4x256xf32>
    %719 = arith.andi %516, %532 : vector<1x256xi1>
    %cst_182 = arith.constant 0.000000e+00 : f32
    %720 = vector.shape_cast %719 : vector<1x256xi1> to vector<1x256xi1>
    %721 = vector.broadcast %720 : vector<1x256xi1> to vector<4x256xi1>
    %722 = vector.broadcast %cst_182 : f32 to vector<4x256xf32>
    %723 = arith.select %721, %718, %722 : vector<4x256xi1>, vector<4x256xf32>
    %c0_183 = arith.constant 0 : index
    %c68 = arith.constant 68 : index
    %724 = vector.load %arg6[%c0_183, %c68] : memref<4x147xf32, #tpu.memory_space<vmem>>, vector<4x1xf32>
    %725 = vector.broadcast %724 : vector<4x1xf32> to vector<4x256xf32>
    %726 = arith.mulf %723, %725 : vector<4x256xf32>
    %727 = arith.addf %688, %726 : vector<4x256xf32>
    %c52_i32 = arith.constant 52 : i32
    %728 = tpu.dynamic_rotate %510 by %c52_i32 dim 1 : vector<4x256xf32>, i32 -> vector<4x256xf32>
    %729 = arith.andi %516, %534 : vector<1x256xi1>
    %cst_184 = arith.constant 0.000000e+00 : f32
    %730 = vector.shape_cast %729 : vector<1x256xi1> to vector<1x256xi1>
    %731 = vector.broadcast %730 : vector<1x256xi1> to vector<4x256xi1>
    %732 = vector.broadcast %cst_184 : f32 to vector<4x256xf32>
    %733 = arith.select %731, %728, %732 : vector<4x256xi1>, vector<4x256xf32>
    %c0_185 = arith.constant 0 : index
    %c69 = arith.constant 69 : index
    %734 = vector.load %arg6[%c0_185, %c69] : memref<4x147xf32, #tpu.memory_space<vmem>>, vector<4x1xf32>
    %735 = vector.broadcast %734 : vector<4x1xf32> to vector<4x256xf32>
    %736 = arith.mulf %733, %735 : vector<4x256xf32>
    %737 = arith.addf %698, %736 : vector<4x256xf32>
    %c12_i32_186 = arith.constant 12 : i32
    %738 = tpu.dynamic_rotate %510 by %c12_i32_186 dim 1 : vector<4x256xf32>, i32 -> vector<4x256xf32>
    %cst_187 = arith.constant 0.000000e+00 : f32
    %739 = vector.shape_cast %524 : vector<1x256xi1> to vector<1x256xi1>
    %740 = vector.broadcast %739 : vector<1x256xi1> to vector<4x256xi1>
    %741 = vector.broadcast %cst_187 : f32 to vector<4x256xf32>
    %742 = arith.select %740, %738, %741 : vector<4x256xi1>, vector<4x256xf32>
    %c0_188 = arith.constant 0 : index
    %c70 = arith.constant 70 : index
    %743 = vector.load %arg6[%c0_188, %c70] : memref<4x147xf32, #tpu.memory_space<vmem>>, vector<4x1xf32>
    %744 = vector.broadcast %743 : vector<4x1xf32> to vector<4x256xf32>
    %745 = arith.mulf %742, %744 : vector<4x256xf32>
    %746 = arith.addf %707, %745 : vector<4x256xf32>
    %c8_i32_189 = arith.constant 8 : i32
    %747 = tpu.dynamic_rotate %510 by %c8_i32_189 dim 1 : vector<4x256xf32>, i32 -> vector<4x256xf32>
    %cst_190 = arith.constant 0.000000e+00 : f32
    %748 = vector.shape_cast %526 : vector<1x256xi1> to vector<1x256xi1>
    %749 = vector.broadcast %748 : vector<1x256xi1> to vector<4x256xi1>
    %750 = vector.broadcast %cst_190 : f32 to vector<4x256xf32>
    %751 = arith.select %749, %747, %750 : vector<4x256xi1>, vector<4x256xf32>
    %c0_191 = arith.constant 0 : index
    %c71 = arith.constant 71 : index
    %752 = vector.load %arg6[%c0_191, %c71] : memref<4x147xf32, #tpu.memory_space<vmem>>, vector<4x1xf32>
    %753 = vector.broadcast %752 : vector<4x1xf32> to vector<4x256xf32>
    %754 = arith.mulf %751, %753 : vector<4x256xf32>
    %755 = arith.addf %717, %754 : vector<4x256xf32>
    %c4_i32_192 = arith.constant 4 : i32
    %756 = tpu.dynamic_rotate %510 by %c4_i32_192 dim 1 : vector<4x256xf32>, i32 -> vector<4x256xf32>
    %cst_193 = arith.constant 0.000000e+00 : f32
    %757 = vector.shape_cast %528 : vector<1x256xi1> to vector<1x256xi1>
    %758 = vector.broadcast %757 : vector<1x256xi1> to vector<4x256xi1>
    %759 = vector.broadcast %cst_193 : f32 to vector<4x256xf32>
    %760 = arith.select %758, %756, %759 : vector<4x256xi1>, vector<4x256xf32>
    %c0_194 = arith.constant 0 : index
    %c72 = arith.constant 72 : index
    %761 = vector.load %arg6[%c0_194, %c72] : memref<4x147xf32, #tpu.memory_space<vmem>>, vector<4x1xf32>
    %762 = vector.broadcast %761 : vector<4x1xf32> to vector<4x256xf32>
    %763 = arith.mulf %760, %762 : vector<4x256xf32>
    %764 = arith.addf %727, %763 : vector<4x256xf32>
    %c0_195 = arith.constant 0 : index
    %c73 = arith.constant 73 : index
    %765 = vector.load %arg6[%c0_195, %c73] : memref<4x147xf32, #tpu.memory_space<vmem>>, vector<4x1xf32>
    %766 = vector.broadcast %765 : vector<4x1xf32> to vector<4x256xf32>
    %767 = arith.mulf %510, %766 : vector<4x256xf32>
    %768 = arith.addf %737, %767 : vector<4x256xf32>
    %c252_i32_196 = arith.constant 252 : i32
    %769 = tpu.dynamic_rotate %510 by %c252_i32_196 dim 1 : vector<4x256xf32>, i32 -> vector<4x256xf32>
    %cst_197 = arith.constant 0.000000e+00 : f32
    %770 = vector.shape_cast %530 : vector<1x256xi1> to vector<1x256xi1>
    %771 = vector.broadcast %770 : vector<1x256xi1> to vector<4x256xi1>
    %772 = vector.broadcast %cst_197 : f32 to vector<4x256xf32>
    %773 = arith.select %771, %769, %772 : vector<4x256xi1>, vector<4x256xf32>
    %c0_198 = arith.constant 0 : index
    %c74 = arith.constant 74 : index
    %774 = vector.load %arg6[%c0_198, %c74] : memref<4x147xf32, #tpu.memory_space<vmem>>, vector<4x1xf32>
    %775 = vector.broadcast %774 : vector<4x1xf32> to vector<4x256xf32>
    %776 = arith.mulf %773, %775 : vector<4x256xf32>
    %777 = arith.addf %746, %776 : vector<4x256xf32>
    %c248_i32 = arith.constant 248 : i32
    %778 = tpu.dynamic_rotate %510 by %c248_i32 dim 1 : vector<4x256xf32>, i32 -> vector<4x256xf32>
    %cst_199 = arith.constant 0.000000e+00 : f32
    %779 = vector.shape_cast %532 : vector<1x256xi1> to vector<1x256xi1>
    %780 = vector.broadcast %779 : vector<1x256xi1> to vector<4x256xi1>
    %781 = vector.broadcast %cst_199 : f32 to vector<4x256xf32>
    %782 = arith.select %780, %778, %781 : vector<4x256xi1>, vector<4x256xf32>
    %c0_200 = arith.constant 0 : index
    %c75 = arith.constant 75 : index
    %783 = vector.load %arg6[%c0_200, %c75] : memref<4x147xf32, #tpu.memory_space<vmem>>, vector<4x1xf32>
    %784 = vector.broadcast %783 : vector<4x1xf32> to vector<4x256xf32>
    %785 = arith.mulf %782, %784 : vector<4x256xf32>
    %786 = arith.addf %755, %785 : vector<4x256xf32>
    %c244_i32 = arith.constant 244 : i32
    %787 = tpu.dynamic_rotate %510 by %c244_i32 dim 1 : vector<4x256xf32>, i32 -> vector<4x256xf32>
    %cst_201 = arith.constant 0.000000e+00 : f32
    %788 = vector.shape_cast %534 : vector<1x256xi1> to vector<1x256xi1>
    %789 = vector.broadcast %788 : vector<1x256xi1> to vector<4x256xi1>
    %790 = vector.broadcast %cst_201 : f32 to vector<4x256xf32>
    %791 = arith.select %789, %787, %790 : vector<4x256xi1>, vector<4x256xf32>
    %c0_202 = arith.constant 0 : index
    %c76 = arith.constant 76 : index
    %792 = vector.load %arg6[%c0_202, %c76] : memref<4x147xf32, #tpu.memory_space<vmem>>, vector<4x1xf32>
    %793 = vector.broadcast %792 : vector<4x1xf32> to vector<4x256xf32>
    %794 = arith.mulf %791, %793 : vector<4x256xf32>
    %795 = arith.addf %764, %794 : vector<4x256xf32>
    %c204_i32_203 = arith.constant 204 : i32
    %796 = tpu.dynamic_rotate %510 by %c204_i32_203 dim 1 : vector<4x256xf32>, i32 -> vector<4x256xf32>
    %797 = arith.andi %518, %524 : vector<1x256xi1>
    %cst_204 = arith.constant 0.000000e+00 : f32
    %798 = vector.shape_cast %797 : vector<1x256xi1> to vector<1x256xi1>
    %799 = vector.broadcast %798 : vector<1x256xi1> to vector<4x256xi1>
    %800 = vector.broadcast %cst_204 : f32 to vector<4x256xf32>
    %801 = arith.select %799, %796, %800 : vector<4x256xi1>, vector<4x256xf32>
    %c0_205 = arith.constant 0 : index
    %c77 = arith.constant 77 : index
    %802 = vector.load %arg6[%c0_205, %c77] : memref<4x147xf32, #tpu.memory_space<vmem>>, vector<4x1xf32>
    %803 = vector.broadcast %802 : vector<4x1xf32> to vector<4x256xf32>
    %804 = arith.mulf %801, %803 : vector<4x256xf32>
    %805 = arith.addf %768, %804 : vector<4x256xf32>
    %c200_i32_206 = arith.constant 200 : i32
    %806 = tpu.dynamic_rotate %510 by %c200_i32_206 dim 1 : vector<4x256xf32>, i32 -> vector<4x256xf32>
    %807 = arith.andi %518, %526 : vector<1x256xi1>
    %cst_207 = arith.constant 0.000000e+00 : f32
    %808 = vector.shape_cast %807 : vector<1x256xi1> to vector<1x256xi1>
    %809 = vector.broadcast %808 : vector<1x256xi1> to vector<4x256xi1>
    %810 = vector.broadcast %cst_207 : f32 to vector<4x256xf32>
    %811 = arith.select %809, %806, %810 : vector<4x256xi1>, vector<4x256xf32>
    %c0_208 = arith.constant 0 : index
    %c78 = arith.constant 78 : index
    %812 = vector.load %arg6[%c0_208, %c78] : memref<4x147xf32, #tpu.memory_space<vmem>>, vector<4x1xf32>
    %813 = vector.broadcast %812 : vector<4x1xf32> to vector<4x256xf32>
    %814 = arith.mulf %811, %813 : vector<4x256xf32>
    %815 = arith.addf %777, %814 : vector<4x256xf32>
    %c196_i32_209 = arith.constant 196 : i32
    %816 = tpu.dynamic_rotate %510 by %c196_i32_209 dim 1 : vector<4x256xf32>, i32 -> vector<4x256xf32>
    %817 = arith.andi %518, %528 : vector<1x256xi1>
    %cst_210 = arith.constant 0.000000e+00 : f32
    %818 = vector.shape_cast %817 : vector<1x256xi1> to vector<1x256xi1>
    %819 = vector.broadcast %818 : vector<1x256xi1> to vector<4x256xi1>
    %820 = vector.broadcast %cst_210 : f32 to vector<4x256xf32>
    %821 = arith.select %819, %816, %820 : vector<4x256xi1>, vector<4x256xf32>
    %c0_211 = arith.constant 0 : index
    %c79 = arith.constant 79 : index
    %822 = vector.load %arg6[%c0_211, %c79] : memref<4x147xf32, #tpu.memory_space<vmem>>, vector<4x1xf32>
    %823 = vector.broadcast %822 : vector<4x1xf32> to vector<4x256xf32>
    %824 = arith.mulf %821, %823 : vector<4x256xf32>
    %825 = arith.addf %786, %824 : vector<4x256xf32>
    %c192_i32_212 = arith.constant 192 : i32
    %826 = tpu.dynamic_rotate %510 by %c192_i32_212 dim 1 : vector<4x256xf32>, i32 -> vector<4x256xf32>
    %cst_213 = arith.constant 0.000000e+00 : f32
    %827 = vector.shape_cast %518 : vector<1x256xi1> to vector<1x256xi1>
    %828 = vector.broadcast %827 : vector<1x256xi1> to vector<4x256xi1>
    %829 = vector.broadcast %cst_213 : f32 to vector<4x256xf32>
    %830 = arith.select %828, %826, %829 : vector<4x256xi1>, vector<4x256xf32>
    %c0_214 = arith.constant 0 : index
    %c80 = arith.constant 80 : index
    %831 = vector.load %arg6[%c0_214, %c80] : memref<4x147xf32, #tpu.memory_space<vmem>>, vector<4x1xf32>
    %832 = vector.broadcast %831 : vector<4x1xf32> to vector<4x256xf32>
    %833 = arith.mulf %830, %832 : vector<4x256xf32>
    %834 = arith.addf %795, %833 : vector<4x256xf32>
    %c188_i32_215 = arith.constant 188 : i32
    %835 = tpu.dynamic_rotate %510 by %c188_i32_215 dim 1 : vector<4x256xf32>, i32 -> vector<4x256xf32>
    %836 = arith.andi %518, %530 : vector<1x256xi1>
    %cst_216 = arith.constant 0.000000e+00 : f32
    %837 = vector.shape_cast %836 : vector<1x256xi1> to vector<1x256xi1>
    %838 = vector.broadcast %837 : vector<1x256xi1> to vector<4x256xi1>
    %839 = vector.broadcast %cst_216 : f32 to vector<4x256xf32>
    %840 = arith.select %838, %835, %839 : vector<4x256xi1>, vector<4x256xf32>
    %c0_217 = arith.constant 0 : index
    %c81 = arith.constant 81 : index
    %841 = vector.load %arg6[%c0_217, %c81] : memref<4x147xf32, #tpu.memory_space<vmem>>, vector<4x1xf32>
    %842 = vector.broadcast %841 : vector<4x1xf32> to vector<4x256xf32>
    %843 = arith.mulf %840, %842 : vector<4x256xf32>
    %844 = arith.addf %805, %843 : vector<4x256xf32>
    %c184_i32_218 = arith.constant 184 : i32
    %845 = tpu.dynamic_rotate %510 by %c184_i32_218 dim 1 : vector<4x256xf32>, i32 -> vector<4x256xf32>
    %846 = arith.andi %518, %532 : vector<1x256xi1>
    %cst_219 = arith.constant 0.000000e+00 : f32
    %847 = vector.shape_cast %846 : vector<1x256xi1> to vector<1x256xi1>
    %848 = vector.broadcast %847 : vector<1x256xi1> to vector<4x256xi1>
    %849 = vector.broadcast %cst_219 : f32 to vector<4x256xf32>
    %850 = arith.select %848, %845, %849 : vector<4x256xi1>, vector<4x256xf32>
    %c0_220 = arith.constant 0 : index
    %c82 = arith.constant 82 : index
    %851 = vector.load %arg6[%c0_220, %c82] : memref<4x147xf32, #tpu.memory_space<vmem>>, vector<4x1xf32>
    %852 = vector.broadcast %851 : vector<4x1xf32> to vector<4x256xf32>
    %853 = arith.mulf %850, %852 : vector<4x256xf32>
    %854 = arith.addf %815, %853 : vector<4x256xf32>
    %c180_i32_221 = arith.constant 180 : i32
    %855 = tpu.dynamic_rotate %510 by %c180_i32_221 dim 1 : vector<4x256xf32>, i32 -> vector<4x256xf32>
    %856 = arith.andi %518, %534 : vector<1x256xi1>
    %cst_222 = arith.constant 0.000000e+00 : f32
    %857 = vector.shape_cast %856 : vector<1x256xi1> to vector<1x256xi1>
    %858 = vector.broadcast %857 : vector<1x256xi1> to vector<4x256xi1>
    %859 = vector.broadcast %cst_222 : f32 to vector<4x256xf32>
    %860 = arith.select %858, %855, %859 : vector<4x256xi1>, vector<4x256xf32>
    %c0_223 = arith.constant 0 : index
    %c83 = arith.constant 83 : index
    %861 = vector.load %arg6[%c0_223, %c83] : memref<4x147xf32, #tpu.memory_space<vmem>>, vector<4x1xf32>
    %862 = vector.broadcast %861 : vector<4x1xf32> to vector<4x256xf32>
    %863 = arith.mulf %860, %862 : vector<4x256xf32>
    %864 = arith.addf %825, %863 : vector<4x256xf32>
    %c140_i32_224 = arith.constant 140 : i32
    %865 = tpu.dynamic_rotate %510 by %c140_i32_224 dim 1 : vector<4x256xf32>, i32 -> vector<4x256xf32>
    %866 = arith.andi %520, %524 : vector<1x256xi1>
    %cst_225 = arith.constant 0.000000e+00 : f32
    %867 = vector.shape_cast %866 : vector<1x256xi1> to vector<1x256xi1>
    %868 = vector.broadcast %867 : vector<1x256xi1> to vector<4x256xi1>
    %869 = vector.broadcast %cst_225 : f32 to vector<4x256xf32>
    %870 = arith.select %868, %865, %869 : vector<4x256xi1>, vector<4x256xf32>
    %c0_226 = arith.constant 0 : index
    %c84 = arith.constant 84 : index
    %871 = vector.load %arg6[%c0_226, %c84] : memref<4x147xf32, #tpu.memory_space<vmem>>, vector<4x1xf32>
    %872 = vector.broadcast %871 : vector<4x1xf32> to vector<4x256xf32>
    %873 = arith.mulf %870, %872 : vector<4x256xf32>
    %874 = arith.addf %834, %873 : vector<4x256xf32>
    %c136_i32_227 = arith.constant 136 : i32
    %875 = tpu.dynamic_rotate %510 by %c136_i32_227 dim 1 : vector<4x256xf32>, i32 -> vector<4x256xf32>
    %876 = arith.andi %520, %526 : vector<1x256xi1>
    %cst_228 = arith.constant 0.000000e+00 : f32
    %877 = vector.shape_cast %876 : vector<1x256xi1> to vector<1x256xi1>
    %878 = vector.broadcast %877 : vector<1x256xi1> to vector<4x256xi1>
    %879 = vector.broadcast %cst_228 : f32 to vector<4x256xf32>
    %880 = arith.select %878, %875, %879 : vector<4x256xi1>, vector<4x256xf32>
    %c0_229 = arith.constant 0 : index
    %c85 = arith.constant 85 : index
    %881 = vector.load %arg6[%c0_229, %c85] : memref<4x147xf32, #tpu.memory_space<vmem>>, vector<4x1xf32>
    %882 = vector.broadcast %881 : vector<4x1xf32> to vector<4x256xf32>
    %883 = arith.mulf %880, %882 : vector<4x256xf32>
    %884 = arith.addf %844, %883 : vector<4x256xf32>
    %c132_i32_230 = arith.constant 132 : i32
    %885 = tpu.dynamic_rotate %510 by %c132_i32_230 dim 1 : vector<4x256xf32>, i32 -> vector<4x256xf32>
    %886 = arith.andi %520, %528 : vector<1x256xi1>
    %cst_231 = arith.constant 0.000000e+00 : f32
    %887 = vector.shape_cast %886 : vector<1x256xi1> to vector<1x256xi1>
    %888 = vector.broadcast %887 : vector<1x256xi1> to vector<4x256xi1>
    %889 = vector.broadcast %cst_231 : f32 to vector<4x256xf32>
    %890 = arith.select %888, %885, %889 : vector<4x256xi1>, vector<4x256xf32>
    %c0_232 = arith.constant 0 : index
    %c86 = arith.constant 86 : index
    %891 = vector.load %arg6[%c0_232, %c86] : memref<4x147xf32, #tpu.memory_space<vmem>>, vector<4x1xf32>
    %892 = vector.broadcast %891 : vector<4x1xf32> to vector<4x256xf32>
    %893 = arith.mulf %890, %892 : vector<4x256xf32>
    %894 = arith.addf %854, %893 : vector<4x256xf32>
    %c128_i32_233 = arith.constant 128 : i32
    %895 = tpu.dynamic_rotate %510 by %c128_i32_233 dim 1 : vector<4x256xf32>, i32 -> vector<4x256xf32>
    %cst_234 = arith.constant 0.000000e+00 : f32
    %896 = vector.shape_cast %520 : vector<1x256xi1> to vector<1x256xi1>
    %897 = vector.broadcast %896 : vector<1x256xi1> to vector<4x256xi1>
    %898 = vector.broadcast %cst_234 : f32 to vector<4x256xf32>
    %899 = arith.select %897, %895, %898 : vector<4x256xi1>, vector<4x256xf32>
    %c0_235 = arith.constant 0 : index
    %c87 = arith.constant 87 : index
    %900 = vector.load %arg6[%c0_235, %c87] : memref<4x147xf32, #tpu.memory_space<vmem>>, vector<4x1xf32>
    %901 = vector.broadcast %900 : vector<4x1xf32> to vector<4x256xf32>
    %902 = arith.mulf %899, %901 : vector<4x256xf32>
    %903 = arith.addf %864, %902 : vector<4x256xf32>
    %c124_i32_236 = arith.constant 124 : i32
    %904 = tpu.dynamic_rotate %510 by %c124_i32_236 dim 1 : vector<4x256xf32>, i32 -> vector<4x256xf32>
    %905 = arith.andi %520, %530 : vector<1x256xi1>
    %cst_237 = arith.constant 0.000000e+00 : f32
    %906 = vector.shape_cast %905 : vector<1x256xi1> to vector<1x256xi1>
    %907 = vector.broadcast %906 : vector<1x256xi1> to vector<4x256xi1>
    %908 = vector.broadcast %cst_237 : f32 to vector<4x256xf32>
    %909 = arith.select %907, %904, %908 : vector<4x256xi1>, vector<4x256xf32>
    %c0_238 = arith.constant 0 : index
    %c88 = arith.constant 88 : index
    %910 = vector.load %arg6[%c0_238, %c88] : memref<4x147xf32, #tpu.memory_space<vmem>>, vector<4x1xf32>
    %911 = vector.broadcast %910 : vector<4x1xf32> to vector<4x256xf32>
    %912 = arith.mulf %909, %911 : vector<4x256xf32>
    %913 = arith.addf %874, %912 : vector<4x256xf32>
    %c120_i32_239 = arith.constant 120 : i32
    %914 = tpu.dynamic_rotate %510 by %c120_i32_239 dim 1 : vector<4x256xf32>, i32 -> vector<4x256xf32>
    %915 = arith.andi %520, %532 : vector<1x256xi1>
    %cst_240 = arith.constant 0.000000e+00 : f32
    %916 = vector.shape_cast %915 : vector<1x256xi1> to vector<1x256xi1>
    %917 = vector.broadcast %916 : vector<1x256xi1> to vector<4x256xi1>
    %918 = vector.broadcast %cst_240 : f32 to vector<4x256xf32>
    %919 = arith.select %917, %914, %918 : vector<4x256xi1>, vector<4x256xf32>
    %c0_241 = arith.constant 0 : index
    %c89 = arith.constant 89 : index
    %920 = vector.load %arg6[%c0_241, %c89] : memref<4x147xf32, #tpu.memory_space<vmem>>, vector<4x1xf32>
    %921 = vector.broadcast %920 : vector<4x1xf32> to vector<4x256xf32>
    %922 = arith.mulf %919, %921 : vector<4x256xf32>
    %923 = arith.addf %884, %922 : vector<4x256xf32>
    %c116_i32_242 = arith.constant 116 : i32
    %924 = tpu.dynamic_rotate %510 by %c116_i32_242 dim 1 : vector<4x256xf32>, i32 -> vector<4x256xf32>
    %925 = arith.andi %520, %534 : vector<1x256xi1>
    %cst_243 = arith.constant 0.000000e+00 : f32
    %926 = vector.shape_cast %925 : vector<1x256xi1> to vector<1x256xi1>
    %927 = vector.broadcast %926 : vector<1x256xi1> to vector<4x256xi1>
    %928 = vector.broadcast %cst_243 : f32 to vector<4x256xf32>
    %929 = arith.select %927, %924, %928 : vector<4x256xi1>, vector<4x256xf32>
    %c0_244 = arith.constant 0 : index
    %c90 = arith.constant 90 : index
    %930 = vector.load %arg6[%c0_244, %c90] : memref<4x147xf32, #tpu.memory_space<vmem>>, vector<4x1xf32>
    %931 = vector.broadcast %930 : vector<4x1xf32> to vector<4x256xf32>
    %932 = arith.mulf %929, %931 : vector<4x256xf32>
    %933 = arith.addf %894, %932 : vector<4x256xf32>
    %c76_i32_245 = arith.constant 76 : i32
    %934 = tpu.dynamic_rotate %510 by %c76_i32_245 dim 1 : vector<4x256xf32>, i32 -> vector<4x256xf32>
    %935 = arith.andi %522, %524 : vector<1x256xi1>
    %cst_246 = arith.constant 0.000000e+00 : f32
    %936 = vector.shape_cast %935 : vector<1x256xi1> to vector<1x256xi1>
    %937 = vector.broadcast %936 : vector<1x256xi1> to vector<4x256xi1>
    %938 = vector.broadcast %cst_246 : f32 to vector<4x256xf32>
    %939 = arith.select %937, %934, %938 : vector<4x256xi1>, vector<4x256xf32>
    %c0_247 = arith.constant 0 : index
    %c91 = arith.constant 91 : index
    %940 = vector.load %arg6[%c0_247, %c91] : memref<4x147xf32, #tpu.memory_space<vmem>>, vector<4x1xf32>
    %941 = vector.broadcast %940 : vector<4x1xf32> to vector<4x256xf32>
    %942 = arith.mulf %939, %941 : vector<4x256xf32>
    %943 = arith.addf %903, %942 : vector<4x256xf32>
    %c72_i32_248 = arith.constant 72 : i32
    %944 = tpu.dynamic_rotate %510 by %c72_i32_248 dim 1 : vector<4x256xf32>, i32 -> vector<4x256xf32>
    %945 = arith.andi %522, %526 : vector<1x256xi1>
    %cst_249 = arith.constant 0.000000e+00 : f32
    %946 = vector.shape_cast %945 : vector<1x256xi1> to vector<1x256xi1>
    %947 = vector.broadcast %946 : vector<1x256xi1> to vector<4x256xi1>
    %948 = vector.broadcast %cst_249 : f32 to vector<4x256xf32>
    %949 = arith.select %947, %944, %948 : vector<4x256xi1>, vector<4x256xf32>
    %c0_250 = arith.constant 0 : index
    %c92 = arith.constant 92 : index
    %950 = vector.load %arg6[%c0_250, %c92] : memref<4x147xf32, #tpu.memory_space<vmem>>, vector<4x1xf32>
    %951 = vector.broadcast %950 : vector<4x1xf32> to vector<4x256xf32>
    %952 = arith.mulf %949, %951 : vector<4x256xf32>
    %953 = arith.addf %913, %952 : vector<4x256xf32>
    %c68_i32_251 = arith.constant 68 : i32
    %954 = tpu.dynamic_rotate %510 by %c68_i32_251 dim 1 : vector<4x256xf32>, i32 -> vector<4x256xf32>
    %955 = arith.andi %522, %528 : vector<1x256xi1>
    %cst_252 = arith.constant 0.000000e+00 : f32
    %956 = vector.shape_cast %955 : vector<1x256xi1> to vector<1x256xi1>
    %957 = vector.broadcast %956 : vector<1x256xi1> to vector<4x256xi1>
    %958 = vector.broadcast %cst_252 : f32 to vector<4x256xf32>
    %959 = arith.select %957, %954, %958 : vector<4x256xi1>, vector<4x256xf32>
    %c0_253 = arith.constant 0 : index
    %c93 = arith.constant 93 : index
    %960 = vector.load %arg6[%c0_253, %c93] : memref<4x147xf32, #tpu.memory_space<vmem>>, vector<4x1xf32>
    %961 = vector.broadcast %960 : vector<4x1xf32> to vector<4x256xf32>
    %962 = arith.mulf %959, %961 : vector<4x256xf32>
    %963 = arith.addf %923, %962 : vector<4x256xf32>
    %c64_i32_254 = arith.constant 64 : i32
    %964 = tpu.dynamic_rotate %510 by %c64_i32_254 dim 1 : vector<4x256xf32>, i32 -> vector<4x256xf32>
    %cst_255 = arith.constant 0.000000e+00 : f32
    %965 = vector.shape_cast %522 : vector<1x256xi1> to vector<1x256xi1>
    %966 = vector.broadcast %965 : vector<1x256xi1> to vector<4x256xi1>
    %967 = vector.broadcast %cst_255 : f32 to vector<4x256xf32>
    %968 = arith.select %966, %964, %967 : vector<4x256xi1>, vector<4x256xf32>
    %c0_256 = arith.constant 0 : index
    %c94 = arith.constant 94 : index
    %969 = vector.load %arg6[%c0_256, %c94] : memref<4x147xf32, #tpu.memory_space<vmem>>, vector<4x1xf32>
    %970 = vector.broadcast %969 : vector<4x1xf32> to vector<4x256xf32>
    %971 = arith.mulf %968, %970 : vector<4x256xf32>
    %972 = arith.addf %933, %971 : vector<4x256xf32>
    %c60_i32_257 = arith.constant 60 : i32
    %973 = tpu.dynamic_rotate %510 by %c60_i32_257 dim 1 : vector<4x256xf32>, i32 -> vector<4x256xf32>
    %974 = arith.andi %522, %530 : vector<1x256xi1>
    %cst_258 = arith.constant 0.000000e+00 : f32
    %975 = vector.shape_cast %974 : vector<1x256xi1> to vector<1x256xi1>
    %976 = vector.broadcast %975 : vector<1x256xi1> to vector<4x256xi1>
    %977 = vector.broadcast %cst_258 : f32 to vector<4x256xf32>
    %978 = arith.select %976, %973, %977 : vector<4x256xi1>, vector<4x256xf32>
    %c0_259 = arith.constant 0 : index
    %c95 = arith.constant 95 : index
    %979 = vector.load %arg6[%c0_259, %c95] : memref<4x147xf32, #tpu.memory_space<vmem>>, vector<4x1xf32>
    %980 = vector.broadcast %979 : vector<4x1xf32> to vector<4x256xf32>
    %981 = arith.mulf %978, %980 : vector<4x256xf32>
    %982 = arith.addf %943, %981 : vector<4x256xf32>
    %c56_i32_260 = arith.constant 56 : i32
    %983 = tpu.dynamic_rotate %510 by %c56_i32_260 dim 1 : vector<4x256xf32>, i32 -> vector<4x256xf32>
    %984 = arith.andi %522, %532 : vector<1x256xi1>
    %cst_261 = arith.constant 0.000000e+00 : f32
    %985 = vector.shape_cast %984 : vector<1x256xi1> to vector<1x256xi1>
    %986 = vector.broadcast %985 : vector<1x256xi1> to vector<4x256xi1>
    %987 = vector.broadcast %cst_261 : f32 to vector<4x256xf32>
    %988 = arith.select %986, %983, %987 : vector<4x256xi1>, vector<4x256xf32>
    %c0_262 = arith.constant 0 : index
    %c96 = arith.constant 96 : index
    %989 = vector.load %arg6[%c0_262, %c96] : memref<4x147xf32, #tpu.memory_space<vmem>>, vector<4x1xf32>
    %990 = vector.broadcast %989 : vector<4x1xf32> to vector<4x256xf32>
    %991 = arith.mulf %988, %990 : vector<4x256xf32>
    %992 = arith.addf %953, %991 : vector<4x256xf32>
    %c52_i32_263 = arith.constant 52 : i32
    %993 = tpu.dynamic_rotate %510 by %c52_i32_263 dim 1 : vector<4x256xf32>, i32 -> vector<4x256xf32>
    %994 = arith.andi %522, %534 : vector<1x256xi1>
    %cst_264 = arith.constant 0.000000e+00 : f32
    %995 = vector.shape_cast %994 : vector<1x256xi1> to vector<1x256xi1>
    %996 = vector.broadcast %995 : vector<1x256xi1> to vector<4x256xi1>
    %997 = vector.broadcast %cst_264 : f32 to vector<4x256xf32>
    %998 = arith.select %996, %993, %997 : vector<4x256xi1>, vector<4x256xf32>
    %c0_265 = arith.constant 0 : index
    %c97 = arith.constant 97 : index
    %999 = vector.load %arg6[%c0_265, %c97] : memref<4x147xf32, #tpu.memory_space<vmem>>, vector<4x1xf32>
    %1000 = vector.broadcast %999 : vector<4x1xf32> to vector<4x256xf32>
    %1001 = arith.mulf %998, %1000 : vector<4x256xf32>
    %1002 = arith.addf %963, %1001 : vector<4x256xf32>
    %c0_266 = arith.constant 0 : index
    %c1_267 = arith.constant 1 : index
    %1003 = vector.load %arg7[%c0_266, %c1_267] : memref<4x3xf32, #tpu.memory_space<vmem>>, vector<4x1xf32>
    %1004 = arith.addf %1002, %972 : vector<4x256xf32>
    %1005 = arith.addf %1004, %982 : vector<4x256xf32>
    %1006 = arith.addf %1005, %992 : vector<4x256xf32>
    %1007 = vector.broadcast %1003 : vector<4x1xf32> to vector<4x256xf32>
    %1008 = arith.addf %1006, %1007 : vector<4x256xf32>
    %c4_268 = arith.constant 4 : index
    %c0_269 = arith.constant 0 : index
    %1009 = vector.load %arg12[%c4_268, %c0_269] : memref<12x256xf32, #tpu.memory_space<vmem>>, vector<4x256xf32>
    tpu.vector_store %arg12[%c4_268, %c0_269], %1008 {strides = array<i32>} : memref<12x256xf32, #tpu.memory_space<vmem>>, vector<4x256xf32>,
    %c8_270 = arith.constant 8 : index
    %c0_271 = arith.constant 0 : index
    %1010 = vector.load %arg11[%c8_270, %c0_271] : memref<12x256xf32, #tpu.memory_space<vmem>>, vector<4x256xf32>
    %c8_i32_272 = arith.constant 8 : i32
    %1011 = vector.broadcast %c8_i32_272 : i32 to vector<1x256xi32>
    %1012 = arith.cmpi sge, %2, %1011 : vector<1x256xi32>
    %c8_i32_273 = arith.constant 8 : i32
    %1013 = vector.broadcast %c8_i32_273 : i32 to vector<1x256xi32>
    %1014 = arith.cmpi slt, %2, %1013 : vector<1x256xi32>
    %c8_i32_274 = arith.constant 8 : i32
    %1015 = vector.broadcast %c8_i32_274 : i32 to vector<1x256xi32>
    %1016 = arith.cmpi sge, %3, %1015 : vector<1x256xi32>
    %c8_i32_275 = arith.constant 8 : i32
    %1017 = vector.broadcast %c8_i32_275 : i32 to vector<1x256xi32>
    %1018 = arith.cmpi slt, %3, %1017 : vector<1x256xi32>
    %c136_i32_276 = arith.constant 136 : i32
    %1019 = tpu.dynamic_rotate %1010 by %c136_i32_276 dim 1 : vector<4x256xf32>, i32 -> vector<4x256xf32>
    %1020 = arith.andi %1012, %1016 : vector<1x256xi1>
    %cst_277 = arith.constant 0.000000e+00 : f32
    %1021 = vector.shape_cast %1020 : vector<1x256xi1> to vector<1x256xi1>
    %1022 = vector.broadcast %1021 : vector<1x256xi1> to vector<4x256xi1>
    %1023 = vector.broadcast %cst_277 : f32 to vector<4x256xf32>
    %1024 = arith.select %1022, %1019, %1023 : vector<4x256xi1>, vector<4x256xf32>
    %c0_278 = arith.constant 0 : index
    %c114 = arith.constant 114 : index
    %1025 = vector.load %arg6[%c0_278, %c114] : memref<4x147xf32, #tpu.memory_space<vmem>>, vector<4x1xf32>
    %1026 = vector.broadcast %1025 : vector<4x1xf32> to vector<4x256xf32>
    %1027 = arith.mulf %1024, %1026 : vector<4x256xf32>
    %c128_i32_279 = arith.constant 128 : i32
    %1028 = tpu.dynamic_rotate %1010 by %c128_i32_279 dim 1 : vector<4x256xf32>, i32 -> vector<4x256xf32>
    %cst_280 = arith.constant 0.000000e+00 : f32
    %1029 = vector.shape_cast %1012 : vector<1x256xi1> to vector<1x256xi1>
    %1030 = vector.broadcast %1029 : vector<1x256xi1> to vector<4x256xi1>
    %1031 = vector.broadcast %cst_280 : f32 to vector<4x256xf32>
    %1032 = arith.select %1030, %1028, %1031 : vector<4x256xi1>, vector<4x256xf32>
    %c0_281 = arith.constant 0 : index
    %c115 = arith.constant 115 : index
    %1033 = vector.load %arg6[%c0_281, %c115] : memref<4x147xf32, #tpu.memory_space<vmem>>, vector<4x1xf32>
    %1034 = vector.broadcast %1033 : vector<4x1xf32> to vector<4x256xf32>
    %1035 = arith.mulf %1032, %1034 : vector<4x256xf32>
    %c120_i32_282 = arith.constant 120 : i32
    %1036 = tpu.dynamic_rotate %1010 by %c120_i32_282 dim 1 : vector<4x256xf32>, i32 -> vector<4x256xf32>
    %1037 = arith.andi %1012, %1018 : vector<1x256xi1>
    %cst_283 = arith.constant 0.000000e+00 : f32
    %1038 = vector.shape_cast %1037 : vector<1x256xi1> to vector<1x256xi1>
    %1039 = vector.broadcast %1038 : vector<1x256xi1> to vector<4x256xi1>
    %1040 = vector.broadcast %cst_283 : f32 to vector<4x256xf32>
    %1041 = arith.select %1039, %1036, %1040 : vector<4x256xi1>, vector<4x256xf32>
    %c0_284 = arith.constant 0 : index
    %c116 = arith.constant 116 : index
    %1042 = vector.load %arg6[%c0_284, %c116] : memref<4x147xf32, #tpu.memory_space<vmem>>, vector<4x1xf32>
    %1043 = vector.broadcast %1042 : vector<4x1xf32> to vector<4x256xf32>
    %1044 = arith.mulf %1041, %1043 : vector<4x256xf32>
    %c8_i32_285 = arith.constant 8 : i32
    %1045 = tpu.dynamic_rotate %1010 by %c8_i32_285 dim 1 : vector<4x256xf32>, i32 -> vector<4x256xf32>
    %cst_286 = arith.constant 0.000000e+00 : f32
    %1046 = vector.shape_cast %1016 : vector<1x256xi1> to vector<1x256xi1>
    %1047 = vector.broadcast %1046 : vector<1x256xi1> to vector<4x256xi1>
    %1048 = vector.broadcast %cst_286 : f32 to vector<4x256xf32>
    %1049 = arith.select %1047, %1045, %1048 : vector<4x256xi1>, vector<4x256xf32>
    %c0_287 = arith.constant 0 : index
    %c121 = arith.constant 121 : index
    %1050 = vector.load %arg6[%c0_287, %c121] : memref<4x147xf32, #tpu.memory_space<vmem>>, vector<4x1xf32>
    %1051 = vector.broadcast %1050 : vector<4x1xf32> to vector<4x256xf32>
    %1052 = arith.mulf %1049, %1051 : vector<4x256xf32>
    %c0_288 = arith.constant 0 : index
    %c122 = arith.constant 122 : index
    %1053 = vector.load %arg6[%c0_288, %c122] : memref<4x147xf32, #tpu.memory_space<vmem>>, vector<4x1xf32>
    %1054 = vector.broadcast %1053 : vector<4x1xf32> to vector<4x256xf32>
    %1055 = arith.mulf %1010, %1054 : vector<4x256xf32>
    %1056 = arith.addf %1027, %1055 : vector<4x256xf32>
    %c248_i32_289 = arith.constant 248 : i32
    %1057 = tpu.dynamic_rotate %1010 by %c248_i32_289 dim 1 : vector<4x256xf32>, i32 -> vector<4x256xf32>
    %cst_290 = arith.constant 0.000000e+00 : f32
    %1058 = vector.shape_cast %1018 : vector<1x256xi1> to vector<1x256xi1>
    %1059 = vector.broadcast %1058 : vector<1x256xi1> to vector<4x256xi1>
    %1060 = vector.broadcast %cst_290 : f32 to vector<4x256xf32>
    %1061 = arith.select %1059, %1057, %1060 : vector<4x256xi1>, vector<4x256xf32>
    %c0_291 = arith.constant 0 : index
    %c123 = arith.constant 123 : index
    %1062 = vector.load %arg6[%c0_291, %c123] : memref<4x147xf32, #tpu.memory_space<vmem>>, vector<4x1xf32>
    %1063 = vector.broadcast %1062 : vector<4x1xf32> to vector<4x256xf32>
    %1064 = arith.mulf %1061, %1063 : vector<4x256xf32>
    %1065 = arith.addf %1035, %1064 : vector<4x256xf32>
    %c136_i32_292 = arith.constant 136 : i32
    %1066 = tpu.dynamic_rotate %1010 by %c136_i32_292 dim 1 : vector<4x256xf32>, i32 -> vector<4x256xf32>
    %1067 = arith.andi %1014, %1016 : vector<1x256xi1>
    %cst_293 = arith.constant 0.000000e+00 : f32
    %1068 = vector.shape_cast %1067 : vector<1x256xi1> to vector<1x256xi1>
    %1069 = vector.broadcast %1068 : vector<1x256xi1> to vector<4x256xi1>
    %1070 = vector.broadcast %cst_293 : f32 to vector<4x256xf32>
    %1071 = arith.select %1069, %1066, %1070 : vector<4x256xi1>, vector<4x256xf32>
    %c0_294 = arith.constant 0 : index
    %c128 = arith.constant 128 : index
    %1072 = vector.load %arg6[%c0_294, %c128] : memref<4x147xf32, #tpu.memory_space<vmem>>, vector<4x1xf32>
    %1073 = vector.broadcast %1072 : vector<4x1xf32> to vector<4x256xf32>
    %1074 = arith.mulf %1071, %1073 : vector<4x256xf32>
    %1075 = arith.addf %1044, %1074 : vector<4x256xf32>
    %c128_i32_295 = arith.constant 128 : i32
    %1076 = tpu.dynamic_rotate %1010 by %c128_i32_295 dim 1 : vector<4x256xf32>, i32 -> vector<4x256xf32>
    %cst_296 = arith.constant 0.000000e+00 : f32
    %1077 = vector.shape_cast %1014 : vector<1x256xi1> to vector<1x256xi1>
    %1078 = vector.broadcast %1077 : vector<1x256xi1> to vector<4x256xi1>
    %1079 = vector.broadcast %cst_296 : f32 to vector<4x256xf32>
    %1080 = arith.select %1078, %1076, %1079 : vector<4x256xi1>, vector<4x256xf32>
    %c0_297 = arith.constant 0 : index
    %c129 = arith.constant 129 : index
    %1081 = vector.load %arg6[%c0_297, %c129] : memref<4x147xf32, #tpu.memory_space<vmem>>, vector<4x1xf32>
    %1082 = vector.broadcast %1081 : vector<4x1xf32> to vector<4x256xf32>
    %1083 = arith.mulf %1080, %1082 : vector<4x256xf32>
    %1084 = arith.addf %1052, %1083 : vector<4x256xf32>
    %c120_i32_298 = arith.constant 120 : i32
    %1085 = tpu.dynamic_rotate %1010 by %c120_i32_298 dim 1 : vector<4x256xf32>, i32 -> vector<4x256xf32>
    %1086 = arith.andi %1014, %1018 : vector<1x256xi1>
    %cst_299 = arith.constant 0.000000e+00 : f32
    %1087 = vector.shape_cast %1086 : vector<1x256xi1> to vector<1x256xi1>
    %1088 = vector.broadcast %1087 : vector<1x256xi1> to vector<4x256xi1>
    %1089 = vector.broadcast %cst_299 : f32 to vector<4x256xf32>
    %1090 = arith.select %1088, %1085, %1089 : vector<4x256xi1>, vector<4x256xf32>
    %c0_300 = arith.constant 0 : index
    %c130 = arith.constant 130 : index
    %1091 = vector.load %arg6[%c0_300, %c130] : memref<4x147xf32, #tpu.memory_space<vmem>>, vector<4x1xf32>
    %1092 = vector.broadcast %1091 : vector<4x1xf32> to vector<4x256xf32>
    %1093 = arith.mulf %1090, %1092 : vector<4x256xf32>
    %1094 = arith.addf %1056, %1093 : vector<4x256xf32>
    %c0_301 = arith.constant 0 : index
    %c2_302 = arith.constant 2 : index
    %1095 = vector.load %arg7[%c0_301, %c2_302] : memref<4x3xf32, #tpu.memory_space<vmem>>, vector<4x1xf32>
    %1096 = arith.addf %1094, %1065 : vector<4x256xf32>
    %1097 = arith.addf %1096, %1075 : vector<4x256xf32>
    %1098 = arith.addf %1097, %1084 : vector<4x256xf32>
    %1099 = vector.broadcast %1095 : vector<4x1xf32> to vector<4x256xf32>
    %1100 = arith.addf %1098, %1099 : vector<4x256xf32>
    %c8_303 = arith.constant 8 : index
    %c0_304 = arith.constant 0 : index
    %1101 = vector.load %arg12[%c8_303, %c0_304] : memref<12x256xf32, #tpu.memory_space<vmem>>, vector<4x256xf32>
    tpu.vector_store %arg12[%c8_303, %c0_304], %1100 {strides = array<i32>} : memref<12x256xf32, #tpu.memory_space<vmem>>, vector<4x256xf32>,
    %c0_305 = arith.constant 0 : index
    %c0_306 = arith.constant 0 : index
    %1102 = vector.load %arg8[%c0_305, %c0_306] : memref<4x12xf32, #tpu.memory_space<vmem>>, vector<4x12xf32>
    %c0_307 = arith.constant 0 : index
    %c0_308 = arith.constant 0 : index
    %1103 = vector.load %arg12[%c0_307, %c0_308] : memref<12x256xf32, #tpu.memory_space<vmem>>, vector<12x256xf32>
    %cst_309 = arith.constant dense<0.000000e+00> : vector<4x256xf32>
    %1104 = tpu.matmul %1102, %1103, %cst_309 {dimension_numbers = #tpu.dot_dimension_numbers<[1], [0], [0], [1], [0, 0, 1, 1], [], []>} : vector<4x12xf32>, vector<12x256xf32>, vector<4x256xf32> -> vector<4x256xf32>
    %c0_310 = arith.constant 0 : index
    %c0_311 = arith.constant 0 : index
    %1105 = vector.load %arg9[%c0_310, %c0_311] : memref<4x1xf32, #tpu.memory_space<vmem>>, vector<4x1xf32>
    %1106 = vector.broadcast %1105 : vector<4x1xf32> to vector<4x256xf32>
    %1107 = arith.addf %1104, %1106 : vector<4x256xf32>
    %c0_312 = arith.constant 0 : index
    %c0_313 = arith.constant 0 : index
    %c0_314 = arith.constant 0 : index
    %1108 = vector.load %arg10[%c0_312, %c0_313, %c0_314] : memref<1x4x256xf32, #tpu.memory_space<vmem>>, vector<1x4x256xf32>
    %1109 = vector.shape_cast %1108 : vector<1x4x256xf32> to vector<4x256xf32>
    %1110 = vector.shape_cast %1107 : vector<4x256xf32> to vector<1x4x256xf32>
    tpu.vector_store %arg10[%c0_312, %c0_313, %c0_314], %1110 {strides = array<i32>} : memref<1x4x256xf32, #tpu.memory_space<vmem>>, vector<1x4x256xf32>,
    return
  }
  func.func @transform_0(%arg0: i32) -> (i32, i32, i32) {
    %c0_i32 = arith.constant 0 : i32
    %c0_i32_0 = arith.constant 0 : i32
    %c0_i32_1 = arith.constant 0 : i32
    return %arg0, %c0_i32, %c0_i32_0 : i32, i32, i32
  }
  func.func @transform_1(%arg0: i32) -> (i32, i32) {
    %c0_i32 = arith.constant 0 : i32
    %c0_i32_0 = arith.constant 0 : i32
    %c0_i32_1 = arith.constant 0 : i32
    return %c0_i32, %c0_i32_0 : i32, i32
  }
  func.func @transform_2(%arg0: i32) -> (i32, i32) {
    %c0_i32 = arith.constant 0 : i32
    %c0_i32_0 = arith.constant 0 : i32
    %c0_i32_1 = arith.constant 0 : i32
    return %c0_i32, %c0_i32_0 : i32, i32
  }
  func.func @transform_3(%arg0: i32) -> (i32, i32) {
    %c0_i32 = arith.constant 0 : i32
    %c0_i32_0 = arith.constant 0 : i32
    %c0_i32_1 = arith.constant 0 : i32
    return %c0_i32, %c0_i32_0 : i32, i32
  }
  func.func @transform_4(%arg0: i32) -> (i32, i32) {
    %c0_i32 = arith.constant 0 : i32
    %c0_i32_0 = arith.constant 0 : i32
    %c0_i32_1 = arith.constant 0 : i32
    return %c0_i32, %c0_i32_0 : i32, i32
  }
  func.func @transform_5(%arg0: i32) -> (i32, i32) {
    %c0_i32 = arith.constant 0 : i32
    %c0_i32_0 = arith.constant 0 : i32
    %c0_i32_1 = arith.constant 0 : i32
    return %c0_i32, %c0_i32_0 : i32, i32
  }
  func.func @transform_6(%arg0: i32) -> (i32, i32) {
    %c0_i32 = arith.constant 0 : i32
    %c0_i32_0 = arith.constant 0 : i32
    %c0_i32_1 = arith.constant 0 : i32
    return %c0_i32, %c0_i32_0 : i32, i32
  }
  func.func @transform_7(%arg0: i32) -> (i32, i32) {
    %c0_i32 = arith.constant 0 : i32
    %c0_i32_0 = arith.constant 0 : i32
    %c0_i32_1 = arith.constant 0 : i32
    return %c0_i32, %c0_i32_0 : i32, i32
  }
  func.func @transform_8(%arg0: i32) -> (i32, i32) {
    %c0_i32 = arith.constant 0 : i32
    %c0_i32_0 = arith.constant 0 : i32
    %c0_i32_1 = arith.constant 0 : i32
    return %c0_i32, %c0_i32_0 : i32, i32
  }
  func.func @transform_9(%arg0: i32) -> (i32, i32, i32) {
    %c0_i32 = arith.constant 0 : i32
    %c0_i32_0 = arith.constant 0 : i32
    %c0_i32_1 = arith.constant 0 : i32
    return %arg0, %c0_i32, %c0_i32_0 : i32, i32, i32
  }
}

</mosaic_0001>

<llo_original>
// kernel: tpu_custom_call.1
$region0: #{tpu_custom_call.1}
  #allocation0 [shape = 'u32[]', space=smem, size = 0x4, offset = 0x4, fixed_abs, tag = 'smem constant byte address 0x4 - core index']
  #allocation1 [shape = 'u32[144,128]{1,0:T(1,128)}', space=vmem, size = 0x12000, scoped, tag = 'internal scratch']
  #allocation2 [shape = 'f32[12,256]{1,0:T(8,128)}', space=vmem, size = 0x4000, scoped, tag = 'scratch operand']
  #allocation3 [shape = 'f32[12,256]{1,0:T(8,128)}', space=vmem, size = 0x4000, scoped, tag = 'scratch operand']
  %s0 = inlined_call_operand.vmem [shape: f32[2,4,256], index: 0, kind: input, shape index: {}]
  %s1 = inlined_call_operand.vmem [shape: s32[1,256], index: 1, kind: input, shape index: {}]
  %s2 = inlined_call_operand.vmem [shape: s32[1,256], index: 2, kind: input, shape index: {}]
  %s3 = inlined_call_operand.vmem [shape: f32[12,4], index: 3, kind: input, shape index: {}]
  %s4 = inlined_call_operand.vmem [shape: f32[12,1], index: 4, kind: input, shape index: {}]
  %s5 = inlined_call_operand.vmem [shape: f32[4,147], index: 5, kind: input, shape index: {}]
  %s6 = inlined_call_operand.vmem [shape: f32[4,3], index: 6, kind: input, shape index: {}]
  %s7 = inlined_call_operand.vmem [shape: f32[4,12], index: 7, kind: input, shape index: {}]
  %s8 = inlined_call_operand.vmem [shape: f32[4,1], index: 8, kind: input, shape index: {}]
  %s9 = inlined_call_operand.hbm [shape: f32[2,4,256], index: 9, kind: output, shape index: {}]
  %s10 = sld [smem:[#allocation0]]
  $region69: #{tpu_custom_call.1} parent=0
    _
  %s12 = ssub.s32 1, %s10
  %s13 = scalar_select 0, %s12, %s10
  $region1: #{tpu_custom_call.1} parent=0
    #allocation4 [shape = 'u8[8192]{0}', space=vmem, size = 0x2000, scoped, tag = 'output window, operand 0']
    #allocation5 [shape = 's32[2]{0}', space=sflag, size = 0x8, scoped, tag = 'scoped memory for tpu_custom_call.1']
    %14 = vsyncpa [#allocation5], 0
    %s15 = scalar_lea.sflag [#allocation5], 1
    %16 = vsyncpa %s15, 0
    loop: start=0, step=1, limit=4
    $region2: #{tpu_custom_call.1} parent=1 // loop_pre_header
      _
    $region3: #{tpu_custom_call.1} parent=1 // loop_header
      %s18 = sphi 0, %s22
      %p19 = scmp.ge.s32.totalorder %s18, 4
      %s28 = sphi 0, %s30
      %s31 = sphi 0, %s28
      %s32 = sphi 0, %s31
      %s48 = sphi 0, %s32
      %s52 = sphi 0, %s52
      %s54 = sphi 0, %s52
      %s55 = sphi 0, %s54
      %s69 = sphi 0, %s55
      %s73 = sphi 0, %s73
      %s75 = sphi 0, %s73
      %s76 = sphi 0, %s75
      %s90 = sphi 0, %s76
      %s94 = sphi 0, %s94
      %s96 = sphi 0, %s94
      %s97 = sphi 0, %s96
      %s111 = sphi 0, %s97
      %s115 = sphi 0, %s115
      %s117 = sphi 0, %s115
      %s118 = sphi 0, %s117
      %s132 = sphi 0, %s118
      %s136 = sphi 0, %s136
      %s138 = sphi 0, %s136
      %s139 = sphi 0, %s138
      %s153 = sphi 0, %s139
      %s157 = sphi 0, %s157
      %s159 = sphi 0, %s157
      %s160 = sphi 0, %s159
      %s174 = sphi 0, %s160
      %s178 = sphi 0, %s178
      %s180 = sphi 0, %s178
      %s181 = sphi 0, %s180
      %s195 = sphi 0, %s181
      %s199 = sphi 0, %s199
      %s201 = sphi 0, %s199
      %s202 = sphi 0, %s201
      %s216 = sphi 0, %s202
      %s222 = sphi 0, %s224
      %s225 = sphi 0, %s222
      %s226 = sphi 0, %s225
      %s242 = sphi 0, %s226
    $region4: #{tpu_custom_call.1} parent=1 // loop_header_branch
      %21 = sbr.rel (%p19) target = $region8
    $region5: #{tpu_custom_call.1} parent=1 // loop_body
      %s23 = ssub.s32 %s18, 1
      %s24 = ssub.s32 %s18, 2
      %s25 = sadd.s32 %s18, 1
      %s26 = ssub.s32 %s18, %s25
      %p27 = scmp.eq.s32.totalorder %s26, 0
      %s29 = sadd.s32 %s28, 1
      %s30 = scalar_select %p27, %s28, %s29
      %p33 = pneg %p27
      %p34 = scmp.eq.s32.totalorder %s18, 1
      %p35 = por %p33, %p34
      %p36 = scmp.ne.s32.totalorder %s28, %s31
      %p37 = scmp.eq.s32.totalorder %s18, 0
      %p38 = por %p36, %p37
      %p39 = scmp.ne.s32.totalorder %s28, %s31
      %p40 = scmp.eq.s32.totalorder %s23, 1
      %p41 = por %p39, %p40
      %p42 = scmp.ne.s32.totalorder %s31, %s32
      %p43 = scmp.eq.s32.totalorder %s23, 0
      %p44 = por %p42, %p43
      %p45 = scmp.ne.s32.totalorder %s31, %s32
      %p46 = scmp.eq.s32.totalorder %s24, 1
      %p47 = por %p45, %p46
      %p49 = scmp.ne.s32.totalorder %s32, %s48
      %p50 = scmp.eq.s32.totalorder %s24, 0
      %p51 = por %p49, %p50
      %s53 = sadd.s32 %s52, 1
      %p56 = scmp.eq.s32.totalorder %s18, 1
      %p57 = scmp.ne.s32.totalorder %s52, %s54
      %p58 = scmp.eq.s32.totalorder %s18, 0
      %p59 = por %p57, %p58
      %p60 = scmp.ne.s32.totalorder %s52, %s54
      %p61 = scmp.eq.s32.totalorder %s23, 1
      %p62 = por %p60, %p61
      %p63 = scmp.ne.s32.totalorder %s54, %s55
      %p64 = scmp.eq.s32.totalorder %s23, 0
      %p65 = por %p63, %p64
      %p66 = scmp.ne.s32.totalorder %s54, %s55
      %p67 = scmp.eq.s32.totalorder %s24, 1
      %p68 = por %p66, %p67
      %p70 = scmp.ne.s32.totalorder %s55, %s69
      %p71 = scmp.eq.s32.totalorder %s24, 0
      %p72 = por %p70, %p71
      %s74 = sadd.s32 %s73, 1
      %p77 = scmp.eq.s32.totalorder %s18, 1
      %p78 = scmp.ne.s32.totalorder %s73, %s75
      %p79 = scmp.eq.s32.totalorder %s18, 0
      %p80 = por %p78, %p79
      %p81 = scmp.ne.s32.totalorder %s73, %s75
      %p82 = scmp.eq.s32.totalorder %s23, 1
      %p83 = por %p81, %p82
      %p84 = scmp.ne.s32.totalorder %s75, %s76
      %p85 = scmp.eq.s32.totalorder %s23, 0
      %p86 = por %p84, %p85
      %p87 = scmp.ne.s32.totalorder %s75, %s76
      %p88 = scmp.eq.s32.totalorder %s24, 1
      %p89 = por %p87, %p88
      %p91 = scmp.ne.s32.totalorder %s76, %s90
      %p92 = scmp.eq.s32.totalorder %s24, 0
      %p93 = por %p91, %p92
      %s95 = sadd.s32 %s94, 1
      %p98 = scmp.eq.s32.totalorder %s18, 1
      %p99 = scmp.ne.s32.totalorder %s94, %s96
      %p100 = scmp.eq.s32.totalorder %s18, 0
      %p101 = por %p99, %p100
      %p102 = scmp.ne.s32.totalorder %s94, %s96
      %p103 = scmp.eq.s32.totalorder %s23, 1
      %p104 = por %p102, %p103
      %p105 = scmp.ne.s32.totalorder %s96, %s97
      %p106 = scmp.eq.s32.totalorder %s23, 0
      %p107 = por %p105, %p106
      %p108 = scmp.ne.s32.totalorder %s96, %s97
      %p109 = scmp.eq.s32.totalorder %s24, 1
      %p110 = por %p108, %p109
      %p112 = scmp.ne.s32.totalorder %s97, %s111
      %p113 = scmp.eq.s32.totalorder %s24, 0
      %p114 = por %p112, %p113
      %s116 = sadd.s32 %s115, 1
      %p119 = scmp.eq.s32.totalorder %s18, 1
      %p120 = scmp.ne.s32.totalorder %s115, %s117
      %p121 = scmp.eq.s32.totalorder %s18, 0
      %p122 = por %p120, %p121
      %p123 = scmp.ne.s32.totalorder %s115, %s117
      %p124 = scmp.eq.s32.totalorder %s23, 1
      %p125 = por %p123, %p124
      %p126 = scmp.ne.s32.totalorder %s117, %s118
      %p127 = scmp.eq.s32.totalorder %s23, 0
      %p128 = por %p126, %p127
      %p129 = scmp.ne.s32.totalorder %s117, %s118
      %p130 = scmp.eq.s32.totalorder %s24, 1
      %p131 = por %p129, %p130
      %p133 = scmp.ne.s32.totalorder %s118, %s132
      %p134 = scmp.eq.s32.totalorder %s24, 0
      %p135 = por %p133, %p134
      %s137 = sadd.s32 %s136, 1
      %p140 = scmp.eq.s32.totalorder %s18, 1
      %p141 = scmp.ne.s32.totalorder %s136, %s138
      %p142 = scmp.eq.s32.totalorder %s18, 0
      %p143 = por %p141, %p142
      %p144 = scmp.ne.s32.totalorder %s136, %s138
      %p145 = scmp.eq.s32.totalorder %s23, 1
      %p146 = por %p144, %p145
      %p147 = scmp.ne.s32.totalorder %s138, %s139
      %p148 = scmp.eq.s32.totalorder %s23, 0
      %p149 = por %p147, %p148
      %p150 = scmp.ne.s32.totalorder %s138, %s139
      %p151 = scmp.eq.s32.totalorder %s24, 1
      %p152 = por %p150, %p151
      %p154 = scmp.ne.s32.totalorder %s139, %s153
      %p155 = scmp.eq.s32.totalorder %s24, 0
      %p156 = por %p154, %p155
      %s158 = sadd.s32 %s157, 1
      %p161 = scmp.eq.s32.totalorder %s18, 1
      %p162 = scmp.ne.s32.totalorder %s157, %s159
      %p163 = scmp.eq.s32.totalorder %s18, 0
      %p164 = por %p162, %p163
      %p165 = scmp.ne.s32.totalorder %s157, %s159
      %p166 = scmp.eq.s32.totalorder %s23, 1
      %p167 = por %p165, %p166
      %p168 = scmp.ne.s32.totalorder %s159, %s160
      %p169 = scmp.eq.s32.totalorder %s23, 0
      %p170 = por %p168, %p169
      %p171 = scmp.ne.s32.totalorder %s159, %s160
      %p172 = scmp.eq.s32.totalorder %s24, 1
      %p173 = por %p171, %p172
      %p175 = scmp.ne.s32.totalorder %s160, %s174
      %p176 = scmp.eq.s32.totalorder %s24, 0
      %p177 = por %p175, %p176
      %s179 = sadd.s32 %s178, 1
      %p182 = scmp.eq.s32.totalorder %s18, 1
      %p183 = scmp.ne.s32.totalorder %s178, %s180
      %p184 = scmp.eq.s32.totalorder %s18, 0
      %p185 = por %p183, %p184
      %p186 = scmp.ne.s32.totalorder %s178, %s180
      %p187 = scmp.eq.s32.totalorder %s23, 1
      %p188 = por %p186, %p187
      %p189 = scmp.ne.s32.totalorder %s180, %s181
      %p190 = scmp.eq.s32.totalorder %s23, 0
      %p191 = por %p189, %p190
      %p192 = scmp.ne.s32.totalorder %s180, %s181
      %p193 = scmp.eq.s32.totalorder %s24, 1
      %p194 = por %p192, %p193
      %p196 = scmp.ne.s32.totalorder %s181, %s195
      %p197 = scmp.eq.s32.totalorder %s24, 0
      %p198 = por %p196, %p197
      %s200 = sadd.s32 %s199, 1
      %p203 = scmp.eq.s32.totalorder %s18, 1
      %p204 = scmp.ne.s32.totalorder %s199, %s201
      %p205 = scmp.eq.s32.totalorder %s18, 0
      %p206 = por %p204, %p205
      %p207 = scmp.ne.s32.totalorder %s199, %s201
      %p208 = scmp.eq.s32.totalorder %s23, 1
      %p209 = por %p207, %p208
      %p210 = scmp.ne.s32.totalorder %s201, %s202
      %p211 = scmp.eq.s32.totalorder %s23, 0
      %p212 = por %p210, %p211
      %p213 = scmp.ne.s32.totalorder %s201, %s202
      %p214 = scmp.eq.s32.totalorder %s24, 1
      %p215 = por %p213, %p214
      %p217 = scmp.ne.s32.totalorder %s202, %s216
      %p218 = scmp.eq.s32.totalorder %s24, 0
      %p219 = por %p217, %p218
      %s220 = ssub.s32 %s18, %s25
      %p221 = scmp.eq.s32.totalorder %s220, 0
      %s223 = sadd.s32 %s222, 1
      %s224 = scalar_select %p221, %s222, %s223
      %p227 = pneg %p221
      %p228 = scmp.eq.s32.totalorder %s18, 1
      %p229 = por %p227, %p228
      %p230 = scmp.ne.s32.totalorder %s222, %s225
      %p231 = scmp.eq.s32.totalorder %s18, 0
      %p232 = por %p230, %p231
      %p233 = scmp.ne.s32.totalorder %s222, %s225
      %p234 = scmp.eq.s32.totalorder %s23, 1
      %p235 = por %p233, %p234
      %p236 = scmp.ne.s32.totalorder %s225, %s226
      %p237 = scmp.eq.s32.totalorder %s23, 0
      %p238 = por %p236, %p237
      %p239 = scmp.ne.s32.totalorder %s225, %s226
      %p240 = scmp.eq.s32.totalorder %s24, 1
      %p241 = por %p239, %p240
      %p243 = scmp.ne.s32.totalorder %s226, %s242
      %p244 = scmp.eq.s32.totalorder %s24, 0
      %p245 = por %p243, %p244
      %p246 = scmp.le.s32.totalorder 1, %s18
      %p247 = scmp.lt.s32.totalorder %s18, 3
      %p248 = pnand %p246, %p247
      %p249 = pneg %p248
      // Predicated region
      $region9: #{tpu_custom_call.1} parent=5 // pred_check
        _
      $region10: #{tpu_custom_call.1} parent=5 // pred_check_branch
        %251 = sbr.rel (%p248) target = $region12
      $region11: #{tpu_custom_call.1} parent=5 // pred_region
        %s252 = ssub.s32 %s18, 1
        // Predicated region
        $region13: #{tpu_custom_call.1} parent=11 // pred_check
          %p253 = pneg %p65
        $region14: #{tpu_custom_call.1} parent=11 // pred_check_branch
          %255 = sbr.rel (%p253) target = $region16
        $region15: #{tpu_custom_call.1} parent=11 // pred_region
          _
        $region16: #{tpu_custom_call.1} parent=11 // pred_fallthru
          _
        // Predicated region
        $region17: #{tpu_custom_call.1} parent=11 // pred_check
          %p256 = pneg %p86
        $region18: #{tpu_custom_call.1} parent=11 // pred_check_branch
          %258 = sbr.rel (%p256) target = $region20
        $region19: #{tpu_custom_call.1} parent=11 // pred_region
          _
        $region20: #{tpu_custom_call.1} parent=11 // pred_fallthru
          _
        // Predicated region
        $region21: #{tpu_custom_call.1} parent=11 // pred_check
          %p259 = pneg %p107
        $region22: #{tpu_custom_call.1} parent=11 // pred_check_branch
          %261 = sbr.rel (%p259) target = $region24
        $region23: #{tpu_custom_call.1} parent=11 // pred_region
          _
        $region24: #{tpu_custom_call.1} parent=11 // pred_fallthru
          _
        // Predicated region
        $region25: #{tpu_custom_call.1} parent=11 // pred_check
          %p262 = pneg %p128
        $region26: #{tpu_custom_call.1} parent=11 // pred_check_branch
          %264 = sbr.rel (%p262) target = $region28
        $region27: #{tpu_custom_call.1} parent=11 // pred_region
          _
        $region28: #{tpu_custom_call.1} parent=11 // pred_fallthru
          _
        // Predicated region
        $region29: #{tpu_custom_call.1} parent=11 // pred_check
          %p265 = pneg %p149
        $region30: #{tpu_custom_call.1} parent=11 // pred_check_branch
          %267 = sbr.rel (%p265) target = $region32
        $region31: #{tpu_custom_call.1} parent=11 // pred_region
          _
        $region32: #{tpu_custom_call.1} parent=11 // pred_fallthru
          _
        // Predicated region
        $region33: #{tpu_custom_call.1} parent=11 // pred_check
          %p268 = pneg %p170
        $region34: #{tpu_custom_call.1} parent=11 // pred_check_branch
          %270 = sbr.rel (%p268) target = $region36
        $region35: #{tpu_custom_call.1} parent=11 // pred_region
          _
        $region36: #{tpu_custom_call.1} parent=11 // pred_fallthru
          _
        // Predicated region
        $region37: #{tpu_custom_call.1} parent=11 // pred_check
          %p271 = pneg %p191
        $region38: #{tpu_custom_call.1} parent=11 // pred_check_branch
          %273 = sbr.rel (%p271) target = $region40
        $region39: #{tpu_custom_call.1} parent=11 // pred_region
          _
        $region40: #{tpu_custom_call.1} parent=11 // pred_fallthru
          _
        // Predicated region
        $region41: #{tpu_custom_call.1} parent=11 // pred_check
          %p274 = pneg %p212
        $region42: #{tpu_custom_call.1} parent=11 // pred_check_branch
          %276 = sbr.rel (%p274) target = $region44
        $region43: #{tpu_custom_call.1} parent=11 // pred_region
          _
        $region44: #{tpu_custom_call.1} parent=11 // pred_fallthru
          _
      $region12: #{tpu_custom_call.1} parent=5 // pred_fallthru
        _
      %p277 = scmp.lt.s32.totalorder %s18, 2
      // Predicated region
      $region45: #{tpu_custom_call.1} parent=5 // pred_check
        %p278 = pneg %p277
      $region46: #{tpu_custom_call.1} parent=5 // pred_check_branch
        %280 = sbr.rel (%p278) target = $region48
      $region47: #{tpu_custom_call.1} parent=5 // pred_region
        // Predicated region
        $region49: #{tpu_custom_call.1} parent=47 // pred_check
          %p281 = pneg %p38
        $region50: #{tpu_custom_call.1} parent=47 // pred_check_branch
          %283 = sbr.rel (%p281) target = $region52
        $region51: #{tpu_custom_call.1} parent=47 // pred_region
          %p284 = scmp.lt.s32.totalorder %s18, 1
          %s285 = scalar_select %p284, %s18, 1
          %s286 = smul.addr %s285, 2
          %s287 = smul.addr %s286, 4
          %s288 = scalar_lea.vmem %s0, %s287
        $region52: #{tpu_custom_call.1} parent=47 // pred_fallthru
          _
      $region48: #{tpu_custom_call.1} parent=5 // pred_fallthru
        _
      %p289 = scmp.le.s32.totalorder 1, %s18
      %p290 = scmp.lt.s32.totalorder %s18, 3
      %p291 = pnand %p289, %p290
      %p292 = pneg %p291
      // Predicated region
      $region53: #{tpu_custom_call.1} parent=5 // pred_check
        _
      $region54: #{tpu_custom_call.1} parent=5 // pred_check_branch
        %294 = sbr.rel (%p291) target = $region56
      $region55: #{tpu_custom_call.1} parent=5 // pred_region
        %s295 = ssub.s32 %s18, 1
        %p296 = scmp.lt.s32.totalorder %s23, 1
        %s297 = scalar_select %p296, %s23, 1
        %s298 = smul.addr %s297, 2
        %s299 = smul.addr %s298, 4
        %s300 = scalar_lea.vmem %s0, %s299
        %p301 = pneg %p44
        %p302 = pneg %p41
        %p303 = pneg %p65
        %p304 = pneg %p62
        %p305 = pneg %p86
        %p306 = pneg %p83
        %p307 = pneg %p107
        %p308 = pneg %p104
        %p309 = pneg %p128
        %p310 = pneg %p125
        %p311 = pneg %p149
        %p312 = pneg %p146
        %p313 = pneg %p170
        %p314 = pneg %p167
        %p315 = pneg %p191
        %p316 = pneg %p188
        %p317 = pneg %p212
        %p318 = pneg %p209
        %p319 = pneg %p238
        %p320 = pneg %p235
        %s321 = sand.u32 %s225, 1
        %s322 = scalar_lea.sflag [#allocation5], %s321
        %s323 = sand.u32 %s225, 1
        %s324 = smul.addr %s323, 8
        %s325 = scalar_lea.vmem [#allocation4], %s324
        %p326 = scmp.lt.s32.totalorder %s23, 1
        %s327 = scalar_select %p326, %s23, 1
        %s328 = smul.addr %s327, 2
        %s329 = smul.addr %s328, 4
        %s330 = scalar_lea.vmem %s0, %s329
        %v331 = vld [vmem:[%s330] sm:$0xff]
        %v332 = vld [vmem:[%s1] sm:$0x3]
        %v333 = vld [vmem:[%s2] sm:$0x3]
        %v334 = vld [vmem:[%s3] sm:$0xff]
        %v335 = vld [vmem:[%s3 + $0x8] sm:$0xf]
        %v336 = vld [vmem:[%s4] sm:$0xff]
        %v337 = vld [vmem:[%s4 + $0x8] sm:$0xf]
        %339 = vset.pattern.permute.xlu0 0
        %340 = vperm.xlu0 %339, %v336
        %v341 = vpop.permute.xlu0 %340
        %344 = vset.pattern.permute.xlu0 0
        %345 = vperm.xlu0 %344, %v337
        %v346 = vpop.permute.xlu0 %345
        %v349 = vcombine.high %v331, %v331
        %vm350 = vcmask 31744
        %v352 = vsel %vm350, %v334, 0
        %v355 = vsel %vm350, %v335, 0
        %vm357 = vcmask 1043456
        %v358 = vsel %vm357, %v331, 0
        %v360 = vsel %vm357, %v349, 0
        %362 = vmatprep.subr.mxu0 %v360
        %363 = vmatpush1.msra.mxu0 %v358
        %364 = vmatprep.subr.mxu0 0.0
        %365 = vmatpush1.msra.mxu0 0.0
        %366 = vmatprep.subr.mxu0 0.0
        %367 = vmatpush1.msra.mxu0 0.0
        %368 = vmatprep.subr.mxu0 0.0
        %369 = vmatpush1.msra.mxu0 0.0
        %370 = vmatprep.subr.mxu0 0.0
        %371 = vmatpush1.msra.mxu0 0.0
        %372 = vmatprep.subr.mxu0 0.0
        %373 = vmatpush1.msra.mxu0 0.0
        %374 = vmatprep.subr.mxu0 0.0
        %375 = vmatpush1.msra.mxu0 0.0
        %376 = vmatprep.subr.mxu0 0.0
        %377 = vmatpush1.msra.mxu0 0.0
        %378 = vmatprep.subr.mxu0 0.0
        %379 = vmatpush1.msra.mxu0 0.0
        %380 = vmatprep.subr.mxu0 0.0
        %381 = vmatpush1.msra.mxu0 0.0
        %382 = vmatprep.subr.mxu0 0.0
        %383 = vmatpush1.msra.mxu0 0.0
        %384 = vmatprep.subr.mxu0 0.0
        %385 = vmatpush1.msra.mxu0 0.0
        %386 = vmatprep.subr.mxu0 0.0
        %387 = vmatpush1.msra.mxu0 0.0
        %388 = vmatprep.subr.mxu0 0.0
        %389 = vmatpush1.msra.mxu0 0.0
        %390 = vmatprep.subr.mxu0 0.0
        %391 = vmatpush1.msra.mxu0 0.0
        %392 = vmatprep.subr.mxu0 0.0
        %393 = vmatpush1.msra.mxu0 0.0
        %394 = vmatprep.subr.mxu0 0.0
        %395 = vmatpush1.msra.mxu0 0.0
        %396 = vmatprep.subr.mxu0 0.0
        %397 = vmatpush1.msra.mxu0 0.0
        %398 = vmatprep.subr.mxu0 0.0
        %399 = vmatpush1.msra.mxu0 0.0
        %400 = vmatprep.subr.mxu0 0.0
        %401 = vmatpush1.msra.mxu0 0.0
        %402 = vmatprep.subr.mxu0 0.0
        %403 = vmatpush1.msra.mxu0 0.0
        %404 = vmatprep.subr.mxu0 0.0
        %405 = vmatpush1.msra.mxu0 0.0
        %406 = vmatprep.subr.mxu0 0.0
        %407 = vmatpush1.msra.mxu0 0.0
        %408 = vmatprep.subr.mxu0 0.0
        %409 = vmatpush1.msra.mxu0 0.0
        %410 = vmatprep.subr.mxu0 0.0
        %411 = vmatpush1.msra.mxu0 0.0
        %412 = vmatprep.subr.mxu0 0.0
        %413 = vmatpush1.msra.mxu0 0.0
        %414 = vmatprep.subr.mxu0 0.0
        %415 = vmatpush1.msra.mxu0 0.0
        %416 = vmatprep.subr.mxu0 0.0
        %417 = vmatpush1.msra.mxu0 0.0
        %418 = vmatprep.subr.mxu0 0.0
        %419 = vmatpush1.msra.mxu0 0.0
        %420 = vmatprep.subr.mxu0 0.0
        %421 = vmatpush1.msra.mxu0 0.0
        %422 = vmatprep.subr.mxu0 0.0
        %423 = vmatpush1.msra.mxu0 0.0
        %424 = vmatprep.subr.mxu0 0.0
        %425 = vmatpush1.msra.mxu0 0.0
        %426 = vmatprep.mubr.f32.mxu0 0.0
        %427 = vmatmul.mubr.f32.gmra.mrb[0].mxu0 %v352
        %v428 = vpop.f32.mrb[0].mxu0
        %v429 = vadd.f32 %v341, %v428
        %v430 = vpop.f32.mrb[0].mxu0
        %v431 = vadd.f32 %v341, %v430
        %432 = vmatprep.mubr.f32.mxu0 0.0
        %433 = vmatmul.mubr.f32.gmra.mrb[0].mxu0 %v355
        %v434 = vpop.f32.mrb[0].mxu0
        %v435 = vadd.f32 %v346, %v434
        %v436 = vpop.f32.mrb[0].mxu0
        %v437 = vadd.f32 %v346, %v436
        %438 = vdwg.mxu0
        %439 = vst [vmem:[#allocation2] sm:$0xff] %v429
        %440 = vst [vmem:[#allocation2 + $0x8] sm:$0xff] %v431
        %441 = vst [vmem:[#allocation2 + $0x10] sm:$0xf] %v435
        %442 = vst [vmem:[#allocation2 + $0x18] sm:$0xf] %v437
        %v443 = vld [vmem:[#allocation2] sm:$0xf]
        %v444 = vld [vmem:[#allocation2 + $0x8] sm:$0xf]
        %vm445 = vcmp.ge.s32.totalorder %v332, 6
        %vm446 = vcmp.ge.s32.totalorder %v332, 4
        %vm447 = vcmp.ge.s32.totalorder %v332, 2
        %vm448 = vcmp.lt.s32.totalorder %v332, 14
        %vm449 = vcmp.lt.s32.totalorder %v332, 12
        %vm450 = vcmp.lt.s32.totalorder %v332, 10
        %vm451 = vcmp.ge.s32.totalorder %v333, 6
        %vm452 = vcmp.ge.s32.totalorder %v333, 4
        %vm453 = vcmp.ge.s32.totalorder %v333, 2
        %vm454 = vcmp.lt.s32.totalorder %v333, 14
        %vm455 = vcmp.lt.s32.totalorder %v333, 12
        %vm456 = vcmp.lt.s32.totalorder %v333, 10
        %457 = vrot.lane.b32.xlu0 %v443, 102
        %v458 = vpop.permute.xlu0 %457
        %459 = vrot.lane.b32.xlu0 %v444, 102
        %v460 = vpop.permute.xlu0 %459
        %v461 = vlaneseq
        %v462 = vand.u32 %v461, 127
        %vm463 = vcmp.lt.s32.totalorder %v462, 102
        %v464 = vsel %vm463, %v458, %v460
        %v465 = vsel %vm463, %v460, %v458
        %vm466 = vmand %vm445, %vm451
        %v467 = vsel %vm466, 1, 0
        %v468 = vlaneseq
        %v469 = vshrl.u32 %v468, 7
        %v470 = vsub.s32 0, %v469
        %v471 = vrot.slane %v467, %v470
        %v472 = vlaneseq
        %v473 = vshrl.u32 %v472, 7
        %v474 = vsub.s32 1, %v473
        %v475 = vrot.slane %v467, %v474
        %vm476 = vcmp.eq.s32.totalorder %v471, 1
        %vm477 = vcmp.eq.s32.totalorder %v475, 1
        %v478 = vsel %vm476, %v465, 0.0
        %v479 = vsel %vm477, %v464, 0.0
        %v480 = vld [vmem:[%s5] sm:$0xf]
        %482 = vset.pattern.permute.xlu0 0
        %483 = vperm.xlu0 %482, %v480
        %v484 = vpop.permute.xlu0 %483
        %v487 = vunpack.c.l.s4 839922192
        %v488 = vunpack.c.0.s8 %v487
        %v489 = vlaneseq
        %v490 = vshrl.u32 %v489, 7
        %v491 = vsub.s32 %v488, %v490
        %v492 = vrot.slane %v484, %v491
        %v494 = vcombine.high %v492, %v492
        %v496 = vmul.f32 %v478, %v492
        %v497 = vmul.f32 %v479, %v494
        %498 = vrot.lane.b32.xlu0 %v443, 100
        %v499 = vpop.permute.xlu0 %498
        %500 = vrot.lane.b32.xlu0 %v444, 100
        %v501 = vpop.permute.xlu0 %500
        %vm502 = vcmp.lt.s32.totalorder %v462, 100
        %v503 = vsel %vm502, %v499, %v501
        %v504 = vsel %vm502, %v501, %v499
        %vm505 = vmand %vm445, %vm452
        %v506 = vsel %vm505, 1, 0
        %v507 = vlaneseq
        %v508 = vshrl.u32 %v507, 7
        %v509 = vsub.s32 0, %v508
        %v510 = vrot.slane %v506, %v509
        %v511 = vlaneseq
        %v512 = vshrl.u32 %v511, 7
        %v513 = vsub.s32 1, %v512
        %v514 = vrot.slane %v506, %v513
        %vm515 = vcmp.eq.s32.totalorder %v510, 1
        %vm516 = vcmp.eq.s32.totalorder %v514, 1
        %v517 = vsel %vm515, %v504, 0.0
        %v518 = vsel %vm516, %v503, 0.0
        %v519 = vld [vmem:[%s5] sm:$0xf]
        %521 = vset.pattern.permute.xlu0 1
        %522 = vperm.xlu0 %521, %v519
        %v523 = vpop.permute.xlu0 %522
        %v526 = vunpack.c.l.s4 839922192
        %v527 = vunpack.c.0.s8 %v526
        %v528 = vlaneseq
        %v529 = vshrl.u32 %v528, 7
        %v530 = vsub.s32 %v527, %v529
        %v531 = vrot.slane %v523, %v530
        %v533 = vcombine.high %v531, %v531
        %v535 = vmul.f32 %v517, %v531
        %v536 = vmul.f32 %v518, %v533
        %537 = vrot.lane.b32.xlu0 %v443, 98
        %v538 = vpop.permute.xlu0 %537
        %539 = vrot.lane.b32.xlu0 %v444, 98
        %v540 = vpop.permute.xlu0 %539
        %vm541 = vcmp.lt.s32.totalorder %v462, 98
        %v542 = vsel %vm541, %v538, %v540
        %v543 = vsel %vm541, %v540, %v538
        %vm544 = vmand %vm445, %vm453
        %v545 = vsel %vm544, 1, 0
        %v546 = vlaneseq
        %v547 = vshrl.u32 %v546, 7
        %v548 = vsub.s32 0, %v547
        %v549 = vrot.slane %v545, %v548
        %v550 = vlaneseq
        %v551 = vshrl.u32 %v550, 7
        %v552 = vsub.s32 1, %v551
        %v553 = vrot.slane %v545, %v552
        %vm554 = vcmp.eq.s32.totalorder %v549, 1
        %vm555 = vcmp.eq.s32.totalorder %v553, 1
        %v556 = vsel %vm554, %v543, 0.0
        %v557 = vsel %vm555, %v542, 0.0
        %v558 = vld [vmem:[%s5] sm:$0xf]
        %560 = vset.pattern.permute.xlu0 2
        %561 = vperm.xlu0 %560, %v558
        %v562 = vpop.permute.xlu0 %561
        %v565 = vunpack.c.l.s4 839922192
        %v566 = vunpack.c.0.s8 %v565
        %v567 = vlaneseq
        %v568 = vshrl.u32 %v567, 7
        %v569 = vsub.s32 %v566, %v568
        %v570 = vrot.slane %v562, %v569
        %v572 = vcombine.high %v570, %v570
        %v574 = vmul.f32 %v556, %v570
        %v575 = vmul.f32 %v557, %v572
        %576 = vrot.lane.b32.xlu0 %v443, 96
        %v577 = vpop.permute.xlu0 %576
        %578 = vrot.lane.b32.xlu0 %v444, 96
        %v579 = vpop.permute.xlu0 %578
        %vm580 = vcmp.lt.s32.totalorder %v462, 96
        %v581 = vsel %vm580, %v577, %v579
        %v582 = vsel %vm580, %v579, %v577
        %v583 = vsel %vm445, 1, 0
        %v584 = vlaneseq
        %v585 = vshrl.u32 %v584, 7
        %v586 = vsub.s32 0, %v585
        %v587 = vrot.slane %v583, %v586
        %v588 = vlaneseq
        %v589 = vshrl.u32 %v588, 7
        %v590 = vsub.s32 1, %v589
        %v591 = vrot.slane %v583, %v590
        %vm592 = vcmp.eq.s32.totalorder %v587, 1
        %vm593 = vcmp.eq.s32.totalorder %v591, 1
        %v594 = vsel %vm592, %v582, 0.0
        %v595 = vsel %vm593, %v581, 0.0
        %v596 = vld [vmem:[%s5] sm:$0xf]
        %598 = vset.pattern.permute.xlu0 3
        %599 = vperm.xlu0 %598, %v596
        %v600 = vpop.permute.xlu0 %599
        %v603 = vunpack.c.l.s4 839922192
        %v604 = vunpack.c.0.s8 %v603
        %v605 = vlaneseq
        %v606 = vshrl.u32 %v605, 7
        %v607 = vsub.s32 %v604, %v606
        %v608 = vrot.slane %v600, %v607
        %v610 = vcombine.high %v608, %v608
        %v612 = vmul.f32 %v594, %v608
        %v613 = vmul.f32 %v595, %v610
        %614 = vrot.lane.b32.xlu0 %v443, 94
        %v615 = vpop.permute.xlu0 %614
        %616 = vrot.lane.b32.xlu0 %v444, 94
        %v617 = vpop.permute.xlu0 %616
        %vm618 = vcmp.lt.s32.totalorder %v462, 94
        %v619 = vsel %vm618, %v615, %v617
        %v620 = vsel %vm618, %v617, %v615
        %vm621 = vmand %vm445, %vm454
        %v622 = vsel %vm621, 1, 0
        %v623 = vlaneseq
        %v624 = vshrl.u32 %v623, 7
        %v625 = vsub.s32 0, %v624
        %v626 = vrot.slane %v622, %v625
        %v627 = vlaneseq
        %v628 = vshrl.u32 %v627, 7
        %v629 = vsub.s32 1, %v628
        %v630 = vrot.slane %v622, %v629
        %vm631 = vcmp.eq.s32.totalorder %v626, 1
        %vm632 = vcmp.eq.s32.totalorder %v630, 1
        %v633 = vsel %vm631, %v620, 0.0
        %v634 = vsel %vm632, %v619, 0.0
        %v635 = vld [vmem:[%s5] sm:$0xf]
        %637 = vset.pattern.permute.xlu0 4
        %638 = vperm.xlu0 %637, %v635
        %v639 = vpop.permute.xlu0 %638
        %v642 = vunpack.c.l.s4 839922192
        %v643 = vunpack.c.0.s8 %v642
        %v644 = vlaneseq
        %v645 = vshrl.u32 %v644, 7
        %v646 = vsub.s32 %v643, %v645
        %v647 = vrot.slane %v639, %v646
        %v649 = vcombine.high %v647, %v647
        %v651 = vmul.f32 %v633, %v647
        %v652 = vmul.f32 %v634, %v649
        %v653 = vadd.f32 %v496, %v651
        %v654 = vadd.f32 %v497, %v652
        %655 = vrot.lane.b32.xlu0 %v443, 92
        %v656 = vpop.permute.xlu0 %655
        %657 = vrot.lane.b32.xlu0 %v444, 92
        %v658 = vpop.permute.xlu0 %657
        %vm659 = vcmp.lt.s32.totalorder %v462, 92
        %v660 = vsel %vm659, %v656, %v658
        %v661 = vsel %vm659, %v658, %v656
        %vm662 = vmand %vm445, %vm455
        %v663 = vsel %vm662, 1, 0
        %v664 = vlaneseq
        %v665 = vshrl.u32 %v664, 7
        %v666 = vsub.s32 0, %v665
        %v667 = vrot.slane %v663, %v666
        %v668 = vlaneseq
        %v669 = vshrl.u32 %v668, 7
        %v670 = vsub.s32 1, %v669
        %v671 = vrot.slane %v663, %v670
        %vm672 = vcmp.eq.s32.totalorder %v667, 1
        %vm673 = vcmp.eq.s32.totalorder %v671, 1
        %v674 = vsel %vm672, %v661, 0.0
        %v675 = vsel %vm673, %v660, 0.0
        %v676 = vld [vmem:[%s5] sm:$0xf]
        %678 = vset.pattern.permute.xlu0 5
        %679 = vperm.xlu0 %678, %v676
        %v680 = vpop.permute.xlu0 %679
        %v683 = vunpack.c.l.s4 839922192
        %v684 = vunpack.c.0.s8 %v683
        %v685 = vlaneseq
        %v686 = vshrl.u32 %v685, 7
        %v687 = vsub.s32 %v684, %v686
        %v688 = vrot.slane %v680, %v687
        %v690 = vcombine.high %v688, %v688
        %v692 = vmul.f32 %v674, %v688
        %v693 = vmul.f32 %v675, %v690
        %v694 = vadd.f32 %v535, %v692
        %v695 = vadd.f32 %v536, %v693
        %696 = vrot.lane.b32.xlu0 %v443, 90
        %v697 = vpop.permute.xlu0 %696
        %698 = vrot.lane.b32.xlu0 %v444, 90
        %v699 = vpop.permute.xlu0 %698
        %vm700 = vcmp.lt.s32.totalorder %v462, 90
        %v701 = vsel %vm700, %v697, %v699
        %v702 = vsel %vm700, %v699, %v697
        %vm703 = vmand %vm445, %vm456
        %v704 = vsel %vm703, 1, 0
        %v705 = vlaneseq
        %v706 = vshrl.u32 %v705, 7
        %v707 = vsub.s32 0, %v706
        %v708 = vrot.slane %v704, %v707
        %v709 = vlaneseq
        %v710 = vshrl.u32 %v709, 7
        %v711 = vsub.s32 1, %v710
        %v712 = vrot.slane %v704, %v711
        %vm713 = vcmp.eq.s32.totalorder %v708, 1
        %vm714 = vcmp.eq.s32.totalorder %v712, 1
        %v715 = vsel %vm713, %v702, 0.0
        %v716 = vsel %vm714, %v701, 0.0
        %v717 = vld [vmem:[%s5] sm:$0xf]
        %719 = vset.pattern.permute.xlu0 6
        %720 = vperm.xlu0 %719, %v717
        %v721 = vpop.permute.xlu0 %720
        %v724 = vunpack.c.l.s4 839922192
        %v725 = vunpack.c.0.s8 %v724
        %v726 = vlaneseq
        %v727 = vshrl.u32 %v726, 7
        %v728 = vsub.s32 %v725, %v727
        %v729 = vrot.slane %v721, %v728
        %v731 = vcombine.high %v729, %v729
        %v733 = vmul.f32 %v715, %v729
        %v734 = vmul.f32 %v716, %v731
        %v735 = vadd.f32 %v574, %v733
        %v736 = vadd.f32 %v575, %v734
        %737 = vrot.lane.b32.xlu0 %v443, 70
        %v738 = vpop.permute.xlu0 %737
        %739 = vrot.lane.b32.xlu0 %v444, 70
        %v740 = vpop.permute.xlu0 %739
        %vm741 = vcmp.lt.s32.totalorder %v462, 70
        %v742 = vsel %vm741, %v738, %v740
        %v743 = vsel %vm741, %v740, %v738
        %vm744 = vmand %vm446, %vm451
        %v745 = vsel %vm744, 1, 0
        %v746 = vlaneseq
        %v747 = vshrl.u32 %v746, 7
        %v748 = vsub.s32 0, %v747
        %v749 = vrot.slane %v745, %v748
        %v750 = vlaneseq
        %v751 = vshrl.u32 %v750, 7
        %v752 = vsub.s32 1, %v751
        %v753 = vrot.slane %v745, %v752
        %vm754 = vcmp.eq.s32.totalorder %v749, 1
        %vm755 = vcmp.eq.s32.totalorder %v753, 1
        %v756 = vsel %vm754, %v743, 0.0
        %v757 = vsel %vm755, %v742, 0.0
        %v758 = vld [vmem:[%s5] sm:$0xf]
        %760 = vset.pattern.permute.xlu0 7
        %761 = vperm.xlu0 %760, %v758
        %v762 = vpop.permute.xlu0 %761
        %v765 = vunpack.c.l.s4 839922192
        %v766 = vunpack.c.0.s8 %v765
        %v767 = vlaneseq
        %v768 = vshrl.u32 %v767, 7
        %v769 = vsub.s32 %v766, %v768
        %v770 = vrot.slane %v762, %v769
        %v772 = vcombine.high %v770, %v770
        %v774 = vmul.f32 %v756, %v770
        %v775 = vmul.f32 %v757, %v772
        %v776 = vadd.f32 %v612, %v774
        %v777 = vadd.f32 %v613, %v775
        %778 = vrot.lane.b32.xlu0 %v443, 68
        %v779 = vpop.permute.xlu0 %778
        %780 = vrot.lane.b32.xlu0 %v444, 68
        %v781 = vpop.permute.xlu0 %780
        %vm782 = vcmp.lt.s32.totalorder %v462, 68
        %v783 = vsel %vm782, %v779, %v781
        %v784 = vsel %vm782, %v781, %v779
        %vm785 = vmand %vm446, %vm452
        %v786 = vsel %vm785, 1, 0
        %v787 = vlaneseq
        %v788 = vshrl.u32 %v787, 7
        %v789 = vsub.s32 0, %v788
        %v790 = vrot.slane %v786, %v789
        %v791 = vlaneseq
        %v792 = vshrl.u32 %v791, 7
        %v793 = vsub.s32 1, %v792
        %v794 = vrot.slane %v786, %v793
        %vm795 = vcmp.eq.s32.totalorder %v790, 1
        %vm796 = vcmp.eq.s32.totalorder %v794, 1
        %v797 = vsel %vm795, %v784, 0.0
        %v798 = vsel %vm796, %v783, 0.0
        %v799 = vld [vmem:[%s5] sm:$0xf]
        %801 = vset.pattern.permute.xlu0 8
        %802 = vperm.xlu0 %801, %v799
        %v803 = vpop.permute.xlu0 %802
        %v806 = vunpack.c.l.s4 839922192
        %v807 = vunpack.c.0.s8 %v806
        %v808 = vlaneseq
        %v809 = vshrl.u32 %v808, 7
        %v810 = vsub.s32 %v807, %v809
        %v811 = vrot.slane %v803, %v810
        %v813 = vcombine.high %v811, %v811
        %v815 = vmul.f32 %v797, %v811
        %v816 = vmul.f32 %v798, %v813
        %v817 = vadd.f32 %v653, %v815
        %v818 = vadd.f32 %v654, %v816
        %819 = vrot.lane.b32.xlu0 %v443, 66
        %v820 = vpop.permute.xlu0 %819
        %821 = vrot.lane.b32.xlu0 %v444, 66
        %v822 = vpop.permute.xlu0 %821
        %vm823 = vcmp.lt.s32.totalorder %v462, 66
        %v824 = vsel %vm823, %v820, %v822
        %v825 = vsel %vm823, %v822, %v820
        %vm826 = vmand %vm446, %vm453
        %v827 = vsel %vm826, 1, 0
        %v828 = vlaneseq
        %v829 = vshrl.u32 %v828, 7
        %v830 = vsub.s32 0, %v829
        %v831 = vrot.slane %v827, %v830
        %v832 = vlaneseq
        %v833 = vshrl.u32 %v832, 7
        %v834 = vsub.s32 1, %v833
        %v835 = vrot.slane %v827, %v834
        %vm836 = vcmp.eq.s32.totalorder %v831, 1
        %vm837 = vcmp.eq.s32.totalorder %v835, 1
        %v838 = vsel %vm836, %v825, 0.0
        %v839 = vsel %vm837, %v824, 0.0
        %v840 = vld [vmem:[%s5] sm:$0xf]
        %842 = vset.pattern.permute.xlu0 9
        %843 = vperm.xlu0 %842, %v840
        %v844 = vpop.permute.xlu0 %843
        %v847 = vunpack.c.l.s4 839922192
        %v848 = vunpack.c.0.s8 %v847
        %v849 = vlaneseq
        %v850 = vshrl.u32 %v849, 7
        %v851 = vsub.s32 %v848, %v850
        %v852 = vrot.slane %v844, %v851
        %v854 = vcombine.high %v852, %v852
        %v856 = vmul.f32 %v838, %v852
        %v857 = vmul.f32 %v839, %v854
        %v858 = vadd.f32 %v694, %v856
        %v859 = vadd.f32 %v695, %v857
        %860 = vrot.lane.b32.xlu0 %v443, 64
        %v861 = vpop.permute.xlu0 %860
        %862 = vrot.lane.b32.xlu0 %v444, 64
        %v863 = vpop.permute.xlu0 %862
        %vm864 = vcmp.lt.s32.totalorder %v462, 64
        %v865 = vsel %vm864, %v861, %v863
        %v866 = vsel %vm864, %v863, %v861
        %v867 = vsel %vm446, 1, 0
        %v868 = vlaneseq
        %v869 = vshrl.u32 %v868, 7
        %v870 = vsub.s32 0, %v869
        %v871 = vrot.slane %v867, %v870
        %v872 = vlaneseq
        %v873 = vshrl.u32 %v872, 7
        %v874 = vsub.s32 1, %v873
        %v875 = vrot.slane %v867, %v874
        %vm876 = vcmp.eq.s32.totalorder %v871, 1
        %vm877 = vcmp.eq.s32.totalorder %v875, 1
        %v878 = vsel %vm876, %v866, 0.0
        %v879 = vsel %vm877, %v865, 0.0
        %v880 = vld [vmem:[%s5] sm:$0xf]
        %882 = vset.pattern.permute.xlu0 10
        %883 = vperm.xlu0 %882, %v880
        %v884 = vpop.permute.xlu0 %883
        %v887 = vunpack.c.l.s4 839922192
        %v888 = vunpack.c.0.s8 %v887
        %v889 = vlaneseq
        %v890 = vshrl.u32 %v889, 7
        %v891 = vsub.s32 %v888, %v890
        %v892 = vrot.slane %v884, %v891
        %v894 = vcombine.high %v892, %v892
        %v896 = vmul.f32 %v878, %v892
        %v897 = vmul.f32 %v879, %v894
        %v898 = vadd.f32 %v735, %v896
        %v899 = vadd.f32 %v736, %v897
        %900 = vrot.lane.b32.xlu0 %v443, 62
        %v901 = vpop.permute.xlu0 %900
        %902 = vrot.lane.b32.xlu0 %v444, 62
        %v903 = vpop.permute.xlu0 %902
        %vm904 = vcmp.lt.s32.totalorder %v462, 62
        %v905 = vsel %vm904, %v901, %v903
        %v906 = vsel %vm904, %v903, %v901
        %vm907 = vmand %vm446, %vm454
        %v908 = vsel %vm907, 1, 0
        %v909 = vlaneseq
        %v910 = vshrl.u32 %v909, 7
        %v911 = vsub.s32 0, %v910
        %v912 = vrot.slane %v908, %v911
        %v913 = vlaneseq
        %v914 = vshrl.u32 %v913, 7
        %v915 = vsub.s32 1, %v914
        %v916 = vrot.slane %v908, %v915
        %vm917 = vcmp.eq.s32.totalorder %v912, 1
        %vm918 = vcmp.eq.s32.totalorder %v916, 1
        %v919 = vsel %vm917, %v906, 0.0
        %v920 = vsel %vm918, %v905, 0.0
        %v921 = vld [vmem:[%s5] sm:$0xf]
        %923 = vset.pattern.permute.xlu0 11
        %924 = vperm.xlu0 %923, %v921
        %v925 = vpop.permute.xlu0 %924
        %v928 = vunpack.c.l.s4 839922192
        %v929 = vunpack.c.0.s8 %v928
        %v930 = vlaneseq
        %v931 = vshrl.u32 %v930, 7
        %v932 = vsub.s32 %v929, %v931
        %v933 = vrot.slane %v925, %v932
        %v935 = vcombine.high %v933, %v933
        %v937 = vmul.f32 %v919, %v933
        %v938 = vmul.f32 %v920, %v935
        %v939 = vadd.f32 %v776, %v937
        %v940 = vadd.f32 %v777, %v938
        %941 = vrot.lane.b32.xlu0 %v443, 60
        %v942 = vpop.permute.xlu0 %941
        %943 = vrot.lane.b32.xlu0 %v444, 60
        %v944 = vpop.permute.xlu0 %943
        %vm945 = vcmp.lt.s32.totalorder %v462, 60
        %v946 = vsel %vm945, %v942, %v944
        %v947 = vsel %vm945, %v944, %v942
        %vm948 = vmand %vm446, %vm455
        %v949 = vsel %vm948, 1, 0
        %v950 = vlaneseq
        %v951 = vshrl.u32 %v950, 7
        %v952 = vsub.s32 0, %v951
        %v953 = vrot.slane %v949, %v952
        %v954 = vlaneseq
        %v955 = vshrl.u32 %v954, 7
        %v956 = vsub.s32 1, %v955
        %v957 = vrot.slane %v949, %v956
        %vm958 = vcmp.eq.s32.totalorder %v953, 1
        %vm959 = vcmp.eq.s32.totalorder %v957, 1
        %v960 = vsel %vm958, %v947, 0.0
        %v961 = vsel %vm959, %v946, 0.0
        %v962 = vld [vmem:[%s5] sm:$0xf]
        %964 = vset.pattern.permute.xlu0 12
        %965 = vperm.xlu0 %964, %v962
        %v966 = vpop.permute.xlu0 %965
        %v969 = vunpack.c.l.s4 839922192
        %v970 = vunpack.c.0.s8 %v969
        %v971 = vlaneseq
        %v972 = vshrl.u32 %v971, 7
        %v973 = vsub.s32 %v970, %v972
        %v974 = vrot.slane %v966, %v973
        %v976 = vcombine.high %v974, %v974
        %v978 = vmul.f32 %v960, %v974
        %v979 = vmul.f32 %v961, %v976
        %v980 = vadd.f32 %v817, %v978
        %v981 = vadd.f32 %v818, %v979
        %982 = vrot.lane.b32.xlu0 %v443, 58
        %v983 = vpop.permute.xlu0 %982
        %984 = vrot.lane.b32.xlu0 %v444, 58
        %v985 = vpop.permute.xlu0 %984
        %vm986 = vcmp.lt.s32.totalorder %v462, 58
        %v987 = vsel %vm986, %v983, %v985
        %v988 = vsel %vm986, %v985, %v983
        %vm989 = vmand %vm446, %vm456
        %v990 = vsel %vm989, 1, 0
        %v991 = vlaneseq
        %v992 = vshrl.u32 %v991, 7
        %v993 = vsub.s32 0, %v992
        %v994 = vrot.slane %v990, %v993
        %v995 = vlaneseq
        %v996 = vshrl.u32 %v995, 7
        %v997 = vsub.s32 1, %v996
        %v998 = vrot.slane %v990, %v997
        %vm999 = vcmp.eq.s32.totalorder %v994, 1
        %vm1000 = vcmp.eq.s32.totalorder %v998, 1
        %v1001 = vsel %vm999, %v988, 0.0
        %v1002 = vsel %vm1000, %v987, 0.0
        %v1003 = vld [vmem:[%s5] sm:$0xf]
        %1005 = vset.pattern.permute.xlu0 13
        %1006 = vperm.xlu0 %1005, %v1003
        %v1007 = vpop.permute.xlu0 %1006
        %v1010 = vunpack.c.l.s4 839922192
        %v1011 = vunpack.c.0.s8 %v1010
        %v1012 = vlaneseq
        %v1013 = vshrl.u32 %v1012, 7
        %v1014 = vsub.s32 %v1011, %v1013
        %v1015 = vrot.slane %v1007, %v1014
        %v1017 = vcombine.high %v1015, %v1015
        %v1019 = vmul.f32 %v1001, %v1015
        %v1020 = vmul.f32 %v1002, %v1017
        %v1021 = vadd.f32 %v858, %v1019
        %v1022 = vadd.f32 %v859, %v1020
        %1023 = vrot.lane.b32.xlu0 %v443, 38
        %v1024 = vpop.permute.xlu0 %1023
        %1025 = vrot.lane.b32.xlu0 %v444, 38
        %v1026 = vpop.permute.xlu0 %1025
        %vm1027 = vcmp.lt.s32.totalorder %v462, 38
        %v1028 = vsel %vm1027, %v1024, %v1026
        %v1029 = vsel %vm1027, %v1026, %v1024
        %vm1030 = vmand %vm447, %vm451
        %v1031 = vsel %vm1030, 1, 0
        %v1032 = vlaneseq
        %v1033 = vshrl.u32 %v1032, 7
        %v1034 = vsub.s32 0, %v1033
        %v1035 = vrot.slane %v1031, %v1034
        %v1036 = vlaneseq
        %v1037 = vshrl.u32 %v1036, 7
        %v1038 = vsub.s32 1, %v1037
        %v1039 = vrot.slane %v1031, %v1038
        %vm1040 = vcmp.eq.s32.totalorder %v1035, 1
        %vm1041 = vcmp.eq.s32.totalorder %v1039, 1
        %v1042 = vsel %vm1040, %v1029, 0.0
        %v1043 = vsel %vm1041, %v1028, 0.0
        %v1044 = vld [vmem:[%s5] sm:$0xf]
        %1046 = vset.pattern.permute.xlu0 14
        %1047 = vperm.xlu0 %1046, %v1044
        %v1048 = vpop.permute.xlu0 %1047
        %v1051 = vunpack.c.l.s4 839922192
        %v1052 = vunpack.c.0.s8 %v1051
        %v1053 = vlaneseq
        %v1054 = vshrl.u32 %v1053, 7
        %v1055 = vsub.s32 %v1052, %v1054
        %v1056 = vrot.slane %v1048, %v1055
        %v1058 = vcombine.high %v1056, %v1056
        %v1060 = vmul.f32 %v1042, %v1056
        %v1061 = vmul.f32 %v1043, %v1058
        %v1062 = vadd.f32 %v898, %v1060
        %v1063 = vadd.f32 %v899, %v1061
        %1064 = vrot.lane.b32.xlu0 %v443, 36
        %v1065 = vpop.permute.xlu0 %1064
        %1066 = vrot.lane.b32.xlu0 %v444, 36
        %v1067 = vpop.permute.xlu0 %1066
        %vm1068 = vcmp.lt.s32.totalorder %v462, 36
        %v1069 = vsel %vm1068, %v1065, %v1067
        %v1070 = vsel %vm1068, %v1067, %v1065
        %vm1071 = vmand %vm447, %vm452
        %v1072 = vsel %vm1071, 1, 0
        %v1073 = vlaneseq
        %v1074 = vshrl.u32 %v1073, 7
        %v1075 = vsub.s32 0, %v1074
        %v1076 = vrot.slane %v1072, %v1075
        %v1077 = vlaneseq
        %v1078 = vshrl.u32 %v1077, 7
        %v1079 = vsub.s32 1, %v1078
        %v1080 = vrot.slane %v1072, %v1079
        %vm1081 = vcmp.eq.s32.totalorder %v1076, 1
        %vm1082 = vcmp.eq.s32.totalorder %v1080, 1
        %v1083 = vsel %vm1081, %v1070, 0.0
        %v1084 = vsel %vm1082, %v1069, 0.0
        %v1085 = vld [vmem:[%s5] sm:$0xf]
        %1087 = vset.pattern.permute.xlu0 15
        %1088 = vperm.xlu0 %1087, %v1085
        %v1089 = vpop.permute.xlu0 %1088
        %v1092 = vunpack.c.l.s4 839922192
        %v1093 = vunpack.c.0.s8 %v1092
        %v1094 = vlaneseq
        %v1095 = vshrl.u32 %v1094, 7
        %v1096 = vsub.s32 %v1093, %v1095
        %v1097 = vrot.slane %v1089, %v1096
        %v1099 = vcombine.high %v1097, %v1097
        %v1101 = vmul.f32 %v1083, %v1097
        %v1102 = vmul.f32 %v1084, %v1099
        %v1103 = vadd.f32 %v939, %v1101
        %v1104 = vadd.f32 %v940, %v1102
        %1105 = vrot.lane.b32.xlu0 %v443, 34
        %v1106 = vpop.permute.xlu0 %1105
        %1107 = vrot.lane.b32.xlu0 %v444, 34
        %v1108 = vpop.permute.xlu0 %1107
        %vm1109 = vcmp.lt.s32.totalorder %v462, 34
        %v1110 = vsel %vm1109, %v1106, %v1108
        %v1111 = vsel %vm1109, %v1108, %v1106
        %vm1112 = vmand %vm447, %vm453
        %v1113 = vsel %vm1112, 1, 0
        %v1114 = vlaneseq
        %v1115 = vshrl.u32 %v1114, 7
        %v1116 = vsub.s32 0, %v1115
        %v1117 = vrot.slane %v1113, %v1116
        %v1118 = vlaneseq
        %v1119 = vshrl.u32 %v1118, 7
        %v1120 = vsub.s32 1, %v1119
        %v1121 = vrot.slane %v1113, %v1120
        %vm1122 = vcmp.eq.s32.totalorder %v1117, 1
        %vm1123 = vcmp.eq.s32.totalorder %v1121, 1
        %v1124 = vsel %vm1122, %v1111, 0.0
        %v1125 = vsel %vm1123, %v1110, 0.0
        %v1126 = vld [vmem:[%s5] sm:$0xf]
        %1128 = vset.pattern.permute.xlu0 16
        %1129 = vperm.xlu0 %1128, %v1126
        %v1130 = vpop.permute.xlu0 %1129
        %v1133 = vunpack.c.l.s4 839922192
        %v1134 = vunpack.c.0.s8 %v1133
        %v1135 = vlaneseq
        %v1136 = vshrl.u32 %v1135, 7
        %v1137 = vsub.s32 %v1134, %v1136
        %v1138 = vrot.slane %v1130, %v1137
        %v1140 = vcombine.high %v1138, %v1138
        %v1142 = vmul.f32 %v1124, %v1138
        %v1143 = vmul.f32 %v1125, %v1140
        %v1144 = vadd.f32 %v980, %v1142
        %v1145 = vadd.f32 %v981, %v1143
        %1146 = vrot.lane.b32.xlu0 %v443, 32
        %v1147 = vpop.permute.xlu0 %1146
        %1148 = vrot.lane.b32.xlu0 %v444, 32
        %v1149 = vpop.permute.xlu0 %1148
        %vm1150 = vcmp.lt.s32.totalorder %v462, 32
        %v1151 = vsel %vm1150, %v1147, %v1149
        %v1152 = vsel %vm1150, %v1149, %v1147
        %v1153 = vsel %vm447, 1, 0
        %v1154 = vlaneseq
        %v1155 = vshrl.u32 %v1154, 7
        %v1156 = vsub.s32 0, %v1155
        %v1157 = vrot.slane %v1153, %v1156
        %v1158 = vlaneseq
        %v1159 = vshrl.u32 %v1158, 7
        %v1160 = vsub.s32 1, %v1159
        %v1161 = vrot.slane %v1153, %v1160
        %vm1162 = vcmp.eq.s32.totalorder %v1157, 1
        %vm1163 = vcmp.eq.s32.totalorder %v1161, 1
        %v1164 = vsel %vm1162, %v1152, 0.0
        %v1165 = vsel %vm1163, %v1151, 0.0
        %v1166 = vld [vmem:[%s5] sm:$0xf]
        %1168 = vset.pattern.permute.xlu0 17
        %1169 = vperm.xlu0 %1168, %v1166
        %v1170 = vpop.permute.xlu0 %1169
        %v1173 = vunpack.c.l.s4 839922192
        %v1174 = vunpack.c.0.s8 %v1173
        %v1175 = vlaneseq
        %v1176 = vshrl.u32 %v1175, 7
        %v1177 = vsub.s32 %v1174, %v1176
        %v1178 = vrot.slane %v1170, %v1177
        %v1180 = vcombine.high %v1178, %v1178
        %v1182 = vmul.f32 %v1164, %v1178
        %v1183 = vmul.f32 %v1165, %v1180
        %v1184 = vadd.f32 %v1021, %v1182
        %v1185 = vadd.f32 %v1022, %v1183
        %1186 = vrot.lane.b32.xlu0 %v443, 30
        %v1187 = vpop.permute.xlu0 %1186
        %1188 = vrot.lane.b32.xlu0 %v444, 30
        %v1189 = vpop.permute.xlu0 %1188
        %vm1190 = vcmp.lt.s32.totalorder %v462, 30
        %v1191 = vsel %vm1190, %v1187, %v1189
        %v1192 = vsel %vm1190, %v1189, %v1187
        %vm1193 = vmand %vm447, %vm454
        %v1194 = vsel %vm1193, 1, 0
        %v1195 = vlaneseq
        %v1196 = vshrl.u32 %v1195, 7
        %v1197 = vsub.s32 0, %v1196
        %v1198 = vrot.slane %v1194, %v1197
        %v1199 = vlaneseq
        %v1200 = vshrl.u32 %v1199, 7
        %v1201 = vsub.s32 1, %v1200
        %v1202 = vrot.slane %v1194, %v1201
        %vm1203 = vcmp.eq.s32.totalorder %v1198, 1
        %vm1204 = vcmp.eq.s32.totalorder %v1202, 1
        %v1205 = vsel %vm1203, %v1192, 0.0
        %v1206 = vsel %vm1204, %v1191, 0.0
        %v1207 = vld [vmem:[%s5] sm:$0xf]
        %1209 = vset.pattern.permute.xlu0 18
        %1210 = vperm.xlu0 %1209, %v1207
        %v1211 = vpop.permute.xlu0 %1210
        %v1214 = vunpack.c.l.s4 839922192
        %v1215 = vunpack.c.0.s8 %v1214
        %v1216 = vlaneseq
        %v1217 = vshrl.u32 %v1216, 7
        %v1218 = vsub.s32 %v1215, %v1217
        %v1219 = vrot.slane %v1211, %v1218
        %v1221 = vcombine.high %v1219, %v1219
        %v1223 = vmul.f32 %v1205, %v1219
        %v1224 = vmul.f32 %v1206, %v1221
        %v1225 = vadd.f32 %v1062, %v1223
        %v1226 = vadd.f32 %v1063, %v1224
        %1227 = vrot.lane.b32.xlu0 %v443, 28
        %v1228 = vpop.permute.xlu0 %1227
        %1229 = vrot.lane.b32.xlu0 %v444, 28
        %v1230 = vpop.permute.xlu0 %1229
        %vm1231 = vcmp.lt.s32.totalorder %v462, 28
        %v1232 = vsel %vm1231, %v1228, %v1230
        %v1233 = vsel %vm1231, %v1230, %v1228
        %vm1234 = vmand %vm447, %vm455
        %v1235 = vsel %vm1234, 1, 0
        %v1236 = vlaneseq
        %v1237 = vshrl.u32 %v1236, 7
        %v1238 = vsub.s32 0, %v1237
        %v1239 = vrot.slane %v1235, %v1238
        %v1240 = vlaneseq
        %v1241 = vshrl.u32 %v1240, 7
        %v1242 = vsub.s32 1, %v1241
        %v1243 = vrot.slane %v1235, %v1242
        %vm1244 = vcmp.eq.s32.totalorder %v1239, 1
        %vm1245 = vcmp.eq.s32.totalorder %v1243, 1
        %v1246 = vsel %vm1244, %v1233, 0.0
        %v1247 = vsel %vm1245, %v1232, 0.0
        %v1248 = vld [vmem:[%s5] sm:$0xf]
        %1250 = vset.pattern.permute.xlu0 19
        %1251 = vperm.xlu0 %1250, %v1248
        %v1252 = vpop.permute.xlu0 %1251
        %v1255 = vunpack.c.l.s4 839922192
        %v1256 = vunpack.c.0.s8 %v1255
        %v1257 = vlaneseq
        %v1258 = vshrl.u32 %v1257, 7
        %v1259 = vsub.s32 %v1256, %v1258
        %v1260 = vrot.slane %v1252, %v1259
        %v1262 = vcombine.high %v1260, %v1260
        %v1264 = vmul.f32 %v1246, %v1260
        %v1265 = vmul.f32 %v1247, %v1262
        %v1266 = vadd.f32 %v1103, %v1264
        %v1267 = vadd.f32 %v1104, %v1265
        %1268 = vrot.lane.b32.xlu0 %v443, 26
        %v1269 = vpop.permute.xlu0 %1268
        %1270 = vrot.lane.b32.xlu0 %v444, 26
        %v1271 = vpop.permute.xlu0 %1270
        %vm1272 = vcmp.lt.s32.totalorder %v462, 26
        %v1273 = vsel %vm1272, %v1269, %v1271
        %v1274 = vsel %vm1272, %v1271, %v1269
        %vm1275 = vmand %vm447, %vm456
        %v1276 = vsel %vm1275, 1, 0
        %v1277 = vlaneseq
        %v1278 = vshrl.u32 %v1277, 7
        %v1279 = vsub.s32 0, %v1278
        %v1280 = vrot.slane %v1276, %v1279
        %v1281 = vlaneseq
        %v1282 = vshrl.u32 %v1281, 7
        %v1283 = vsub.s32 1, %v1282
        %v1284 = vrot.slane %v1276, %v1283
        %vm1285 = vcmp.eq.s32.totalorder %v1280, 1
        %vm1286 = vcmp.eq.s32.totalorder %v1284, 1
        %v1287 = vsel %vm1285, %v1274, 0.0
        %v1288 = vsel %vm1286, %v1273, 0.0
        %v1289 = vld [vmem:[%s5] sm:$0xf]
        %1291 = vset.pattern.permute.xlu0 20
        %1292 = vperm.xlu0 %1291, %v1289
        %v1293 = vpop.permute.xlu0 %1292
        %v1296 = vunpack.c.l.s4 839922192
        %v1297 = vunpack.c.0.s8 %v1296
        %v1298 = vlaneseq
        %v1299 = vshrl.u32 %v1298, 7
        %v1300 = vsub.s32 %v1297, %v1299
        %v1301 = vrot.slane %v1293, %v1300
        %v1303 = vcombine.high %v1301, %v1301
        %v1305 = vmul.f32 %v1287, %v1301
        %v1306 = vmul.f32 %v1288, %v1303
        %v1307 = vadd.f32 %v1144, %v1305
        %v1308 = vadd.f32 %v1145, %v1306
        %1309 = vrot.lane.b32.xlu0 %v443, 6
        %v1310 = vpop.permute.xlu0 %1309
        %1311 = vrot.lane.b32.xlu0 %v444, 6
        %v1312 = vpop.permute.xlu0 %1311
        %vm1313 = vcmp.lt.s32.totalorder %v462, 6
        %v1314 = vsel %vm1313, %v1310, %v1312
        %v1315 = vsel %vm1313, %v1312, %v1310
        %v1316 = vsel %vm451, 1, 0
        %v1317 = vlaneseq
        %v1318 = vshrl.u32 %v1317, 7
        %v1319 = vsub.s32 0, %v1318
        %v1320 = vrot.slane %v1316, %v1319
        %v1321 = vlaneseq
        %v1322 = vshrl.u32 %v1321, 7
        %v1323 = vsub.s32 1, %v1322
        %v1324 = vrot.slane %v1316, %v1323
        %vm1325 = vcmp.eq.s32.totalorder %v1320, 1
        %vm1326 = vcmp.eq.s32.totalorder %v1324, 1
        %v1327 = vsel %vm1325, %v1315, 0.0
        %v1328 = vsel %vm1326, %v1314, 0.0
        %v1329 = vld [vmem:[%s5] sm:$0xf]
        %1331 = vset.pattern.permute.xlu0 21
        %1332 = vperm.xlu0 %1331, %v1329
        %v1333 = vpop.permute.xlu0 %1332
        %v1336 = vunpack.c.l.s4 839922192
        %v1337 = vunpack.c.0.s8 %v1336
        %v1338 = vlaneseq
        %v1339 = vshrl.u32 %v1338, 7
        %v1340 = vsub.s32 %v1337, %v1339
        %v1341 = vrot.slane %v1333, %v1340
        %v1343 = vcombine.high %v1341, %v1341
        %v1345 = vmul.f32 %v1327, %v1341
        %v1346 = vmul.f32 %v1328, %v1343
        %v1347 = vadd.f32 %v1184, %v1345
        %v1348 = vadd.f32 %v1185, %v1346
        %1349 = vrot.lane.b32.xlu0 %v443, 4
        %v1350 = vpop.permute.xlu0 %1349
        %1351 = vrot.lane.b32.xlu0 %v444, 4
        %v1352 = vpop.permute.xlu0 %1351
        %vm1353 = vcmp.lt.s32.totalorder %v462, 4
        %v1354 = vsel %vm1353, %v1350, %v1352
        %v1355 = vsel %vm1353, %v1352, %v1350
        %v1356 = vsel %vm452, 1, 0
        %v1357 = vlaneseq
        %v1358 = vshrl.u32 %v1357, 7
        %v1359 = vsub.s32 0, %v1358
        %v1360 = vrot.slane %v1356, %v1359
        %v1361 = vlaneseq
        %v1362 = vshrl.u32 %v1361, 7
        %v1363 = vsub.s32 1, %v1362
        %v1364 = vrot.slane %v1356, %v1363
        %vm1365 = vcmp.eq.s32.totalorder %v1360, 1
        %vm1366 = vcmp.eq.s32.totalorder %v1364, 1
        %v1367 = vsel %vm1365, %v1355, 0.0
        %v1368 = vsel %vm1366, %v1354, 0.0
        %v1369 = vld [vmem:[%s5] sm:$0xf]
        %1371 = vset.pattern.permute.xlu0 22
        %1372 = vperm.xlu0 %1371, %v1369
        %v1373 = vpop.permute.xlu0 %1372
        %v1376 = vunpack.c.l.s4 839922192
        %v1377 = vunpack.c.0.s8 %v1376
        %v1378 = vlaneseq
        %v1379 = vshrl.u32 %v1378, 7
        %v1380 = vsub.s32 %v1377, %v1379
        %v1381 = vrot.slane %v1373, %v1380
        %v1383 = vcombine.high %v1381, %v1381
        %v1385 = vmul.f32 %v1367, %v1381
        %v1386 = vmul.f32 %v1368, %v1383
        %v1387 = vadd.f32 %v1225, %v1385
        %v1388 = vadd.f32 %v1226, %v1386
        %1389 = vrot.lane.b32.xlu0 %v443, 2
        %v1390 = vpop.permute.xlu0 %1389
        %1391 = vrot.lane.b32.xlu0 %v444, 2
        %v1392 = vpop.permute.xlu0 %1391
        %vm1393 = vcmp.lt.s32.totalorder %v462, 2
        %v1394 = vsel %vm1393, %v1390, %v1392
        %v1395 = vsel %vm1393, %v1392, %v1390
        %v1396 = vsel %vm453, 1, 0
        %v1397 = vlaneseq
        %v1398 = vshrl.u32 %v1397, 7
        %v1399 = vsub.s32 0, %v1398
        %v1400 = vrot.slane %v1396, %v1399
        %v1401 = vlaneseq
        %v1402 = vshrl.u32 %v1401, 7
        %v1403 = vsub.s32 1, %v1402
        %v1404 = vrot.slane %v1396, %v1403
        %vm1405 = vcmp.eq.s32.totalorder %v1400, 1
        %vm1406 = vcmp.eq.s32.totalorder %v1404, 1
        %v1407 = vsel %vm1405, %v1395, 0.0
        %v1408 = vsel %vm1406, %v1394, 0.0
        %v1409 = vld [vmem:[%s5] sm:$0xf]
        %1411 = vset.pattern.permute.xlu0 23
        %1412 = vperm.xlu0 %1411, %v1409
        %v1413 = vpop.permute.xlu0 %1412
        %v1416 = vunpack.c.l.s4 839922192
        %v1417 = vunpack.c.0.s8 %v1416
        %v1418 = vlaneseq
        %v1419 = vshrl.u32 %v1418, 7
        %v1420 = vsub.s32 %v1417, %v1419
        %v1421 = vrot.slane %v1413, %v1420
        %v1423 = vcombine.high %v1421, %v1421
        %v1425 = vmul.f32 %v1407, %v1421
        %v1426 = vmul.f32 %v1408, %v1423
        %v1427 = vadd.f32 %v1266, %v1425
        %v1428 = vadd.f32 %v1267, %v1426
        %v1429 = vld [vmem:[%s5] sm:$0xf]
        %1431 = vset.pattern.permute.xlu0 24
        %1432 = vperm.xlu0 %1431, %v1429
        %v1433 = vpop.permute.xlu0 %1432
        %v1436 = vunpack.c.l.s4 839922192
        %v1437 = vunpack.c.0.s8 %v1436
        %v1438 = vlaneseq
        %v1439 = vshrl.u32 %v1438, 7
        %v1440 = vsub.s32 %v1437, %v1439
        %v1441 = vrot.slane %v1433, %v1440
        %v1443 = vcombine.high %v1441, %v1441
        %v1445 = vmul.f32 %v443, %v1441
        %v1446 = vmul.f32 %v444, %v1443
        %v1447 = vadd.f32 %v1307, %v1445
        %v1448 = vadd.f32 %v1308, %v1446
        %1449 = vrot.lane.b32.xlu0 %v443, 126
        %v1450 = vpop.permute.xlu0 %1449
        %1451 = vrot.lane.b32.xlu0 %v444, 126
        %v1452 = vpop.permute.xlu0 %1451
        %vm1453 = vcmp.lt.s32.totalorder %v462, 126
        %v1454 = vsel %vm1453, %v1450, %v1452
        %v1455 = vsel %vm1453, %v1452, %v1450
        %v1456 = vsel %vm454, 1, 0
        %v1457 = vlaneseq
        %v1458 = vshrl.u32 %v1457, 7
        %v1459 = vsub.s32 0, %v1458
        %v1460 = vrot.slane %v1456, %v1459
        %v1461 = vlaneseq
        %v1462 = vshrl.u32 %v1461, 7
        %v1463 = vsub.s32 1, %v1462
        %v1464 = vrot.slane %v1456, %v1463
        %vm1465 = vcmp.eq.s32.totalorder %v1460, 1
        %vm1466 = vcmp.eq.s32.totalorder %v1464, 1
        %v1467 = vsel %vm1465, %v1454, 0.0
        %v1468 = vsel %vm1466, %v1455, 0.0
        %v1469 = vld [vmem:[%s5] sm:$0xf]
        %1471 = vset.pattern.permute.xlu0 25
        %1472 = vperm.xlu0 %1471, %v1469
        %v1473 = vpop.permute.xlu0 %1472
        %v1476 = vunpack.c.l.s4 839922192
        %v1477 = vunpack.c.0.s8 %v1476
        %v1478 = vlaneseq
        %v1479 = vshrl.u32 %v1478, 7
        %v1480 = vsub.s32 %v1477, %v1479
        %v1481 = vrot.slane %v1473, %v1480
        %v1483 = vcombine.high %v1481, %v1481
        %v1485 = vmul.f32 %v1467, %v1481
        %v1486 = vmul.f32 %v1468, %v1483
        %v1487 = vadd.f32 %v1347, %v1485
        %v1488 = vadd.f32 %v1348, %v1486
        %1489 = vrot.lane.b32.xlu0 %v443, 124
        %v1490 = vpop.permute.xlu0 %1489
        %1491 = vrot.lane.b32.xlu0 %v444, 124
        %v1492 = vpop.permute.xlu0 %1491
        %vm1493 = vcmp.lt.s32.totalorder %v462, 124
        %v1494 = vsel %vm1493, %v1490, %v1492
        %v1495 = vsel %vm1493, %v1492, %v1490
        %v1496 = vsel %vm455, 1, 0
        %v1497 = vlaneseq
        %v1498 = vshrl.u32 %v1497, 7
        %v1499 = vsub.s32 0, %v1498
        %v1500 = vrot.slane %v1496, %v1499
        %v1501 = vlaneseq
        %v1502 = vshrl.u32 %v1501, 7
        %v1503 = vsub.s32 1, %v1502
        %v1504 = vrot.slane %v1496, %v1503
        %vm1505 = vcmp.eq.s32.totalorder %v1500, 1
        %vm1506 = vcmp.eq.s32.totalorder %v1504, 1
        %v1507 = vsel %vm1505, %v1494, 0.0
        %v1508 = vsel %vm1506, %v1495, 0.0
        %v1509 = vld [vmem:[%s5] sm:$0xf]
        %1511 = vset.pattern.permute.xlu0 26
        %1512 = vperm.xlu0 %1511, %v1509
        %v1513 = vpop.permute.xlu0 %1512
        %v1516 = vunpack.c.l.s4 839922192
        %v1517 = vunpack.c.0.s8 %v1516
        %v1518 = vlaneseq
        %v1519 = vshrl.u32 %v1518, 7
        %v1520 = vsub.s32 %v1517, %v1519
        %v1521 = vrot.slane %v1513, %v1520
        %v1523 = vcombine.high %v1521, %v1521
        %v1525 = vmul.f32 %v1507, %v1521
        %v1526 = vmul.f32 %v1508, %v1523
        %v1527 = vadd.f32 %v1387, %v1525
        %v1528 = vadd.f32 %v1388, %v1526
        %1529 = vrot.lane.b32.xlu0 %v443, 122
        %v1530 = vpop.permute.xlu0 %1529
        %1531 = vrot.lane.b32.xlu0 %v444, 122
        %v1532 = vpop.permute.xlu0 %1531
        %vm1533 = vcmp.lt.s32.totalorder %v462, 122
        %v1534 = vsel %vm1533, %v1530, %v1532
        %v1535 = vsel %vm1533, %v1532, %v1530
        %v1536 = vsel %vm456, 1, 0
        %v1537 = vlaneseq
        %v1538 = vshrl.u32 %v1537, 7
        %v1539 = vsub.s32 0, %v1538
        %v1540 = vrot.slane %v1536, %v1539
        %v1541 = vlaneseq
        %v1542 = vshrl.u32 %v1541, 7
        %v1543 = vsub.s32 1, %v1542
        %v1544 = vrot.slane %v1536, %v1543
        %vm1545 = vcmp.eq.s32.totalorder %v1540, 1
        %vm1546 = vcmp.eq.s32.totalorder %v1544, 1
        %v1547 = vsel %vm1545, %v1534, 0.0
        %v1548 = vsel %vm1546, %v1535, 0.0
        %v1549 = vld [vmem:[%s5] sm:$0xf]
        %1551 = vset.pattern.permute.xlu0 27
        %1552 = vperm.xlu0 %1551, %v1549
        %v1553 = vpop.permute.xlu0 %1552
        %v1556 = vunpack.c.l.s4 839922192
        %v1557 = vunpack.c.0.s8 %v1556
        %v1558 = vlaneseq
        %v1559 = vshrl.u32 %v1558, 7
        %v1560 = vsub.s32 %v1557, %v1559
        %v1561 = vrot.slane %v1553, %v1560
        %v1563 = vcombine.high %v1561, %v1561
        %v1565 = vmul.f32 %v1547, %v1561
        %v1566 = vmul.f32 %v1548, %v1563
        %v1567 = vadd.f32 %v1427, %v1565
        %v1568 = vadd.f32 %v1428, %v1566
        %vm1569 = vmand %vm448, %vm451
        %v1570 = vsel %vm1569, 1, 0
        %v1571 = vlaneseq
        %v1572 = vshrl.u32 %v1571, 7
        %v1573 = vsub.s32 0, %v1572
        %v1574 = vrot.slane %v1570, %v1573
        %v1575 = vlaneseq
        %v1576 = vshrl.u32 %v1575, 7
        %v1577 = vsub.s32 1, %v1576
        %v1578 = vrot.slane %v1570, %v1577
        %vm1579 = vcmp.eq.s32.totalorder %v1574, 1
        %vm1580 = vcmp.eq.s32.totalorder %v1578, 1
        %v1581 = vsel %vm1579, %v464, 0.0
        %v1582 = vsel %vm1580, %v465, 0.0
        %v1583 = vld [vmem:[%s5] sm:$0xf]
        %1585 = vset.pattern.permute.xlu0 28
        %1586 = vperm.xlu0 %1585, %v1583
        %v1587 = vpop.permute.xlu0 %1586
        %v1590 = vunpack.c.l.s4 839922192
        %v1591 = vunpack.c.0.s8 %v1590
        %v1592 = vlaneseq
        %v1593 = vshrl.u32 %v1592, 7
        %v1594 = vsub.s32 %v1591, %v1593
        %v1595 = vrot.slane %v1587, %v1594
        %v1597 = vcombine.high %v1595, %v1595
        %v1599 = vmul.f32 %v1581, %v1595
        %v1600 = vmul.f32 %v1582, %v1597
        %v1601 = vadd.f32 %v1447, %v1599
        %v1602 = vadd.f32 %v1448, %v1600
        %vm1603 = vmand %vm448, %vm452
        %v1604 = vsel %vm1603, 1, 0
        %v1605 = vlaneseq
        %v1606 = vshrl.u32 %v1605, 7
        %v1607 = vsub.s32 0, %v1606
        %v1608 = vrot.slane %v1604, %v1607
        %v1609 = vlaneseq
        %v1610 = vshrl.u32 %v1609, 7
        %v1611 = vsub.s32 1, %v1610
        %v1612 = vrot.slane %v1604, %v1611
        %vm1613 = vcmp.eq.s32.totalorder %v1608, 1
        %vm1614 = vcmp.eq.s32.totalorder %v1612, 1
        %v1615 = vsel %vm1613, %v503, 0.0
        %v1616 = vsel %vm1614, %v504, 0.0
        %v1617 = vld [vmem:[%s5] sm:$0xf]
        %1619 = vset.pattern.permute.xlu0 29
        %1620 = vperm.xlu0 %1619, %v1617
        %v1621 = vpop.permute.xlu0 %1620
        %v1624 = vunpack.c.l.s4 839922192
        %v1625 = vunpack.c.0.s8 %v1624
        %v1626 = vlaneseq
        %v1627 = vshrl.u32 %v1626, 7
        %v1628 = vsub.s32 %v1625, %v1627
        %v1629 = vrot.slane %v1621, %v1628
        %v1631 = vcombine.high %v1629, %v1629
        %v1633 = vmul.f32 %v1615, %v1629
        %v1634 = vmul.f32 %v1616, %v1631
        %v1635 = vadd.f32 %v1487, %v1633
        %v1636 = vadd.f32 %v1488, %v1634
        %vm1637 = vmand %vm448, %vm453
        %v1638 = vsel %vm1637, 1, 0
        %v1639 = vlaneseq
        %v1640 = vshrl.u32 %v1639, 7
        %v1641 = vsub.s32 0, %v1640
        %v1642 = vrot.slane %v1638, %v1641
        %v1643 = vlaneseq
        %v1644 = vshrl.u32 %v1643, 7
        %v1645 = vsub.s32 1, %v1644
        %v1646 = vrot.slane %v1638, %v1645
        %vm1647 = vcmp.eq.s32.totalorder %v1642, 1
        %vm1648 = vcmp.eq.s32.totalorder %v1646, 1
        %v1649 = vsel %vm1647, %v542, 0.0
        %v1650 = vsel %vm1648, %v543, 0.0
        %v1651 = vld [vmem:[%s5] sm:$0xf]
        %1653 = vset.pattern.permute.xlu0 30
        %1654 = vperm.xlu0 %1653, %v1651
        %v1655 = vpop.permute.xlu0 %1654
        %v1658 = vunpack.c.l.s4 839922192
        %v1659 = vunpack.c.0.s8 %v1658
        %v1660 = vlaneseq
        %v1661 = vshrl.u32 %v1660, 7
        %v1662 = vsub.s32 %v1659, %v1661
        %v1663 = vrot.slane %v1655, %v1662
        %v1665 = vcombine.high %v1663, %v1663
        %v1667 = vmul.f32 %v1649, %v1663
        %v1668 = vmul.f32 %v1650, %v1665
        %v1669 = vadd.f32 %v1527, %v1667
        %v1670 = vadd.f32 %v1528, %v1668
        %v1671 = vsel %vm448, 1, 0
        %v1672 = vlaneseq
        %v1673 = vshrl.u32 %v1672, 7
        %v1674 = vsub.s32 0, %v1673
        %v1675 = vrot.slane %v1671, %v1674
        %v1676 = vlaneseq
        %v1677 = vshrl.u32 %v1676, 7
        %v1678 = vsub.s32 1, %v1677
        %v1679 = vrot.slane %v1671, %v1678
        %vm1680 = vcmp.eq.s32.totalorder %v1675, 1
        %vm1681 = vcmp.eq.s32.totalorder %v1679, 1
        %v1682 = vsel %vm1680, %v581, 0.0
        %v1683 = vsel %vm1681, %v582, 0.0
        %v1684 = vld [vmem:[%s5] sm:$0xf]
        %1686 = vset.pattern.permute.xlu0 31
        %1687 = vperm.xlu0 %1686, %v1684
        %v1688 = vpop.permute.xlu0 %1687
        %v1691 = vunpack.c.l.s4 839922192
        %v1692 = vunpack.c.0.s8 %v1691
        %v1693 = vlaneseq
        %v1694 = vshrl.u32 %v1693, 7
        %v1695 = vsub.s32 %v1692, %v1694
        %v1696 = vrot.slane %v1688, %v1695
        %v1698 = vcombine.high %v1696, %v1696
        %v1700 = vmul.f32 %v1682, %v1696
        %v1701 = vmul.f32 %v1683, %v1698
        %v1702 = vadd.f32 %v1567, %v1700
        %v1703 = vadd.f32 %v1568, %v1701
        %vm1704 = vmand %vm448, %vm454
        %v1705 = vsel %vm1704, 1, 0
        %v1706 = vlaneseq
        %v1707 = vshrl.u32 %v1706, 7
        %v1708 = vsub.s32 0, %v1707
        %v1709 = vrot.slane %v1705, %v1708
        %v1710 = vlaneseq
        %v1711 = vshrl.u32 %v1710, 7
        %v1712 = vsub.s32 1, %v1711
        %v1713 = vrot.slane %v1705, %v1712
        %vm1714 = vcmp.eq.s32.totalorder %v1709, 1
        %vm1715 = vcmp.eq.s32.totalorder %v1713, 1
        %v1716 = vsel %vm1714, %v619, 0.0
        %v1717 = vsel %vm1715, %v620, 0.0
        %v1718 = vld [vmem:[%s5] sm:$0xf]
        %1720 = vset.pattern.permute.xlu0 32
        %1721 = vperm.xlu0 %1720, %v1718
        %v1722 = vpop.permute.xlu0 %1721
        %v1725 = vunpack.c.l.s4 839922192
        %v1726 = vunpack.c.0.s8 %v1725
        %v1727 = vlaneseq
        %v1728 = vshrl.u32 %v1727, 7
        %v1729 = vsub.s32 %v1726, %v1728
        %v1730 = vrot.slane %v1722, %v1729
        %v1732 = vcombine.high %v1730, %v1730
        %v1734 = vmul.f32 %v1716, %v1730
        %v1735 = vmul.f32 %v1717, %v1732
        %v1736 = vadd.f32 %v1601, %v1734
        %v1737 = vadd.f32 %v1602, %v1735
        %vm1738 = vmand %vm448, %vm455
        %v1739 = vsel %vm1738, 1, 0
        %v1740 = vlaneseq
        %v1741 = vshrl.u32 %v1740, 7
        %v1742 = vsub.s32 0, %v1741
        %v1743 = vrot.slane %v1739, %v1742
        %v1744 = vlaneseq
        %v1745 = vshrl.u32 %v1744, 7
        %v1746 = vsub.s32 1, %v1745
        %v1747 = vrot.slane %v1739, %v1746
        %vm1748 = vcmp.eq.s32.totalorder %v1743, 1
        %vm1749 = vcmp.eq.s32.totalorder %v1747, 1
        %v1750 = vsel %vm1748, %v660, 0.0
        %v1751 = vsel %vm1749, %v661, 0.0
        %v1752 = vld [vmem:[%s5] sm:$0xf]
        %1754 = vset.pattern.permute.xlu0 33
        %1755 = vperm.xlu0 %1754, %v1752
        %v1756 = vpop.permute.xlu0 %1755
        %v1759 = vunpack.c.l.s4 839922192
        %v1760 = vunpack.c.0.s8 %v1759
        %v1761 = vlaneseq
        %v1762 = vshrl.u32 %v1761, 7
        %v1763 = vsub.s32 %v1760, %v1762
        %v1764 = vrot.slane %v1756, %v1763
        %v1766 = vcombine.high %v1764, %v1764
        %v1768 = vmul.f32 %v1750, %v1764
        %v1769 = vmul.f32 %v1751, %v1766
        %v1770 = vadd.f32 %v1635, %v1768
        %v1771 = vadd.f32 %v1636, %v1769
        %vm1772 = vmand %vm448, %vm456
        %v1773 = vsel %vm1772, 1, 0
        %v1774 = vlaneseq
        %v1775 = vshrl.u32 %v1774, 7
        %v1776 = vsub.s32 0, %v1775
        %v1777 = vrot.slane %v1773, %v1776
        %v1778 = vlaneseq
        %v1779 = vshrl.u32 %v1778, 7
        %v1780 = vsub.s32 1, %v1779
        %v1781 = vrot.slane %v1773, %v1780
        %vm1782 = vcmp.eq.s32.totalorder %v1777, 1
        %vm1783 = vcmp.eq.s32.totalorder %v1781, 1
        %v1784 = vsel %vm1782, %v701, 0.0
        %v1785 = vsel %vm1783, %v702, 0.0
        %v1786 = vld [vmem:[%s5] sm:$0xf]
        %1788 = vset.pattern.permute.xlu0 34
        %1789 = vperm.xlu0 %1788, %v1786
        %v1790 = vpop.permute.xlu0 %1789
        %v1793 = vunpack.c.l.s4 839922192
        %v1794 = vunpack.c.0.s8 %v1793
        %v1795 = vlaneseq
        %v1796 = vshrl.u32 %v1795, 7
        %v1797 = vsub.s32 %v1794, %v1796
        %v1798 = vrot.slane %v1790, %v1797
        %v1800 = vcombine.high %v1798, %v1798
        %v1802 = vmul.f32 %v1784, %v1798
        %v1803 = vmul.f32 %v1785, %v1800
        %v1804 = vadd.f32 %v1669, %v1802
        %v1805 = vadd.f32 %v1670, %v1803
        %vm1806 = vmand %vm449, %vm451
        %v1807 = vsel %vm1806, 1, 0
        %v1808 = vlaneseq
        %v1809 = vshrl.u32 %v1808, 7
        %v1810 = vsub.s32 0, %v1809
        %v1811 = vrot.slane %v1807, %v1810
        %v1812 = vlaneseq
        %v1813 = vshrl.u32 %v1812, 7
        %v1814 = vsub.s32 1, %v1813
        %v1815 = vrot.slane %v1807, %v1814
        %vm1816 = vcmp.eq.s32.totalorder %v1811, 1
        %vm1817 = vcmp.eq.s32.totalorder %v1815, 1
        %v1818 = vsel %vm1816, %v742, 0.0
        %v1819 = vsel %vm1817, %v743, 0.0
        %v1820 = vld [vmem:[%s5] sm:$0xf]
        %1822 = vset.pattern.permute.xlu0 35
        %1823 = vperm.xlu0 %1822, %v1820
        %v1824 = vpop.permute.xlu0 %1823
        %v1827 = vunpack.c.l.s4 839922192
        %v1828 = vunpack.c.0.s8 %v1827
        %v1829 = vlaneseq
        %v1830 = vshrl.u32 %v1829, 7
        %v1831 = vsub.s32 %v1828, %v1830
        %v1832 = vrot.slane %v1824, %v1831
        %v1834 = vcombine.high %v1832, %v1832
        %v1836 = vmul.f32 %v1818, %v1832
        %v1837 = vmul.f32 %v1819, %v1834
        %v1838 = vadd.f32 %v1702, %v1836
        %v1839 = vadd.f32 %v1703, %v1837
        %vm1840 = vmand %vm449, %vm452
        %v1841 = vsel %vm1840, 1, 0
        %v1842 = vlaneseq
        %v1843 = vshrl.u32 %v1842, 7
        %v1844 = vsub.s32 0, %v1843
        %v1845 = vrot.slane %v1841, %v1844
        %v1846 = vlaneseq
        %v1847 = vshrl.u32 %v1846, 7
        %v1848 = vsub.s32 1, %v1847
        %v1849 = vrot.slane %v1841, %v1848
        %vm1850 = vcmp.eq.s32.totalorder %v1845, 1
        %vm1851 = vcmp.eq.s32.totalorder %v1849, 1
        %v1852 = vsel %vm1850, %v783, 0.0
        %v1853 = vsel %vm1851, %v784, 0.0
        %v1854 = vld [vmem:[%s5] sm:$0xf]
        %1856 = vset.pattern.permute.xlu0 36
        %1857 = vperm.xlu0 %1856, %v1854
        %v1858 = vpop.permute.xlu0 %1857
        %v1861 = vunpack.c.l.s4 839922192
        %v1862 = vunpack.c.0.s8 %v1861
        %v1863 = vlaneseq
        %v1864 = vshrl.u32 %v1863, 7
        %v1865 = vsub.s32 %v1862, %v1864
        %v1866 = vrot.slane %v1858, %v1865
        %v1868 = vcombine.high %v1866, %v1866
        %v1870 = vmul.f32 %v1852, %v1866
        %v1871 = vmul.f32 %v1853, %v1868
        %v1872 = vadd.f32 %v1736, %v1870
        %v1873 = vadd.f32 %v1737, %v1871
        %vm1874 = vmand %vm449, %vm453
        %v1875 = vsel %vm1874, 1, 0
        %v1876 = vlaneseq
        %v1877 = vshrl.u32 %v1876, 7
        %v1878 = vsub.s32 0, %v1877
        %v1879 = vrot.slane %v1875, %v1878
        %v1880 = vlaneseq
        %v1881 = vshrl.u32 %v1880, 7
        %v1882 = vsub.s32 1, %v1881
        %v1883 = vrot.slane %v1875, %v1882
        %vm1884 = vcmp.eq.s32.totalorder %v1879, 1
        %vm1885 = vcmp.eq.s32.totalorder %v1883, 1
        %v1886 = vsel %vm1884, %v824, 0.0
        %v1887 = vsel %vm1885, %v825, 0.0
        %v1888 = vld [vmem:[%s5] sm:$0xf]
        %1890 = vset.pattern.permute.xlu0 37
        %1891 = vperm.xlu0 %1890, %v1888
        %v1892 = vpop.permute.xlu0 %1891
        %v1895 = vunpack.c.l.s4 839922192
        %v1896 = vunpack.c.0.s8 %v1895
        %v1897 = vlaneseq
        %v1898 = vshrl.u32 %v1897, 7
        %v1899 = vsub.s32 %v1896, %v1898
        %v1900 = vrot.slane %v1892, %v1899
        %v1902 = vcombine.high %v1900, %v1900
        %v1904 = vmul.f32 %v1886, %v1900
        %v1905 = vmul.f32 %v1887, %v1902
        %v1906 = vadd.f32 %v1770, %v1904
        %v1907 = vadd.f32 %v1771, %v1905
        %v1908 = vsel %vm449, 1, 0
        %v1909 = vlaneseq
        %v1910 = vshrl.u32 %v1909, 7
        %v1911 = vsub.s32 0, %v1910
        %v1912 = vrot.slane %v1908, %v1911
        %v1913 = vlaneseq
        %v1914 = vshrl.u32 %v1913, 7
        %v1915 = vsub.s32 1, %v1914
        %v1916 = vrot.slane %v1908, %v1915
        %vm1917 = vcmp.eq.s32.totalorder %v1912, 1
        %vm1918 = vcmp.eq.s32.totalorder %v1916, 1
        %v1919 = vsel %vm1917, %v865, 0.0
        %v1920 = vsel %vm1918, %v866, 0.0
        %v1921 = vld [vmem:[%s5] sm:$0xf]
        %1923 = vset.pattern.permute.xlu0 38
        %1924 = vperm.xlu0 %1923, %v1921
        %v1925 = vpop.permute.xlu0 %1924
        %v1928 = vunpack.c.l.s4 839922192
        %v1929 = vunpack.c.0.s8 %v1928
        %v1930 = vlaneseq
        %v1931 = vshrl.u32 %v1930, 7
        %v1932 = vsub.s32 %v1929, %v1931
        %v1933 = vrot.slane %v1925, %v1932
        %v1935 = vcombine.high %v1933, %v1933
        %v1937 = vmul.f32 %v1919, %v1933
        %v1938 = vmul.f32 %v1920, %v1935
        %v1939 = vadd.f32 %v1804, %v1937
        %v1940 = vadd.f32 %v1805, %v1938
        %vm1941 = vmand %vm449, %vm454
        %v1942 = vsel %vm1941, 1, 0
        %v1943 = vlaneseq
        %v1944 = vshrl.u32 %v1943, 7
        %v1945 = vsub.s32 0, %v1944
        %v1946 = vrot.slane %v1942, %v1945
        %v1947 = vlaneseq
        %v1948 = vshrl.u32 %v1947, 7
        %v1949 = vsub.s32 1, %v1948
        %v1950 = vrot.slane %v1942, %v1949
        %vm1951 = vcmp.eq.s32.totalorder %v1946, 1
        %vm1952 = vcmp.eq.s32.totalorder %v1950, 1
        %v1953 = vsel %vm1951, %v905, 0.0
        %v1954 = vsel %vm1952, %v906, 0.0
        %v1955 = vld [vmem:[%s5] sm:$0xf]
        %1957 = vset.pattern.permute.xlu0 39
        %1958 = vperm.xlu0 %1957, %v1955
        %v1959 = vpop.permute.xlu0 %1958
        %v1962 = vunpack.c.l.s4 839922192
        %v1963 = vunpack.c.0.s8 %v1962
        %v1964 = vlaneseq
        %v1965 = vshrl.u32 %v1964, 7
        %v1966 = vsub.s32 %v1963, %v1965
        %v1967 = vrot.slane %v1959, %v1966
        %v1969 = vcombine.high %v1967, %v1967
        %v1971 = vmul.f32 %v1953, %v1967
        %v1972 = vmul.f32 %v1954, %v1969
        %v1973 = vadd.f32 %v1838, %v1971
        %v1974 = vadd.f32 %v1839, %v1972
        %vm1975 = vmand %vm449, %vm455
        %v1976 = vsel %vm1975, 1, 0
        %v1977 = vlaneseq
        %v1978 = vshrl.u32 %v1977, 7
        %v1979 = vsub.s32 0, %v1978
        %v1980 = vrot.slane %v1976, %v1979
        %v1981 = vlaneseq
        %v1982 = vshrl.u32 %v1981, 7
        %v1983 = vsub.s32 1, %v1982
        %v1984 = vrot.slane %v1976, %v1983
        %vm1985 = vcmp.eq.s32.totalorder %v1980, 1
        %vm1986 = vcmp.eq.s32.totalorder %v1984, 1
        %v1987 = vsel %vm1985, %v946, 0.0
        %v1988 = vsel %vm1986, %v947, 0.0
        %v1989 = vld [vmem:[%s5] sm:$0xf]
        %1991 = vset.pattern.permute.xlu0 40
        %1992 = vperm.xlu0 %1991, %v1989
        %v1993 = vpop.permute.xlu0 %1992
        %v1996 = vunpack.c.l.s4 839922192
        %v1997 = vunpack.c.0.s8 %v1996
        %v1998 = vlaneseq
        %v1999 = vshrl.u32 %v1998, 7
        %v2000 = vsub.s32 %v1997, %v1999
        %v2001 = vrot.slane %v1993, %v2000
        %v2003 = vcombine.high %v2001, %v2001
        %v2005 = vmul.f32 %v1987, %v2001
        %v2006 = vmul.f32 %v1988, %v2003
        %v2007 = vadd.f32 %v1872, %v2005
        %v2008 = vadd.f32 %v1873, %v2006
        %vm2009 = vmand %vm449, %vm456
        %v2010 = vsel %vm2009, 1, 0
        %v2011 = vlaneseq
        %v2012 = vshrl.u32 %v2011, 7
        %v2013 = vsub.s32 0, %v2012
        %v2014 = vrot.slane %v2010, %v2013
        %v2015 = vlaneseq
        %v2016 = vshrl.u32 %v2015, 7
        %v2017 = vsub.s32 1, %v2016
        %v2018 = vrot.slane %v2010, %v2017
        %vm2019 = vcmp.eq.s32.totalorder %v2014, 1
        %vm2020 = vcmp.eq.s32.totalorder %v2018, 1
        %v2021 = vsel %vm2019, %v987, 0.0
        %v2022 = vsel %vm2020, %v988, 0.0
        %v2023 = vld [vmem:[%s5] sm:$0xf]
        %2025 = vset.pattern.permute.xlu0 41
        %2026 = vperm.xlu0 %2025, %v2023
        %v2027 = vpop.permute.xlu0 %2026
        %v2030 = vunpack.c.l.s4 839922192
        %v2031 = vunpack.c.0.s8 %v2030
        %v2032 = vlaneseq
        %v2033 = vshrl.u32 %v2032, 7
        %v2034 = vsub.s32 %v2031, %v2033
        %v2035 = vrot.slane %v2027, %v2034
        %v2037 = vcombine.high %v2035, %v2035
        %v2039 = vmul.f32 %v2021, %v2035
        %v2040 = vmul.f32 %v2022, %v2037
        %v2041 = vadd.f32 %v1906, %v2039
        %v2042 = vadd.f32 %v1907, %v2040
        %vm2043 = vmand %vm450, %vm451
        %v2044 = vsel %vm2043, 1, 0
        %v2045 = vlaneseq
        %v2046 = vshrl.u32 %v2045, 7
        %v2047 = vsub.s32 0, %v2046
        %v2048 = vrot.slane %v2044, %v2047
        %v2049 = vlaneseq
        %v2050 = vshrl.u32 %v2049, 7
        %v2051 = vsub.s32 1, %v2050
        %v2052 = vrot.slane %v2044, %v2051
        %vm2053 = vcmp.eq.s32.totalorder %v2048, 1
        %vm2054 = vcmp.eq.s32.totalorder %v2052, 1
        %v2055 = vsel %vm2053, %v1028, 0.0
        %v2056 = vsel %vm2054, %v1029, 0.0
        %v2057 = vld [vmem:[%s5] sm:$0xf]
        %2059 = vset.pattern.permute.xlu0 42
        %2060 = vperm.xlu0 %2059, %v2057
        %v2061 = vpop.permute.xlu0 %2060
        %v2064 = vunpack.c.l.s4 839922192
        %v2065 = vunpack.c.0.s8 %v2064
        %v2066 = vlaneseq
        %v2067 = vshrl.u32 %v2066, 7
        %v2068 = vsub.s32 %v2065, %v2067
        %v2069 = vrot.slane %v2061, %v2068
        %v2071 = vcombine.high %v2069, %v2069
        %v2073 = vmul.f32 %v2055, %v2069
        %v2074 = vmul.f32 %v2056, %v2071
        %v2075 = vadd.f32 %v1939, %v2073
        %v2076 = vadd.f32 %v1940, %v2074
        %vm2077 = vmand %vm450, %vm452
        %v2078 = vsel %vm2077, 1, 0
        %v2079 = vlaneseq
        %v2080 = vshrl.u32 %v2079, 7
        %v2081 = vsub.s32 0, %v2080
        %v2082 = vrot.slane %v2078, %v2081
        %v2083 = vlaneseq
        %v2084 = vshrl.u32 %v2083, 7
        %v2085 = vsub.s32 1, %v2084
        %v2086 = vrot.slane %v2078, %v2085
        %vm2087 = vcmp.eq.s32.totalorder %v2082, 1
        %vm2088 = vcmp.eq.s32.totalorder %v2086, 1
        %v2089 = vsel %vm2087, %v1069, 0.0
        %v2090 = vsel %vm2088, %v1070, 0.0
        %v2091 = vld [vmem:[%s5] sm:$0xf]
        %2093 = vset.pattern.permute.xlu0 43
        %2094 = vperm.xlu0 %2093, %v2091
        %v2095 = vpop.permute.xlu0 %2094
        %v2098 = vunpack.c.l.s4 839922192
        %v2099 = vunpack.c.0.s8 %v2098
        %v2100 = vlaneseq
        %v2101 = vshrl.u32 %v2100, 7
        %v2102 = vsub.s32 %v2099, %v2101
        %v2103 = vrot.slane %v2095, %v2102
        %v2105 = vcombine.high %v2103, %v2103
        %v2107 = vmul.f32 %v2089, %v2103
        %v2108 = vmul.f32 %v2090, %v2105
        %v2109 = vadd.f32 %v1973, %v2107
        %v2110 = vadd.f32 %v1974, %v2108
        %vm2111 = vmand %vm450, %vm453
        %v2112 = vsel %vm2111, 1, 0
        %v2113 = vlaneseq
        %v2114 = vshrl.u32 %v2113, 7
        %v2115 = vsub.s32 0, %v2114
        %v2116 = vrot.slane %v2112, %v2115
        %v2117 = vlaneseq
        %v2118 = vshrl.u32 %v2117, 7
        %v2119 = vsub.s32 1, %v2118
        %v2120 = vrot.slane %v2112, %v2119
        %vm2121 = vcmp.eq.s32.totalorder %v2116, 1
        %vm2122 = vcmp.eq.s32.totalorder %v2120, 1
        %v2123 = vsel %vm2121, %v1110, 0.0
        %v2124 = vsel %vm2122, %v1111, 0.0
        %v2125 = vld [vmem:[%s5] sm:$0xf]
        %2127 = vset.pattern.permute.xlu0 44
        %2128 = vperm.xlu0 %2127, %v2125
        %v2129 = vpop.permute.xlu0 %2128
        %v2132 = vunpack.c.l.s4 839922192
        %v2133 = vunpack.c.0.s8 %v2132
        %v2134 = vlaneseq
        %v2135 = vshrl.u32 %v2134, 7
        %v2136 = vsub.s32 %v2133, %v2135
        %v2137 = vrot.slane %v2129, %v2136
        %v2139 = vcombine.high %v2137, %v2137
        %v2141 = vmul.f32 %v2123, %v2137
        %v2142 = vmul.f32 %v2124, %v2139
        %v2143 = vadd.f32 %v2007, %v2141
        %v2144 = vadd.f32 %v2008, %v2142
        %v2145 = vsel %vm450, 1, 0
        %v2146 = vlaneseq
        %v2147 = vshrl.u32 %v2146, 7
        %v2148 = vsub.s32 0, %v2147
        %v2149 = vrot.slane %v2145, %v2148
        %v2150 = vlaneseq
        %v2151 = vshrl.u32 %v2150, 7
        %v2152 = vsub.s32 1, %v2151
        %v2153 = vrot.slane %v2145, %v2152
        %vm2154 = vcmp.eq.s32.totalorder %v2149, 1
        %vm2155 = vcmp.eq.s32.totalorder %v2153, 1
        %v2156 = vsel %vm2154, %v1151, 0.0
        %v2157 = vsel %vm2155, %v1152, 0.0
        %v2158 = vld [vmem:[%s5] sm:$0xf]
        %2160 = vset.pattern.permute.xlu0 45
        %2161 = vperm.xlu0 %2160, %v2158
        %v2162 = vpop.permute.xlu0 %2161
        %v2165 = vunpack.c.l.s4 839922192
        %v2166 = vunpack.c.0.s8 %v2165
        %v2167 = vlaneseq
        %v2168 = vshrl.u32 %v2167, 7
        %v2169 = vsub.s32 %v2166, %v2168
        %v2170 = vrot.slane %v2162, %v2169
        %v2172 = vcombine.high %v2170, %v2170
        %v2174 = vmul.f32 %v2156, %v2170
        %v2175 = vmul.f32 %v2157, %v2172
        %v2176 = vadd.f32 %v2041, %v2174
        %v2177 = vadd.f32 %v2042, %v2175
        %vm2178 = vmand %vm450, %vm454
        %v2179 = vsel %vm2178, 1, 0
        %v2180 = vlaneseq
        %v2181 = vshrl.u32 %v2180, 7
        %v2182 = vsub.s32 0, %v2181
        %v2183 = vrot.slane %v2179, %v2182
        %v2184 = vlaneseq
        %v2185 = vshrl.u32 %v2184, 7
        %v2186 = vsub.s32 1, %v2185
        %v2187 = vrot.slane %v2179, %v2186
        %vm2188 = vcmp.eq.s32.totalorder %v2183, 1
        %vm2189 = vcmp.eq.s32.totalorder %v2187, 1
        %v2190 = vsel %vm2188, %v1191, 0.0
        %v2191 = vsel %vm2189, %v1192, 0.0
        %v2192 = vld [vmem:[%s5] sm:$0xf]
        %2194 = vset.pattern.permute.xlu0 46
        %2195 = vperm.xlu0 %2194, %v2192
        %v2196 = vpop.permute.xlu0 %2195
        %v2199 = vunpack.c.l.s4 839922192
        %v2200 = vunpack.c.0.s8 %v2199
        %v2201 = vlaneseq
        %v2202 = vshrl.u32 %v2201, 7
        %v2203 = vsub.s32 %v2200, %v2202
        %v2204 = vrot.slane %v2196, %v2203
        %v2206 = vcombine.high %v2204, %v2204
        %v2208 = vmul.f32 %v2190, %v2204
        %v2209 = vmul.f32 %v2191, %v2206
        %v2210 = vadd.f32 %v2075, %v2208
        %v2211 = vadd.f32 %v2076, %v2209
        %vm2212 = vmand %vm450, %vm455
        %v2213 = vsel %vm2212, 1, 0
        %v2214 = vlaneseq
        %v2215 = vshrl.u32 %v2214, 7
        %v2216 = vsub.s32 0, %v2215
        %v2217 = vrot.slane %v2213, %v2216
        %v2218 = vlaneseq
        %v2219 = vshrl.u32 %v2218, 7
        %v2220 = vsub.s32 1, %v2219
        %v2221 = vrot.slane %v2213, %v2220
        %vm2222 = vcmp.eq.s32.totalorder %v2217, 1
        %vm2223 = vcmp.eq.s32.totalorder %v2221, 1
        %v2224 = vsel %vm2222, %v1232, 0.0
        %v2225 = vsel %vm2223, %v1233, 0.0
        %v2226 = vld [vmem:[%s5] sm:$0xf]
        %2228 = vset.pattern.permute.xlu0 47
        %2229 = vperm.xlu0 %2228, %v2226
        %v2230 = vpop.permute.xlu0 %2229
        %v2233 = vunpack.c.l.s4 839922192
        %v2234 = vunpack.c.0.s8 %v2233
        %v2235 = vlaneseq
        %v2236 = vshrl.u32 %v2235, 7
        %v2237 = vsub.s32 %v2234, %v2236
        %v2238 = vrot.slane %v2230, %v2237
        %v2240 = vcombine.high %v2238, %v2238
        %v2242 = vmul.f32 %v2224, %v2238
        %v2243 = vmul.f32 %v2225, %v2240
        %v2244 = vadd.f32 %v2109, %v2242
        %v2245 = vadd.f32 %v2110, %v2243
        %vm2246 = vmand %vm450, %vm456
        %v2247 = vsel %vm2246, 1, 0
        %v2248 = vlaneseq
        %v2249 = vshrl.u32 %v2248, 7
        %v2250 = vsub.s32 0, %v2249
        %v2251 = vrot.slane %v2247, %v2250
        %v2252 = vlaneseq
        %v2253 = vshrl.u32 %v2252, 7
        %v2254 = vsub.s32 1, %v2253
        %v2255 = vrot.slane %v2247, %v2254
        %vm2256 = vcmp.eq.s32.totalorder %v2251, 1
        %vm2257 = vcmp.eq.s32.totalorder %v2255, 1
        %v2258 = vsel %vm2256, %v1273, 0.0
        %v2259 = vsel %vm2257, %v1274, 0.0
        %v2260 = vld [vmem:[%s5] sm:$0xf]
        %2262 = vset.pattern.permute.xlu0 48
        %2263 = vperm.xlu0 %2262, %v2260
        %v2264 = vpop.permute.xlu0 %2263
        %v2267 = vunpack.c.l.s4 839922192
        %v2268 = vunpack.c.0.s8 %v2267
        %v2269 = vlaneseq
        %v2270 = vshrl.u32 %v2269, 7
        %v2271 = vsub.s32 %v2268, %v2270
        %v2272 = vrot.slane %v2264, %v2271
        %v2274 = vcombine.high %v2272, %v2272
        %v2276 = vmul.f32 %v2258, %v2272
        %v2277 = vmul.f32 %v2259, %v2274
        %v2278 = vadd.f32 %v2143, %v2276
        %v2279 = vadd.f32 %v2144, %v2277
        %v2280 = vld [vmem:[%s6] sm:$0xf]
        %v2281 = vadd.f32 %v2278, %v2176
        %v2282 = vadd.f32 %v2279, %v2177
        %v2283 = vadd.f32 %v2281, %v2210
        %v2284 = vadd.f32 %v2282, %v2211
        %v2285 = vadd.f32 %v2283, %v2244
        %v2286 = vadd.f32 %v2284, %v2245
        %2288 = vset.pattern.permute.xlu0 0
        %2289 = vperm.xlu0 %2288, %v2280
        %v2290 = vpop.permute.xlu0 %2289
        %v2292 = vadd.f32 %v2285, %v2290
        %v2293 = vadd.f32 %v2286, %v2290
        %2294 = vst [vmem:[#allocation3] sm:$0xf] %v2292
        %2295 = vst [vmem:[#allocation3 + $0x8] sm:$0xf] %v2293
        %v2296 = vld [vmem:[#allocation2] sm:$0xf0]
        %v2297 = vld [vmem:[#allocation2 + $0x8] sm:$0xf0]
        %vm2298 = vcmp.ge.s32.totalorder %v332, 12
        %vm2299 = vcmp.ge.s32.totalorder %v332, 8
        %vm2300 = vcmp.lt.s32.totalorder %v332, 8
        %vm2301 = vcmp.lt.s32.totalorder %v332, 4
        %vm2302 = vcmp.ge.s32.totalorder %v333, 12
        %vm2303 = vcmp.ge.s32.totalorder %v333, 8
        %vm2304 = vcmp.lt.s32.totalorder %v333, 8
        %vm2305 = vcmp.lt.s32.totalorder %v333, 4
        %v2308 = vrot.slane %v2296, 4
        %v2309 = vrot.slane %v2297, 4
        %2312 = vrot.lane.b32.xlu0 %v2308, 76
        %v2313 = vpop.permute.xlu0 %2312
        %2314 = vrot.lane.b32.xlu0 %v2309, 76
        %v2315 = vpop.permute.xlu0 %2314
        %vm2316 = vcmp.lt.s32.totalorder %v462, 76
        %v2317 = vsel %vm2316, %v2313, %v2315
        %v2318 = vsel %vm2316, %v2315, %v2313
        %vm2319 = vmand %vm2298, %vm2302
        %v2320 = vsel %vm2319, 1, 0
        %v2321 = vlaneseq
        %v2322 = vshrl.u32 %v2321, 7
        %v2323 = vsub.s32 0, %v2322
        %v2324 = vrot.slane %v2320, %v2323
        %v2325 = vlaneseq
        %v2326 = vshrl.u32 %v2325, 7
        %v2327 = vsub.s32 1, %v2326
        %v2328 = vrot.slane %v2320, %v2327
        %vm2329 = vcmp.eq.s32.totalorder %v2324, 1
        %vm2330 = vcmp.eq.s32.totalorder %v2328, 1
        %v2331 = vsel %vm2329, %v2317, 0.0
        %v2332 = vsel %vm2330, %v2318, 0.0
        %v2333 = vld [vmem:[%s5] sm:$0xf]
        %2335 = vset.pattern.permute.xlu0 49
        %2336 = vperm.xlu0 %2335, %v2333
        %v2337 = vpop.permute.xlu0 %2336
        %v2340 = vunpack.c.l.s4 839922192
        %v2341 = vunpack.c.0.s8 %v2340
        %v2342 = vlaneseq
        %v2343 = vshrl.u32 %v2342, 7
        %v2344 = vsub.s32 %v2341, %v2343
        %v2345 = vrot.slane %v2337, %v2344
        %v2347 = vcombine.high %v2345, %v2345
        %v2349 = vmul.f32 %v2331, %v2345
        %v2350 = vmul.f32 %v2332, %v2347
        %2351 = vrot.lane.b32.xlu0 %v2308, 72
        %v2352 = vpop.permute.xlu0 %2351
        %2353 = vrot.lane.b32.xlu0 %v2309, 72
        %v2354 = vpop.permute.xlu0 %2353
        %vm2355 = vcmp.lt.s32.totalorder %v462, 72
        %v2356 = vsel %vm2355, %v2352, %v2354
        %v2357 = vsel %vm2355, %v2354, %v2352
        %vm2358 = vmand %vm2298, %vm2303
        %v2359 = vsel %vm2358, 1, 0
        %v2360 = vlaneseq
        %v2361 = vshrl.u32 %v2360, 7
        %v2362 = vsub.s32 0, %v2361
        %v2363 = vrot.slane %v2359, %v2362
        %v2364 = vlaneseq
        %v2365 = vshrl.u32 %v2364, 7
        %v2366 = vsub.s32 1, %v2365
        %v2367 = vrot.slane %v2359, %v2366
        %vm2368 = vcmp.eq.s32.totalorder %v2363, 1
        %vm2369 = vcmp.eq.s32.totalorder %v2367, 1
        %v2370 = vsel %vm2368, %v2356, 0.0
        %v2371 = vsel %vm2369, %v2357, 0.0
        %v2372 = vld [vmem:[%s5] sm:$0xf]
        %2374 = vset.pattern.permute.xlu0 50
        %2375 = vperm.xlu0 %2374, %v2372
        %v2376 = vpop.permute.xlu0 %2375
        %v2379 = vunpack.c.l.s4 839922192
        %v2380 = vunpack.c.0.s8 %v2379
        %v2381 = vlaneseq
        %v2382 = vshrl.u32 %v2381, 7
        %v2383 = vsub.s32 %v2380, %v2382
        %v2384 = vrot.slane %v2376, %v2383
        %v2386 = vcombine.high %v2384, %v2384
        %v2388 = vmul.f32 %v2370, %v2384
        %v2389 = vmul.f32 %v2371, %v2386
        %2390 = vrot.lane.b32.xlu0 %v2308, 68
        %v2391 = vpop.permute.xlu0 %2390
        %2392 = vrot.lane.b32.xlu0 %v2309, 68
        %v2393 = vpop.permute.xlu0 %2392
        %v2394 = vsel %vm782, %v2391, %v2393
        %v2395 = vsel %vm782, %v2393, %v2391
        %vm2396 = vmand %vm2298, %vm452
        %v2397 = vsel %vm2396, 1, 0
        %v2398 = vlaneseq
        %v2399 = vshrl.u32 %v2398, 7
        %v2400 = vsub.s32 0, %v2399
        %v2401 = vrot.slane %v2397, %v2400
        %v2402 = vlaneseq
        %v2403 = vshrl.u32 %v2402, 7
        %v2404 = vsub.s32 1, %v2403
        %v2405 = vrot.slane %v2397, %v2404
        %vm2406 = vcmp.eq.s32.totalorder %v2401, 1
        %vm2407 = vcmp.eq.s32.totalorder %v2405, 1
        %v2408 = vsel %vm2406, %v2394, 0.0
        %v2409 = vsel %vm2407, %v2395, 0.0
        %v2410 = vld [vmem:[%s5] sm:$0xf]
        %2412 = vset.pattern.permute.xlu0 51
        %2413 = vperm.xlu0 %2412, %v2410
        %v2414 = vpop.permute.xlu0 %2413
        %v2417 = vunpack.c.l.s4 839922192
        %v2418 = vunpack.c.0.s8 %v2417
        %v2419 = vlaneseq
        %v2420 = vshrl.u32 %v2419, 7
        %v2421 = vsub.s32 %v2418, %v2420
        %v2422 = vrot.slane %v2414, %v2421
        %v2424 = vcombine.high %v2422, %v2422
        %v2426 = vmul.f32 %v2408, %v2422
        %v2427 = vmul.f32 %v2409, %v2424
        %2428 = vrot.lane.b32.xlu0 %v2308, 64
        %v2429 = vpop.permute.xlu0 %2428
        %2430 = vrot.lane.b32.xlu0 %v2309, 64
        %v2431 = vpop.permute.xlu0 %2430
        %v2432 = vsel %vm864, %v2429, %v2431
        %v2433 = vsel %vm864, %v2431, %v2429
        %v2434 = vsel %vm2298, 1, 0
        %v2435 = vlaneseq
        %v2436 = vshrl.u32 %v2435, 7
        %v2437 = vsub.s32 0, %v2436
        %v2438 = vrot.slane %v2434, %v2437
        %v2439 = vlaneseq
        %v2440 = vshrl.u32 %v2439, 7
        %v2441 = vsub.s32 1, %v2440
        %v2442 = vrot.slane %v2434, %v2441
        %vm2443 = vcmp.eq.s32.totalorder %v2438, 1
        %vm2444 = vcmp.eq.s32.totalorder %v2442, 1
        %v2445 = vsel %vm2443, %v2432, 0.0
        %v2446 = vsel %vm2444, %v2433, 0.0
        %v2447 = vld [vmem:[%s5] sm:$0xf]
        %2449 = vset.pattern.permute.xlu0 52
        %2450 = vperm.xlu0 %2449, %v2447
        %v2451 = vpop.permute.xlu0 %2450
        %v2454 = vunpack.c.l.s4 839922192
        %v2455 = vunpack.c.0.s8 %v2454
        %v2456 = vlaneseq
        %v2457 = vshrl.u32 %v2456, 7
        %v2458 = vsub.s32 %v2455, %v2457
        %v2459 = vrot.slane %v2451, %v2458
        %v2461 = vcombine.high %v2459, %v2459
        %v2463 = vmul.f32 %v2445, %v2459
        %v2464 = vmul.f32 %v2446, %v2461
        %2465 = vrot.lane.b32.xlu0 %v2308, 60
        %v2466 = vpop.permute.xlu0 %2465
        %2467 = vrot.lane.b32.xlu0 %v2309, 60
        %v2468 = vpop.permute.xlu0 %2467
        %v2469 = vsel %vm945, %v2466, %v2468
        %v2470 = vsel %vm945, %v2468, %v2466
        %vm2471 = vmand %vm2298, %vm455
        %v2472 = vsel %vm2471, 1, 0
        %v2473 = vlaneseq
        %v2474 = vshrl.u32 %v2473, 7
        %v2475 = vsub.s32 0, %v2474
        %v2476 = vrot.slane %v2472, %v2475
        %v2477 = vlaneseq
        %v2478 = vshrl.u32 %v2477, 7
        %v2479 = vsub.s32 1, %v2478
        %v2480 = vrot.slane %v2472, %v2479
        %vm2481 = vcmp.eq.s32.totalorder %v2476, 1
        %vm2482 = vcmp.eq.s32.totalorder %v2480, 1
        %v2483 = vsel %vm2481, %v2469, 0.0
        %v2484 = vsel %vm2482, %v2470, 0.0
        %v2485 = vld [vmem:[%s5] sm:$0xf]
        %2487 = vset.pattern.permute.xlu0 53
        %2488 = vperm.xlu0 %2487, %v2485
        %v2489 = vpop.permute.xlu0 %2488
        %v2492 = vunpack.c.l.s4 839922192
        %v2493 = vunpack.c.0.s8 %v2492
        %v2494 = vlaneseq
        %v2495 = vshrl.u32 %v2494, 7
        %v2496 = vsub.s32 %v2493, %v2495
        %v2497 = vrot.slane %v2489, %v2496
        %v2499 = vcombine.high %v2497, %v2497
        %v2501 = vmul.f32 %v2483, %v2497
        %v2502 = vmul.f32 %v2484, %v2499
        %v2503 = vadd.f32 %v2349, %v2501
        %v2504 = vadd.f32 %v2350, %v2502
        %2505 = vrot.lane.b32.xlu0 %v2308, 56
        %v2506 = vpop.permute.xlu0 %2505
        %2507 = vrot.lane.b32.xlu0 %v2309, 56
        %v2508 = vpop.permute.xlu0 %2507
        %vm2509 = vcmp.lt.s32.totalorder %v462, 56
        %v2510 = vsel %vm2509, %v2506, %v2508
        %v2511 = vsel %vm2509, %v2508, %v2506
        %vm2512 = vmand %vm2298, %vm2304
        %v2513 = vsel %vm2512, 1, 0
        %v2514 = vlaneseq
        %v2515 = vshrl.u32 %v2514, 7
        %v2516 = vsub.s32 0, %v2515
        %v2517 = vrot.slane %v2513, %v2516
        %v2518 = vlaneseq
        %v2519 = vshrl.u32 %v2518, 7
        %v2520 = vsub.s32 1, %v2519
        %v2521 = vrot.slane %v2513, %v2520
        %vm2522 = vcmp.eq.s32.totalorder %v2517, 1
        %vm2523 = vcmp.eq.s32.totalorder %v2521, 1
        %v2524 = vsel %vm2522, %v2510, 0.0
        %v2525 = vsel %vm2523, %v2511, 0.0
        %v2526 = vld [vmem:[%s5] sm:$0xf]
        %2528 = vset.pattern.permute.xlu0 54
        %2529 = vperm.xlu0 %2528, %v2526
        %v2530 = vpop.permute.xlu0 %2529
        %v2533 = vunpack.c.l.s4 839922192
        %v2534 = vunpack.c.0.s8 %v2533
        %v2535 = vlaneseq
        %v2536 = vshrl.u32 %v2535, 7
        %v2537 = vsub.s32 %v2534, %v2536
        %v2538 = vrot.slane %v2530, %v2537
        %v2540 = vcombine.high %v2538, %v2538
        %v2542 = vmul.f32 %v2524, %v2538
        %v2543 = vmul.f32 %v2525, %v2540
        %v2544 = vadd.f32 %v2388, %v2542
        %v2545 = vadd.f32 %v2389, %v2543
        %2546 = vrot.lane.b32.xlu0 %v2308, 52
        %v2547 = vpop.permute.xlu0 %2546
        %2548 = vrot.lane.b32.xlu0 %v2309, 52
        %v2549 = vpop.permute.xlu0 %2548
        %vm2550 = vcmp.lt.s32.totalorder %v462, 52
        %v2551 = vsel %vm2550, %v2547, %v2549
        %v2552 = vsel %vm2550, %v2549, %v2547
        %vm2553 = vmand %vm2298, %vm2305
        %v2554 = vsel %vm2553, 1, 0
        %v2555 = vlaneseq
        %v2556 = vshrl.u32 %v2555, 7
        %v2557 = vsub.s32 0, %v2556
        %v2558 = vrot.slane %v2554, %v2557
        %v2559 = vlaneseq
        %v2560 = vshrl.u32 %v2559, 7
        %v2561 = vsub.s32 1, %v2560
        %v2562 = vrot.slane %v2554, %v2561
        %vm2563 = vcmp.eq.s32.totalorder %v2558, 1
        %vm2564 = vcmp.eq.s32.totalorder %v2562, 1
        %v2565 = vsel %vm2563, %v2551, 0.0
        %v2566 = vsel %vm2564, %v2552, 0.0
        %v2567 = vld [vmem:[%s5] sm:$0xf]
        %2569 = vset.pattern.permute.xlu0 55
        %2570 = vperm.xlu0 %2569, %v2567
        %v2571 = vpop.permute.xlu0 %2570
        %v2574 = vunpack.c.l.s4 839922192
        %v2575 = vunpack.c.0.s8 %v2574
        %v2576 = vlaneseq
        %v2577 = vshrl.u32 %v2576, 7
        %v2578 = vsub.s32 %v2575, %v2577
        %v2579 = vrot.slane %v2571, %v2578
        %v2581 = vcombine.high %v2579, %v2579
        %v2583 = vmul.f32 %v2565, %v2579
        %v2584 = vmul.f32 %v2566, %v2581
        %v2585 = vadd.f32 %v2426, %v2583
        %v2586 = vadd.f32 %v2427, %v2584
        %2587 = vrot.lane.b32.xlu0 %v2308, 12
        %v2588 = vpop.permute.xlu0 %2587
        %2589 = vrot.lane.b32.xlu0 %v2309, 12
        %v2590 = vpop.permute.xlu0 %2589
        %vm2591 = vcmp.lt.s32.totalorder %v462, 12
        %v2592 = vsel %vm2591, %v2588, %v2590
        %v2593 = vsel %vm2591, %v2590, %v2588
        %vm2594 = vmand %vm2299, %vm2302
        %v2595 = vsel %vm2594, 1, 0
        %v2596 = vlaneseq
        %v2597 = vshrl.u32 %v2596, 7
        %v2598 = vsub.s32 0, %v2597
        %v2599 = vrot.slane %v2595, %v2598
        %v2600 = vlaneseq
        %v2601 = vshrl.u32 %v2600, 7
        %v2602 = vsub.s32 1, %v2601
        %v2603 = vrot.slane %v2595, %v2602
        %vm2604 = vcmp.eq.s32.totalorder %v2599, 1
        %vm2605 = vcmp.eq.s32.totalorder %v2603, 1
        %v2606 = vsel %vm2604, %v2592, 0.0
        %v2607 = vsel %vm2605, %v2593, 0.0
        %v2608 = vld [vmem:[%s5] sm:$0xf]
        %2610 = vset.pattern.permute.xlu0 56
        %2611 = vperm.xlu0 %2610, %v2608
        %v2612 = vpop.permute.xlu0 %2611
        %v2615 = vunpack.c.l.s4 839922192
        %v2616 = vunpack.c.0.s8 %v2615
        %v2617 = vlaneseq
        %v2618 = vshrl.u32 %v2617, 7
        %v2619 = vsub.s32 %v2616, %v2618
        %v2620 = vrot.slane %v2612, %v2619
        %v2622 = vcombine.high %v2620, %v2620
        %v2624 = vmul.f32 %v2606, %v2620
        %v2625 = vmul.f32 %v2607, %v2622
        %v2626 = vadd.f32 %v2463, %v2624
        %v2627 = vadd.f32 %v2464, %v2625
        %2628 = vrot.lane.b32.xlu0 %v2308, 8
        %v2629 = vpop.permute.xlu0 %2628
        %2630 = vrot.lane.b32.xlu0 %v2309, 8
        %v2631 = vpop.permute.xlu0 %2630
        %vm2632 = vcmp.lt.s32.totalorder %v462, 8
        %v2633 = vsel %vm2632, %v2629, %v2631
        %v2634 = vsel %vm2632, %v2631, %v2629
        %vm2635 = vmand %vm2299, %vm2303
        %v2636 = vsel %vm2635, 1, 0
        %v2637 = vlaneseq
        %v2638 = vshrl.u32 %v2637, 7
        %v2639 = vsub.s32 0, %v2638
        %v2640 = vrot.slane %v2636, %v2639
        %v2641 = vlaneseq
        %v2642 = vshrl.u32 %v2641, 7
        %v2643 = vsub.s32 1, %v2642
        %v2644 = vrot.slane %v2636, %v2643
        %vm2645 = vcmp.eq.s32.totalorder %v2640, 1
        %vm2646 = vcmp.eq.s32.totalorder %v2644, 1
        %v2647 = vsel %vm2645, %v2633, 0.0
        %v2648 = vsel %vm2646, %v2634, 0.0
        %v2649 = vld [vmem:[%s5] sm:$0xf]
        %2651 = vset.pattern.permute.xlu0 57
        %2652 = vperm.xlu0 %2651, %v2649
        %v2653 = vpop.permute.xlu0 %2652
        %v2656 = vunpack.c.l.s4 839922192
        %v2657 = vunpack.c.0.s8 %v2656
        %v2658 = vlaneseq
        %v2659 = vshrl.u32 %v2658, 7
        %v2660 = vsub.s32 %v2657, %v2659
        %v2661 = vrot.slane %v2653, %v2660
        %v2663 = vcombine.high %v2661, %v2661
        %v2665 = vmul.f32 %v2647, %v2661
        %v2666 = vmul.f32 %v2648, %v2663
        %v2667 = vadd.f32 %v2503, %v2665
        %v2668 = vadd.f32 %v2504, %v2666
        %2669 = vrot.lane.b32.xlu0 %v2308, 4
        %v2670 = vpop.permute.xlu0 %2669
        %2671 = vrot.lane.b32.xlu0 %v2309, 4
        %v2672 = vpop.permute.xlu0 %2671
        %v2673 = vsel %vm1353, %v2670, %v2672
        %v2674 = vsel %vm1353, %v2672, %v2670
        %vm2675 = vmand %vm2299, %vm452
        %v2676 = vsel %vm2675, 1, 0
        %v2677 = vlaneseq
        %v2678 = vshrl.u32 %v2677, 7
        %v2679 = vsub.s32 0, %v2678
        %v2680 = vrot.slane %v2676, %v2679
        %v2681 = vlaneseq
        %v2682 = vshrl.u32 %v2681, 7
        %v2683 = vsub.s32 1, %v2682
        %v2684 = vrot.slane %v2676, %v2683
        %vm2685 = vcmp.eq.s32.totalorder %v2680, 1
        %vm2686 = vcmp.eq.s32.totalorder %v2684, 1
        %v2687 = vsel %vm2685, %v2673, 0.0
        %v2688 = vsel %vm2686, %v2674, 0.0
        %v2689 = vld [vmem:[%s5] sm:$0xf]
        %2691 = vset.pattern.permute.xlu0 58
        %2692 = vperm.xlu0 %2691, %v2689
        %v2693 = vpop.permute.xlu0 %2692
        %v2696 = vunpack.c.l.s4 839922192
        %v2697 = vunpack.c.0.s8 %v2696
        %v2698 = vlaneseq
        %v2699 = vshrl.u32 %v2698, 7
        %v2700 = vsub.s32 %v2697, %v2699
        %v2701 = vrot.slane %v2693, %v2700
        %v2703 = vcombine.high %v2701, %v2701
        %v2705 = vmul.f32 %v2687, %v2701
        %v2706 = vmul.f32 %v2688, %v2703
        %v2707 = vadd.f32 %v2544, %v2705
        %v2708 = vadd.f32 %v2545, %v2706
        %v2709 = vsel %vm2299, 1, 0
        %v2710 = vlaneseq
        %v2711 = vshrl.u32 %v2710, 7
        %v2712 = vsub.s32 0, %v2711
        %v2713 = vrot.slane %v2709, %v2712
        %v2714 = vlaneseq
        %v2715 = vshrl.u32 %v2714, 7
        %v2716 = vsub.s32 1, %v2715
        %v2717 = vrot.slane %v2709, %v2716
        %vm2718 = vcmp.eq.s32.totalorder %v2713, 1
        %vm2719 = vcmp.eq.s32.totalorder %v2717, 1
        %v2720 = vsel %vm2718, %v2309, 0.0
        %v2721 = vsel %vm2719, %v2308, 0.0
        %v2722 = vld [vmem:[%s5] sm:$0xf]
        %2724 = vset.pattern.permute.xlu0 59
        %2725 = vperm.xlu0 %2724, %v2722
        %v2726 = vpop.permute.xlu0 %2725
        %v2729 = vunpack.c.l.s4 839922192
        %v2730 = vunpack.c.0.s8 %v2729
        %v2731 = vlaneseq
        %v2732 = vshrl.u32 %v2731, 7
        %v2733 = vsub.s32 %v2730, %v2732
        %v2734 = vrot.slane %v2726, %v2733
        %v2736 = vcombine.high %v2734, %v2734
        %v2738 = vmul.f32 %v2720, %v2734
        %v2739 = vmul.f32 %v2721, %v2736
        %v2740 = vadd.f32 %v2585, %v2738
        %v2741 = vadd.f32 %v2586, %v2739
        %2742 = vrot.lane.b32.xlu0 %v2308, 124
        %v2743 = vpop.permute.xlu0 %2742
        %2744 = vrot.lane.b32.xlu0 %v2309, 124
        %v2745 = vpop.permute.xlu0 %2744
        %v2746 = vsel %vm1493, %v2743, %v2745
        %v2747 = vsel %vm1493, %v2745, %v2743
        %vm2748 = vmand %vm2299, %vm455
        %v2749 = vsel %vm2748, 1, 0
        %v2750 = vlaneseq
        %v2751 = vshrl.u32 %v2750, 7
        %v2752 = vsub.s32 0, %v2751
        %v2753 = vrot.slane %v2749, %v2752
        %v2754 = vlaneseq
        %v2755 = vshrl.u32 %v2754, 7
        %v2756 = vsub.s32 1, %v2755
        %v2757 = vrot.slane %v2749, %v2756
        %vm2758 = vcmp.eq.s32.totalorder %v2753, 1
        %vm2759 = vcmp.eq.s32.totalorder %v2757, 1
        %v2760 = vsel %vm2758, %v2747, 0.0
        %v2761 = vsel %vm2759, %v2746, 0.0
        %v2762 = vld [vmem:[%s5] sm:$0xf]
        %2764 = vset.pattern.permute.xlu0 60
        %2765 = vperm.xlu0 %2764, %v2762
        %v2766 = vpop.permute.xlu0 %2765
        %v2769 = vunpack.c.l.s4 839922192
        %v2770 = vunpack.c.0.s8 %v2769
        %v2771 = vlaneseq
        %v2772 = vshrl.u32 %v2771, 7
        %v2773 = vsub.s32 %v2770, %v2772
        %v2774 = vrot.slane %v2766, %v2773
        %v2776 = vcombine.high %v2774, %v2774
        %v2778 = vmul.f32 %v2760, %v2774
        %v2779 = vmul.f32 %v2761, %v2776
        %v2780 = vadd.f32 %v2626, %v2778
        %v2781 = vadd.f32 %v2627, %v2779
        %2782 = vrot.lane.b32.xlu0 %v2308, 120
        %v2783 = vpop.permute.xlu0 %2782
        %2784 = vrot.lane.b32.xlu0 %v2309, 120
        %v2785 = vpop.permute.xlu0 %2784
        %vm2786 = vcmp.lt.s32.totalorder %v462, 120
        %v2787 = vsel %vm2786, %v2783, %v2785
        %v2788 = vsel %vm2786, %v2785, %v2783
        %vm2789 = vmand %vm2299, %vm2304
        %v2790 = vsel %vm2789, 1, 0
        %v2791 = vlaneseq
        %v2792 = vshrl.u32 %v2791, 7
        %v2793 = vsub.s32 0, %v2792
        %v2794 = vrot.slane %v2790, %v2793
        %v2795 = vlaneseq
        %v2796 = vshrl.u32 %v2795, 7
        %v2797 = vsub.s32 1, %v2796
        %v2798 = vrot.slane %v2790, %v2797
        %vm2799 = vcmp.eq.s32.totalorder %v2794, 1
        %vm2800 = vcmp.eq.s32.totalorder %v2798, 1
        %v2801 = vsel %vm2799, %v2788, 0.0
        %v2802 = vsel %vm2800, %v2787, 0.0
        %v2803 = vld [vmem:[%s5] sm:$0xf]
        %2805 = vset.pattern.permute.xlu0 61
        %2806 = vperm.xlu0 %2805, %v2803
        %v2807 = vpop.permute.xlu0 %2806
        %v2810 = vunpack.c.l.s4 839922192
        %v2811 = vunpack.c.0.s8 %v2810
        %v2812 = vlaneseq
        %v2813 = vshrl.u32 %v2812, 7
        %v2814 = vsub.s32 %v2811, %v2813
        %v2815 = vrot.slane %v2807, %v2814
        %v2817 = vcombine.high %v2815, %v2815
        %v2819 = vmul.f32 %v2801, %v2815
        %v2820 = vmul.f32 %v2802, %v2817
        %v2821 = vadd.f32 %v2667, %v2819
        %v2822 = vadd.f32 %v2668, %v2820
        %2823 = vrot.lane.b32.xlu0 %v2308, 116
        %v2824 = vpop.permute.xlu0 %2823
        %2825 = vrot.lane.b32.xlu0 %v2309, 116
        %v2826 = vpop.permute.xlu0 %2825
        %vm2827 = vcmp.lt.s32.totalorder %v462, 116
        %v2828 = vsel %vm2827, %v2824, %v2826
        %v2829 = vsel %vm2827, %v2826, %v2824
        %vm2830 = vmand %vm2299, %vm2305
        %v2831 = vsel %vm2830, 1, 0
        %v2832 = vlaneseq
        %v2833 = vshrl.u32 %v2832, 7
        %v2834 = vsub.s32 0, %v2833
        %v2835 = vrot.slane %v2831, %v2834
        %v2836 = vlaneseq
        %v2837 = vshrl.u32 %v2836, 7
        %v2838 = vsub.s32 1, %v2837
        %v2839 = vrot.slane %v2831, %v2838
        %vm2840 = vcmp.eq.s32.totalorder %v2835, 1
        %vm2841 = vcmp.eq.s32.totalorder %v2839, 1
        %v2842 = vsel %vm2840, %v2829, 0.0
        %v2843 = vsel %vm2841, %v2828, 0.0
        %v2844 = vld [vmem:[%s5] sm:$0xf]
        %2846 = vset.pattern.permute.xlu0 62
        %2847 = vperm.xlu0 %2846, %v2844
        %v2848 = vpop.permute.xlu0 %2847
        %v2851 = vunpack.c.l.s4 839922192
        %v2852 = vunpack.c.0.s8 %v2851
        %v2853 = vlaneseq
        %v2854 = vshrl.u32 %v2853, 7
        %v2855 = vsub.s32 %v2852, %v2854
        %v2856 = vrot.slane %v2848, %v2855
        %v2858 = vcombine.high %v2856, %v2856
        %v2860 = vmul.f32 %v2842, %v2856
        %v2861 = vmul.f32 %v2843, %v2858
        %v2862 = vadd.f32 %v2707, %v2860
        %v2863 = vadd.f32 %v2708, %v2861
        %vm2864 = vmand %vm446, %vm2302
        %v2865 = vsel %vm2864, 1, 0
        %v2866 = vlaneseq
        %v2867 = vshrl.u32 %v2866, 7
        %v2868 = vsub.s32 0, %v2867
        %v2869 = vrot.slane %v2865, %v2868
        %v2870 = vlaneseq
        %v2871 = vshrl.u32 %v2870, 7
        %v2872 = vsub.s32 1, %v2871
        %v2873 = vrot.slane %v2865, %v2872
        %vm2874 = vcmp.eq.s32.totalorder %v2869, 1
        %vm2875 = vcmp.eq.s32.totalorder %v2873, 1
        %v2876 = vsel %vm2874, %v2318, 0.0
        %v2877 = vsel %vm2875, %v2317, 0.0
        %v2878 = vld [vmem:[%s5] sm:$0xf]
        %2880 = vset.pattern.permute.xlu0 63
        %2881 = vperm.xlu0 %2880, %v2878
        %v2882 = vpop.permute.xlu0 %2881
        %v2885 = vunpack.c.l.s4 839922192
        %v2886 = vunpack.c.0.s8 %v2885
        %v2887 = vlaneseq
        %v2888 = vshrl.u32 %v2887, 7
        %v2889 = vsub.s32 %v2886, %v2888
        %v2890 = vrot.slane %v2882, %v2889
        %v2892 = vcombine.high %v2890, %v2890
        %v2894 = vmul.f32 %v2876, %v2890
        %v2895 = vmul.f32 %v2877, %v2892
        %v2896 = vadd.f32 %v2740, %v2894
        %v2897 = vadd.f32 %v2741, %v2895
        %vm2898 = vmand %vm446, %vm2303
        %v2899 = vsel %vm2898, 1, 0
        %v2900 = vlaneseq
        %v2901 = vshrl.u32 %v2900, 7
        %v2902 = vsub.s32 0, %v2901
        %v2903 = vrot.slane %v2899, %v2902
        %v2904 = vlaneseq
        %v2905 = vshrl.u32 %v2904, 7
        %v2906 = vsub.s32 1, %v2905
        %v2907 = vrot.slane %v2899, %v2906
        %vm2908 = vcmp.eq.s32.totalorder %v2903, 1
        %vm2909 = vcmp.eq.s32.totalorder %v2907, 1
        %v2910 = vsel %vm2908, %v2357, 0.0
        %v2911 = vsel %vm2909, %v2356, 0.0
        %v2912 = vld [vmem:[%s5] sm:$0xf]
        %2914 = vset.pattern.permute.xlu0 64
        %2915 = vperm.xlu0 %2914, %v2912
        %v2916 = vpop.permute.xlu0 %2915
        %v2919 = vunpack.c.l.s4 839922192
        %v2920 = vunpack.c.0.s8 %v2919
        %v2921 = vlaneseq
        %v2922 = vshrl.u32 %v2921, 7
        %v2923 = vsub.s32 %v2920, %v2922
        %v2924 = vrot.slane %v2916, %v2923
        %v2926 = vcombine.high %v2924, %v2924
        %v2928 = vmul.f32 %v2910, %v2924
        %v2929 = vmul.f32 %v2911, %v2926
        %v2930 = vadd.f32 %v2780, %v2928
        %v2931 = vadd.f32 %v2781, %v2929
        %v2932 = vsel %vm795, %v2395, 0.0
        %v2933 = vsel %vm796, %v2394, 0.0
        %v2934 = vld [vmem:[%s5] sm:$0xf]
        %2936 = vset.pattern.permute.xlu0 65
        %2937 = vperm.xlu0 %2936, %v2934
        %v2938 = vpop.permute.xlu0 %2937
        %v2941 = vunpack.c.l.s4 839922192
        %v2942 = vunpack.c.0.s8 %v2941
        %v2943 = vlaneseq
        %v2944 = vshrl.u32 %v2943, 7
        %v2945 = vsub.s32 %v2942, %v2944
        %v2946 = vrot.slane %v2938, %v2945
        %v2948 = vcombine.high %v2946, %v2946
        %v2950 = vmul.f32 %v2932, %v2946
        %v2951 = vmul.f32 %v2933, %v2948
        %v2952 = vadd.f32 %v2821, %v2950
        %v2953 = vadd.f32 %v2822, %v2951
        %v2954 = vsel %vm876, %v2433, 0.0
        %v2955 = vsel %vm877, %v2432, 0.0
        %v2956 = vld [vmem:[%s5] sm:$0xf]
        %2958 = vset.pattern.permute.xlu0 66
        %2959 = vperm.xlu0 %2958, %v2956
        %v2960 = vpop.permute.xlu0 %2959
        %v2963 = vunpack.c.l.s4 839922192
        %v2964 = vunpack.c.0.s8 %v2963
        %v2965 = vlaneseq
        %v2966 = vshrl.u32 %v2965, 7
        %v2967 = vsub.s32 %v2964, %v2966
        %v2968 = vrot.slane %v2960, %v2967
        %v2970 = vcombine.high %v2968, %v2968
        %v2972 = vmul.f32 %v2954, %v2968
        %v2973 = vmul.f32 %v2955, %v2970
        %v2974 = vadd.f32 %v2862, %v2972
        %v2975 = vadd.f32 %v2863, %v2973
        %v2976 = vsel %vm958, %v2470, 0.0
        %v2977 = vsel %vm959, %v2469, 0.0
        %v2978 = vld [vmem:[%s5] sm:$0xf]
        %2980 = vset.pattern.permute.xlu0 67
        %2981 = vperm.xlu0 %2980, %v2978
        %v2982 = vpop.permute.xlu0 %2981
        %v2985 = vunpack.c.l.s4 839922192
        %v2986 = vunpack.c.0.s8 %v2985
        %v2987 = vlaneseq
        %v2988 = vshrl.u32 %v2987, 7
        %v2989 = vsub.s32 %v2986, %v2988
        %v2990 = vrot.slane %v2982, %v2989
        %v2992 = vcombine.high %v2990, %v2990
        %v2994 = vmul.f32 %v2976, %v2990
        %v2995 = vmul.f32 %v2977, %v2992
        %v2996 = vadd.f32 %v2896, %v2994
        %v2997 = vadd.f32 %v2897, %v2995
        %vm2998 = vmand %vm446, %vm2304
        %v2999 = vsel %vm2998, 1, 0
        %v3000 = vlaneseq
        %v3001 = vshrl.u32 %v3000, 7
        %v3002 = vsub.s32 0, %v3001
        %v3003 = vrot.slane %v2999, %v3002
        %v3004 = vlaneseq
        %v3005 = vshrl.u32 %v3004, 7
        %v3006 = vsub.s32 1, %v3005
        %v3007 = vrot.slane %v2999, %v3006
        %vm3008 = vcmp.eq.s32.totalorder %v3003, 1
        %vm3009 = vcmp.eq.s32.totalorder %v3007, 1
        %v3010 = vsel %vm3008, %v2511, 0.0
        %v3011 = vsel %vm3009, %v2510, 0.0
        %v3012 = vld [vmem:[%s5] sm:$0xf]
        %3014 = vset.pattern.permute.xlu0 68
        %3015 = vperm.xlu0 %3014, %v3012
        %v3016 = vpop.permute.xlu0 %3015
        %v3019 = vunpack.c.l.s4 839922192
        %v3020 = vunpack.c.0.s8 %v3019
        %v3021 = vlaneseq
        %v3022 = vshrl.u32 %v3021, 7
        %v3023 = vsub.s32 %v3020, %v3022
        %v3024 = vrot.slane %v3016, %v3023
        %v3026 = vcombine.high %v3024, %v3024
        %v3028 = vmul.f32 %v3010, %v3024
        %v3029 = vmul.f32 %v3011, %v3026
        %v3030 = vadd.f32 %v2930, %v3028
        %v3031 = vadd.f32 %v2931, %v3029
        %vm3032 = vmand %vm446, %vm2305
        %v3033 = vsel %vm3032, 1, 0
        %v3034 = vlaneseq
        %v3035 = vshrl.u32 %v3034, 7
        %v3036 = vsub.s32 0, %v3035
        %v3037 = vrot.slane %v3033, %v3036
        %v3038 = vlaneseq
        %v3039 = vshrl.u32 %v3038, 7
        %v3040 = vsub.s32 1, %v3039
        %v3041 = vrot.slane %v3033, %v3040
        %vm3042 = vcmp.eq.s32.totalorder %v3037, 1
        %vm3043 = vcmp.eq.s32.totalorder %v3041, 1
        %v3044 = vsel %vm3042, %v2552, 0.0
        %v3045 = vsel %vm3043, %v2551, 0.0
        %v3046 = vld [vmem:[%s5] sm:$0xf]
        %3048 = vset.pattern.permute.xlu0 69
        %3049 = vperm.xlu0 %3048, %v3046
        %v3050 = vpop.permute.xlu0 %3049
        %v3053 = vunpack.c.l.s4 839922192
        %v3054 = vunpack.c.0.s8 %v3053
        %v3055 = vlaneseq
        %v3056 = vshrl.u32 %v3055, 7
        %v3057 = vsub.s32 %v3054, %v3056
        %v3058 = vrot.slane %v3050, %v3057
        %v3060 = vcombine.high %v3058, %v3058
        %v3062 = vmul.f32 %v3044, %v3058
        %v3063 = vmul.f32 %v3045, %v3060
        %v3064 = vadd.f32 %v2952, %v3062
        %v3065 = vadd.f32 %v2953, %v3063
        %v3066 = vsel %vm2302, 1, 0
        %v3067 = vlaneseq
        %v3068 = vshrl.u32 %v3067, 7
        %v3069 = vsub.s32 0, %v3068
        %v3070 = vrot.slane %v3066, %v3069
        %v3071 = vlaneseq
        %v3072 = vshrl.u32 %v3071, 7
        %v3073 = vsub.s32 1, %v3072
        %v3074 = vrot.slane %v3066, %v3073
        %vm3075 = vcmp.eq.s32.totalorder %v3070, 1
        %vm3076 = vcmp.eq.s32.totalorder %v3074, 1
        %v3077 = vsel %vm3075, %v2593, 0.0
        %v3078 = vsel %vm3076, %v2592, 0.0
        %v3079 = vld [vmem:[%s5] sm:$0xf]
        %3081 = vset.pattern.permute.xlu0 70
        %3082 = vperm.xlu0 %3081, %v3079
        %v3083 = vpop.permute.xlu0 %3082
        %v3086 = vunpack.c.l.s4 839922192
        %v3087 = vunpack.c.0.s8 %v3086
        %v3088 = vlaneseq
        %v3089 = vshrl.u32 %v3088, 7
        %v3090 = vsub.s32 %v3087, %v3089
        %v3091 = vrot.slane %v3083, %v3090
        %v3093 = vcombine.high %v3091, %v3091
        %v3095 = vmul.f32 %v3077, %v3091
        %v3096 = vmul.f32 %v3078, %v3093
        %v3097 = vadd.f32 %v2974, %v3095
        %v3098 = vadd.f32 %v2975, %v3096
        %v3099 = vsel %vm2303, 1, 0
        %v3100 = vlaneseq
        %v3101 = vshrl.u32 %v3100, 7
        %v3102 = vsub.s32 0, %v3101
        %v3103 = vrot.slane %v3099, %v3102
        %v3104 = vlaneseq
        %v3105 = vshrl.u32 %v3104, 7
        %v3106 = vsub.s32 1, %v3105
        %v3107 = vrot.slane %v3099, %v3106
        %vm3108 = vcmp.eq.s32.totalorder %v3103, 1
        %vm3109 = vcmp.eq.s32.totalorder %v3107, 1
        %v3110 = vsel %vm3108, %v2634, 0.0
        %v3111 = vsel %vm3109, %v2633, 0.0
        %v3112 = vld [vmem:[%s5] sm:$0xf]
        %3114 = vset.pattern.permute.xlu0 71
        %3115 = vperm.xlu0 %3114, %v3112
        %v3116 = vpop.permute.xlu0 %3115
        %v3119 = vunpack.c.l.s4 839922192
        %v3120 = vunpack.c.0.s8 %v3119
        %v3121 = vlaneseq
        %v3122 = vshrl.u32 %v3121, 7
        %v3123 = vsub.s32 %v3120, %v3122
        %v3124 = vrot.slane %v3116, %v3123
        %v3126 = vcombine.high %v3124, %v3124
        %v3128 = vmul.f32 %v3110, %v3124
        %v3129 = vmul.f32 %v3111, %v3126
        %v3130 = vadd.f32 %v2996, %v3128
        %v3131 = vadd.f32 %v2997, %v3129
        %v3132 = vsel %vm1365, %v2674, 0.0
        %v3133 = vsel %vm1366, %v2673, 0.0
        %v3134 = vld [vmem:[%s5] sm:$0xf]
        %3136 = vset.pattern.permute.xlu0 72
        %3137 = vperm.xlu0 %3136, %v3134
        %v3138 = vpop.permute.xlu0 %3137
        %v3141 = vunpack.c.l.s4 839922192
        %v3142 = vunpack.c.0.s8 %v3141
        %v3143 = vlaneseq
        %v3144 = vshrl.u32 %v3143, 7
        %v3145 = vsub.s32 %v3142, %v3144
        %v3146 = vrot.slane %v3138, %v3145
        %v3148 = vcombine.high %v3146, %v3146
        %v3150 = vmul.f32 %v3132, %v3146
        %v3151 = vmul.f32 %v3133, %v3148
        %v3152 = vadd.f32 %v3030, %v3150
        %v3153 = vadd.f32 %v3031, %v3151
        %v3154 = vld [vmem:[%s5] sm:$0xf]
        %3156 = vset.pattern.permute.xlu0 73
        %3157 = vperm.xlu0 %3156, %v3154
        %v3158 = vpop.permute.xlu0 %3157
        %v3161 = vunpack.c.l.s4 839922192
        %v3162 = vunpack.c.0.s8 %v3161
        %v3163 = vlaneseq
        %v3164 = vshrl.u32 %v3163, 7
        %v3165 = vsub.s32 %v3162, %v3164
        %v3166 = vrot.slane %v3158, %v3165
        %v3168 = vcombine.low %v3166, %v3166
        %v3170 = vmul.f32 %v2296, %v3168
        %v3171 = vmul.f32 %v2297, %v3166
        %v3174 = vrot.slane %v3170, 4
        %v3175 = vrot.slane %v3171, 4
        %v3178 = vadd.f32 %v3064, %v3174
        %v3179 = vadd.f32 %v3065, %v3175
        %v3180 = vsel %vm1505, %v2746, 0.0
        %v3181 = vsel %vm1506, %v2747, 0.0
        %v3182 = vld [vmem:[%s5] sm:$0xf]
        %3184 = vset.pattern.permute.xlu0 74
        %3185 = vperm.xlu0 %3184, %v3182
        %v3186 = vpop.permute.xlu0 %3185
        %v3189 = vunpack.c.l.s4 839922192
        %v3190 = vunpack.c.0.s8 %v3189
        %v3191 = vlaneseq
        %v3192 = vshrl.u32 %v3191, 7
        %v3193 = vsub.s32 %v3190, %v3192
        %v3194 = vrot.slane %v3186, %v3193
        %v3196 = vcombine.high %v3194, %v3194
        %v3198 = vmul.f32 %v3180, %v3194
        %v3199 = vmul.f32 %v3181, %v3196
        %v3200 = vadd.f32 %v3097, %v3198
        %v3201 = vadd.f32 %v3098, %v3199
        %v3202 = vsel %vm2304, 1, 0
        %v3203 = vlaneseq
        %v3204 = vshrl.u32 %v3203, 7
        %v3205 = vsub.s32 0, %v3204
        %v3206 = vrot.slane %v3202, %v3205
        %v3207 = vlaneseq
        %v3208 = vshrl.u32 %v3207, 7
        %v3209 = vsub.s32 1, %v3208
        %v3210 = vrot.slane %v3202, %v3209
        %vm3211 = vcmp.eq.s32.totalorder %v3206, 1
        %vm3212 = vcmp.eq.s32.totalorder %v3210, 1
        %v3213 = vsel %vm3211, %v2787, 0.0
        %v3214 = vsel %vm3212, %v2788, 0.0
        %v3215 = vld [vmem:[%s5] sm:$0xf]
        %3217 = vset.pattern.permute.xlu0 75
        %3218 = vperm.xlu0 %3217, %v3215
        %v3219 = vpop.permute.xlu0 %3218
        %v3222 = vunpack.c.l.s4 839922192
        %v3223 = vunpack.c.0.s8 %v3222
        %v3224 = vlaneseq
        %v3225 = vshrl.u32 %v3224, 7
        %v3226 = vsub.s32 %v3223, %v3225
        %v3227 = vrot.slane %v3219, %v3226
        %v3229 = vcombine.high %v3227, %v3227
        %v3231 = vmul.f32 %v3213, %v3227
        %v3232 = vmul.f32 %v3214, %v3229
        %v3233 = vadd.f32 %v3130, %v3231
        %v3234 = vadd.f32 %v3131, %v3232
        %v3235 = vsel %vm2305, 1, 0
        %v3236 = vlaneseq
        %v3237 = vshrl.u32 %v3236, 7
        %v3238 = vsub.s32 0, %v3237
        %v3239 = vrot.slane %v3235, %v3238
        %v3240 = vlaneseq
        %v3241 = vshrl.u32 %v3240, 7
        %v3242 = vsub.s32 1, %v3241
        %v3243 = vrot.slane %v3235, %v3242
        %vm3244 = vcmp.eq.s32.totalorder %v3239, 1
        %vm3245 = vcmp.eq.s32.totalorder %v3243, 1
        %v3246 = vsel %vm3244, %v2828, 0.0
        %v3247 = vsel %vm3245, %v2829, 0.0
        %v3248 = vld [vmem:[%s5] sm:$0xf]
        %3250 = vset.pattern.permute.xlu0 76
        %3251 = vperm.xlu0 %3250, %v3248
        %v3252 = vpop.permute.xlu0 %3251
        %v3255 = vunpack.c.l.s4 839922192
        %v3256 = vunpack.c.0.s8 %v3255
        %v3257 = vlaneseq
        %v3258 = vshrl.u32 %v3257, 7
        %v3259 = vsub.s32 %v3256, %v3258
        %v3260 = vrot.slane %v3252, %v3259
        %v3262 = vcombine.high %v3260, %v3260
        %v3264 = vmul.f32 %v3246, %v3260
        %v3265 = vmul.f32 %v3247, %v3262
        %v3266 = vadd.f32 %v3152, %v3264
        %v3267 = vadd.f32 %v3153, %v3265
        %vm3268 = vmand %vm449, %vm2302
        %v3269 = vsel %vm3268, 1, 0
        %v3270 = vlaneseq
        %v3271 = vshrl.u32 %v3270, 7
        %v3272 = vsub.s32 0, %v3271
        %v3273 = vrot.slane %v3269, %v3272
        %v3274 = vlaneseq
        %v3275 = vshrl.u32 %v3274, 7
        %v3276 = vsub.s32 1, %v3275
        %v3277 = vrot.slane %v3269, %v3276
        %vm3278 = vcmp.eq.s32.totalorder %v3273, 1
        %vm3279 = vcmp.eq.s32.totalorder %v3277, 1
        %v3280 = vsel %vm3278, %v2317, 0.0
        %v3281 = vsel %vm3279, %v2318, 0.0
        %v3282 = vld [vmem:[%s5] sm:$0xf]
        %3284 = vset.pattern.permute.xlu0 77
        %3285 = vperm.xlu0 %3284, %v3282
        %v3286 = vpop.permute.xlu0 %3285
        %v3289 = vunpack.c.l.s4 839922192
        %v3290 = vunpack.c.0.s8 %v3289
        %v3291 = vlaneseq
        %v3292 = vshrl.u32 %v3291, 7
        %v3293 = vsub.s32 %v3290, %v3292
        %v3294 = vrot.slane %v3286, %v3293
        %v3296 = vcombine.high %v3294, %v3294
        %v3298 = vmul.f32 %v3280, %v3294
        %v3299 = vmul.f32 %v3281, %v3296
        %v3300 = vadd.f32 %v3178, %v3298
        %v3301 = vadd.f32 %v3179, %v3299
        %vm3302 = vmand %vm449, %vm2303
        %v3303 = vsel %vm3302, 1, 0
        %v3304 = vlaneseq
        %v3305 = vshrl.u32 %v3304, 7
        %v3306 = vsub.s32 0, %v3305
        %v3307 = vrot.slane %v3303, %v3306
        %v3308 = vlaneseq
        %v3309 = vshrl.u32 %v3308, 7
        %v3310 = vsub.s32 1, %v3309
        %v3311 = vrot.slane %v3303, %v3310
        %vm3312 = vcmp.eq.s32.totalorder %v3307, 1
        %vm3313 = vcmp.eq.s32.totalorder %v3311, 1
        %v3314 = vsel %vm3312, %v2356, 0.0
        %v3315 = vsel %vm3313, %v2357, 0.0
        %v3316 = vld [vmem:[%s5] sm:$0xf]
        %3318 = vset.pattern.permute.xlu0 78
        %3319 = vperm.xlu0 %3318, %v3316
        %v3320 = vpop.permute.xlu0 %3319
        %v3323 = vunpack.c.l.s4 839922192
        %v3324 = vunpack.c.0.s8 %v3323
        %v3325 = vlaneseq
        %v3326 = vshrl.u32 %v3325, 7
        %v3327 = vsub.s32 %v3324, %v3326
        %v3328 = vrot.slane %v3320, %v3327
        %v3330 = vcombine.high %v3328, %v3328
        %v3332 = vmul.f32 %v3314, %v3328
        %v3333 = vmul.f32 %v3315, %v3330
        %v3334 = vadd.f32 %v3200, %v3332
        %v3335 = vadd.f32 %v3201, %v3333
        %v3336 = vsel %vm1850, %v2394, 0.0
        %v3337 = vsel %vm1851, %v2395, 0.0
        %v3338 = vld [vmem:[%s5] sm:$0xf]
        %3340 = vset.pattern.permute.xlu0 79
        %3341 = vperm.xlu0 %3340, %v3338
        %v3342 = vpop.permute.xlu0 %3341
        %v3345 = vunpack.c.l.s4 839922192
        %v3346 = vunpack.c.0.s8 %v3345
        %v3347 = vlaneseq
        %v3348 = vshrl.u32 %v3347, 7
        %v3349 = vsub.s32 %v3346, %v3348
        %v3350 = vrot.slane %v3342, %v3349
        %v3352 = vcombine.high %v3350, %v3350
        %v3354 = vmul.f32 %v3336, %v3350
        %v3355 = vmul.f32 %v3337, %v3352
        %v3356 = vadd.f32 %v3233, %v3354
        %v3357 = vadd.f32 %v3234, %v3355
        %v3358 = vsel %vm1917, %v2432, 0.0
        %v3359 = vsel %vm1918, %v2433, 0.0
        %v3360 = vld [vmem:[%s5] sm:$0xf]
        %3362 = vset.pattern.permute.xlu0 80
        %3363 = vperm.xlu0 %3362, %v3360
        %v3364 = vpop.permute.xlu0 %3363
        %v3367 = vunpack.c.l.s4 839922192
        %v3368 = vunpack.c.0.s8 %v3367
        %v3369 = vlaneseq
        %v3370 = vshrl.u32 %v3369, 7
        %v3371 = vsub.s32 %v3368, %v3370
        %v3372 = vrot.slane %v3364, %v3371
        %v3374 = vcombine.high %v3372, %v3372
        %v3376 = vmul.f32 %v3358, %v3372
        %v3377 = vmul.f32 %v3359, %v3374
        %v3378 = vadd.f32 %v3266, %v3376
        %v3379 = vadd.f32 %v3267, %v3377
        %v3380 = vsel %vm1985, %v2469, 0.0
        %v3381 = vsel %vm1986, %v2470, 0.0
        %v3382 = vld [vmem:[%s5] sm:$0xf]
        %3384 = vset.pattern.permute.xlu0 81
        %3385 = vperm.xlu0 %3384, %v3382
        %v3386 = vpop.permute.xlu0 %3385
        %v3389 = vunpack.c.l.s4 839922192
        %v3390 = vunpack.c.0.s8 %v3389
        %v3391 = vlaneseq
        %v3392 = vshrl.u32 %v3391, 7
        %v3393 = vsub.s32 %v3390, %v3392
        %v3394 = vrot.slane %v3386, %v3393
        %v3396 = vcombine.high %v3394, %v3394
        %v3398 = vmul.f32 %v3380, %v3394
        %v3399 = vmul.f32 %v3381, %v3396
        %v3400 = vadd.f32 %v3300, %v3398
        %v3401 = vadd.f32 %v3301, %v3399
        %vm3402 = vmand %vm449, %vm2304
        %v3403 = vsel %vm3402, 1, 0
        %v3404 = vlaneseq
        %v3405 = vshrl.u32 %v3404, 7
        %v3406 = vsub.s32 0, %v3405
        %v3407 = vrot.slane %v3403, %v3406
        %v3408 = vlaneseq
        %v3409 = vshrl.u32 %v3408, 7
        %v3410 = vsub.s32 1, %v3409
        %v3411 = vrot.slane %v3403, %v3410
        %vm3412 = vcmp.eq.s32.totalorder %v3407, 1
        %vm3413 = vcmp.eq.s32.totalorder %v3411, 1
        %v3414 = vsel %vm3412, %v2510, 0.0
        %v3415 = vsel %vm3413, %v2511, 0.0
        %v3416 = vld [vmem:[%s5] sm:$0xf]
        %3418 = vset.pattern.permute.xlu0 82
        %3419 = vperm.xlu0 %3418, %v3416
        %v3420 = vpop.permute.xlu0 %3419
        %v3423 = vunpack.c.l.s4 839922192
        %v3424 = vunpack.c.0.s8 %v3423
        %v3425 = vlaneseq
        %v3426 = vshrl.u32 %v3425, 7
        %v3427 = vsub.s32 %v3424, %v3426
        %v3428 = vrot.slane %v3420, %v3427
        %v3430 = vcombine.high %v3428, %v3428
        %v3432 = vmul.f32 %v3414, %v3428
        %v3433 = vmul.f32 %v3415, %v3430
        %v3434 = vadd.f32 %v3334, %v3432
        %v3435 = vadd.f32 %v3335, %v3433
        %vm3436 = vmand %vm449, %vm2305
        %v3437 = vsel %vm3436, 1, 0
        %v3438 = vlaneseq
        %v3439 = vshrl.u32 %v3438, 7
        %v3440 = vsub.s32 0, %v3439
        %v3441 = vrot.slane %v3437, %v3440
        %v3442 = vlaneseq
        %v3443 = vshrl.u32 %v3442, 7
        %v3444 = vsub.s32 1, %v3443
        %v3445 = vrot.slane %v3437, %v3444
        %vm3446 = vcmp.eq.s32.totalorder %v3441, 1
        %vm3447 = vcmp.eq.s32.totalorder %v3445, 1
        %v3448 = vsel %vm3446, %v2551, 0.0
        %v3449 = vsel %vm3447, %v2552, 0.0
        %v3450 = vld [vmem:[%s5] sm:$0xf]
        %3452 = vset.pattern.permute.xlu0 83
        %3453 = vperm.xlu0 %3452, %v3450
        %v3454 = vpop.permute.xlu0 %3453
        %v3457 = vunpack.c.l.s4 839922192
        %v3458 = vunpack.c.0.s8 %v3457
        %v3459 = vlaneseq
        %v3460 = vshrl.u32 %v3459, 7
        %v3461 = vsub.s32 %v3458, %v3460
        %v3462 = vrot.slane %v3454, %v3461
        %v3464 = vcombine.high %v3462, %v3462
        %v3466 = vmul.f32 %v3448, %v3462
        %v3467 = vmul.f32 %v3449, %v3464
        %v3468 = vadd.f32 %v3356, %v3466
        %v3469 = vadd.f32 %v3357, %v3467
        %vm3470 = vmand %vm2300, %vm2302
        %v3471 = vsel %vm3470, 1, 0
        %v3472 = vlaneseq
        %v3473 = vshrl.u32 %v3472, 7
        %v3474 = vsub.s32 0, %v3473
        %v3475 = vrot.slane %v3471, %v3474
        %v3476 = vlaneseq
        %v3477 = vshrl.u32 %v3476, 7
        %v3478 = vsub.s32 1, %v3477
        %v3479 = vrot.slane %v3471, %v3478
        %vm3480 = vcmp.eq.s32.totalorder %v3475, 1
        %vm3481 = vcmp.eq.s32.totalorder %v3479, 1
        %v3482 = vsel %vm3480, %v2592, 0.0
        %v3483 = vsel %vm3481, %v2593, 0.0
        %v3484 = vld [vmem:[%s5] sm:$0xf]
        %3486 = vset.pattern.permute.xlu0 84
        %3487 = vperm.xlu0 %3486, %v3484
        %v3488 = vpop.permute.xlu0 %3487
        %v3491 = vunpack.c.l.s4 839922192
        %v3492 = vunpack.c.0.s8 %v3491
        %v3493 = vlaneseq
        %v3494 = vshrl.u32 %v3493, 7
        %v3495 = vsub.s32 %v3492, %v3494
        %v3496 = vrot.slane %v3488, %v3495
        %v3498 = vcombine.high %v3496, %v3496
        %v3500 = vmul.f32 %v3482, %v3496
        %v3501 = vmul.f32 %v3483, %v3498
        %v3502 = vadd.f32 %v3378, %v3500
        %v3503 = vadd.f32 %v3379, %v3501
        %vm3504 = vmand %vm2300, %vm2303
        %v3505 = vsel %vm3504, 1, 0
        %v3506 = vlaneseq
        %v3507 = vshrl.u32 %v3506, 7
        %v3508 = vsub.s32 0, %v3507
        %v3509 = vrot.slane %v3505, %v3508
        %v3510 = vlaneseq
        %v3511 = vshrl.u32 %v3510, 7
        %v3512 = vsub.s32 1, %v3511
        %v3513 = vrot.slane %v3505, %v3512
        %vm3514 = vcmp.eq.s32.totalorder %v3509, 1
        %vm3515 = vcmp.eq.s32.totalorder %v3513, 1
        %v3516 = vsel %vm3514, %v2633, 0.0
        %v3517 = vsel %vm3515, %v2634, 0.0
        %v3518 = vld [vmem:[%s5] sm:$0xf]
        %3520 = vset.pattern.permute.xlu0 85
        %3521 = vperm.xlu0 %3520, %v3518
        %v3522 = vpop.permute.xlu0 %3521
        %v3525 = vunpack.c.l.s4 839922192
        %v3526 = vunpack.c.0.s8 %v3525
        %v3527 = vlaneseq
        %v3528 = vshrl.u32 %v3527, 7
        %v3529 = vsub.s32 %v3526, %v3528
        %v3530 = vrot.slane %v3522, %v3529
        %v3532 = vcombine.high %v3530, %v3530
        %v3534 = vmul.f32 %v3516, %v3530
        %v3535 = vmul.f32 %v3517, %v3532
        %v3536 = vadd.f32 %v3400, %v3534
        %v3537 = vadd.f32 %v3401, %v3535
        %vm3538 = vmand %vm2300, %vm452
        %v3539 = vsel %vm3538, 1, 0
        %v3540 = vlaneseq
        %v3541 = vshrl.u32 %v3540, 7
        %v3542 = vsub.s32 0, %v3541
        %v3543 = vrot.slane %v3539, %v3542
        %v3544 = vlaneseq
        %v3545 = vshrl.u32 %v3544, 7
        %v3546 = vsub.s32 1, %v3545
        %v3547 = vrot.slane %v3539, %v3546
        %vm3548 = vcmp.eq.s32.totalorder %v3543, 1
        %vm3549 = vcmp.eq.s32.totalorder %v3547, 1
        %v3550 = vsel %vm3548, %v2673, 0.0
        %v3551 = vsel %vm3549, %v2674, 0.0
        %v3552 = vld [vmem:[%s5] sm:$0xf]
        %3554 = vset.pattern.permute.xlu0 86
        %3555 = vperm.xlu0 %3554, %v3552
        %v3556 = vpop.permute.xlu0 %3555
        %v3559 = vunpack.c.l.s4 839922192
        %v3560 = vunpack.c.0.s8 %v3559
        %v3561 = vlaneseq
        %v3562 = vshrl.u32 %v3561, 7
        %v3563 = vsub.s32 %v3560, %v3562
        %v3564 = vrot.slane %v3556, %v3563
        %v3566 = vcombine.high %v3564, %v3564
        %v3568 = vmul.f32 %v3550, %v3564
        %v3569 = vmul.f32 %v3551, %v3566
        %v3570 = vadd.f32 %v3434, %v3568
        %v3571 = vadd.f32 %v3435, %v3569
        %v3572 = vsel %vm2300, 1, 0
        %v3573 = vlaneseq
        %v3574 = vshrl.u32 %v3573, 7
        %v3575 = vsub.s32 0, %v3574
        %v3576 = vrot.slane %v3572, %v3575
        %v3577 = vlaneseq
        %v3578 = vshrl.u32 %v3577, 7
        %v3579 = vsub.s32 1, %v3578
        %v3580 = vrot.slane %v3572, %v3579
        %vm3581 = vcmp.eq.s32.totalorder %v3576, 1
        %vm3582 = vcmp.eq.s32.totalorder %v3580, 1
        %v3583 = vsel %vm3581, %v2309, 0.0
        %v3584 = vsel %vm3582, %v2308, 0.0
        %v3585 = vld [vmem:[%s5] sm:$0xf]
        %3587 = vset.pattern.permute.xlu0 87
        %3588 = vperm.xlu0 %3587, %v3585
        %v3589 = vpop.permute.xlu0 %3588
        %v3592 = vunpack.c.l.s4 839922192
        %v3593 = vunpack.c.0.s8 %v3592
        %v3594 = vlaneseq
        %v3595 = vshrl.u32 %v3594, 7
        %v3596 = vsub.s32 %v3593, %v3595
        %v3597 = vrot.slane %v3589, %v3596
        %v3599 = vcombine.high %v3597, %v3597
        %v3601 = vmul.f32 %v3583, %v3597
        %v3602 = vmul.f32 %v3584, %v3599
        %v3603 = vadd.f32 %v3468, %v3601
        %v3604 = vadd.f32 %v3469, %v3602
        %vm3605 = vmand %vm2300, %vm455
        %v3606 = vsel %vm3605, 1, 0
        %v3607 = vlaneseq
        %v3608 = vshrl.u32 %v3607, 7
        %v3609 = vsub.s32 0, %v3608
        %v3610 = vrot.slane %v3606, %v3609
        %v3611 = vlaneseq
        %v3612 = vshrl.u32 %v3611, 7
        %v3613 = vsub.s32 1, %v3612
        %v3614 = vrot.slane %v3606, %v3613
        %vm3615 = vcmp.eq.s32.totalorder %v3610, 1
        %vm3616 = vcmp.eq.s32.totalorder %v3614, 1
        %v3617 = vsel %vm3615, %v2747, 0.0
        %v3618 = vsel %vm3616, %v2746, 0.0
        %v3619 = vld [vmem:[%s5] sm:$0xf]
        %3621 = vset.pattern.permute.xlu0 88
        %3622 = vperm.xlu0 %3621, %v3619
        %v3623 = vpop.permute.xlu0 %3622
        %v3626 = vunpack.c.l.s4 839922192
        %v3627 = vunpack.c.0.s8 %v3626
        %v3628 = vlaneseq
        %v3629 = vshrl.u32 %v3628, 7
        %v3630 = vsub.s32 %v3627, %v3629
        %v3631 = vrot.slane %v3623, %v3630
        %v3633 = vcombine.high %v3631, %v3631
        %v3635 = vmul.f32 %v3617, %v3631
        %v3636 = vmul.f32 %v3618, %v3633
        %v3637 = vadd.f32 %v3502, %v3635
        %v3638 = vadd.f32 %v3503, %v3636
        %vm3639 = vmand %vm2300, %vm2304
        %v3640 = vsel %vm3639, 1, 0
        %v3641 = vlaneseq
        %v3642 = vshrl.u32 %v3641, 7
        %v3643 = vsub.s32 0, %v3642
        %v3644 = vrot.slane %v3640, %v3643
        %v3645 = vlaneseq
        %v3646 = vshrl.u32 %v3645, 7
        %v3647 = vsub.s32 1, %v3646
        %v3648 = vrot.slane %v3640, %v3647
        %vm3649 = vcmp.eq.s32.totalorder %v3644, 1
        %vm3650 = vcmp.eq.s32.totalorder %v3648, 1
        %v3651 = vsel %vm3649, %v2788, 0.0
        %v3652 = vsel %vm3650, %v2787, 0.0
        %v3653 = vld [vmem:[%s5] sm:$0xf]
        %3655 = vset.pattern.permute.xlu0 89
        %3656 = vperm.xlu0 %3655, %v3653
        %v3657 = vpop.permute.xlu0 %3656
        %v3660 = vunpack.c.l.s4 839922192
        %v3661 = vunpack.c.0.s8 %v3660
        %v3662 = vlaneseq
        %v3663 = vshrl.u32 %v3662, 7
        %v3664 = vsub.s32 %v3661, %v3663
        %v3665 = vrot.slane %v3657, %v3664
        %v3667 = vcombine.high %v3665, %v3665
        %v3669 = vmul.f32 %v3651, %v3665
        %v3670 = vmul.f32 %v3652, %v3667
        %v3671 = vadd.f32 %v3536, %v3669
        %v3672 = vadd.f32 %v3537, %v3670
        %vm3673 = vmand %vm2300, %vm2305
        %v3674 = vsel %vm3673, 1, 0
        %v3675 = vlaneseq
        %v3676 = vshrl.u32 %v3675, 7
        %v3677 = vsub.s32 0, %v3676
        %v3678 = vrot.slane %v3674, %v3677
        %v3679 = vlaneseq
        %v3680 = vshrl.u32 %v3679, 7
        %v3681 = vsub.s32 1, %v3680
        %v3682 = vrot.slane %v3674, %v3681
        %vm3683 = vcmp.eq.s32.totalorder %v3678, 1
        %vm3684 = vcmp.eq.s32.totalorder %v3682, 1
        %v3685 = vsel %vm3683, %v2829, 0.0
        %v3686 = vsel %vm3684, %v2828, 0.0
        %v3687 = vld [vmem:[%s5] sm:$0xf]
        %3689 = vset.pattern.permute.xlu0 90
        %3690 = vperm.xlu0 %3689, %v3687
        %v3691 = vpop.permute.xlu0 %3690
        %v3694 = vunpack.c.l.s4 839922192
        %v3695 = vunpack.c.0.s8 %v3694
        %v3696 = vlaneseq
        %v3697 = vshrl.u32 %v3696, 7
        %v3698 = vsub.s32 %v3695, %v3697
        %v3699 = vrot.slane %v3691, %v3698
        %v3701 = vcombine.high %v3699, %v3699
        %v3703 = vmul.f32 %v3685, %v3699
        %v3704 = vmul.f32 %v3686, %v3701
        %v3705 = vadd.f32 %v3570, %v3703
        %v3706 = vadd.f32 %v3571, %v3704
        %vm3707 = vmand %vm2301, %vm2302
        %v3708 = vsel %vm3707, 1, 0
        %v3709 = vlaneseq
        %v3710 = vshrl.u32 %v3709, 7
        %v3711 = vsub.s32 0, %v3710
        %v3712 = vrot.slane %v3708, %v3711
        %v3713 = vlaneseq
        %v3714 = vshrl.u32 %v3713, 7
        %v3715 = vsub.s32 1, %v3714
        %v3716 = vrot.slane %v3708, %v3715
        %vm3717 = vcmp.eq.s32.totalorder %v3712, 1
        %vm3718 = vcmp.eq.s32.totalorder %v3716, 1
        %v3719 = vsel %vm3717, %v2318, 0.0
        %v3720 = vsel %vm3718, %v2317, 0.0
        %v3721 = vld [vmem:[%s5] sm:$0xf]
        %3723 = vset.pattern.permute.xlu0 91
        %3724 = vperm.xlu0 %3723, %v3721
        %v3725 = vpop.permute.xlu0 %3724
        %v3728 = vunpack.c.l.s4 839922192
        %v3729 = vunpack.c.0.s8 %v3728
        %v3730 = vlaneseq
        %v3731 = vshrl.u32 %v3730, 7
        %v3732 = vsub.s32 %v3729, %v3731
        %v3733 = vrot.slane %v3725, %v3732
        %v3735 = vcombine.high %v3733, %v3733
        %v3737 = vmul.f32 %v3719, %v3733
        %v3738 = vmul.f32 %v3720, %v3735
        %v3739 = vadd.f32 %v3603, %v3737
        %v3740 = vadd.f32 %v3604, %v3738
        %vm3741 = vmand %vm2301, %vm2303
        %v3742 = vsel %vm3741, 1, 0
        %v3743 = vlaneseq
        %v3744 = vshrl.u32 %v3743, 7
        %v3745 = vsub.s32 0, %v3744
        %v3746 = vrot.slane %v3742, %v3745
        %v3747 = vlaneseq
        %v3748 = vshrl.u32 %v3747, 7
        %v3749 = vsub.s32 1, %v3748
        %v3750 = vrot.slane %v3742, %v3749
        %vm3751 = vcmp.eq.s32.totalorder %v3746, 1
        %vm3752 = vcmp.eq.s32.totalorder %v3750, 1
        %v3753 = vsel %vm3751, %v2357, 0.0
        %v3754 = vsel %vm3752, %v2356, 0.0
        %v3755 = vld [vmem:[%s5] sm:$0xf]
        %3757 = vset.pattern.permute.xlu0 92
        %3758 = vperm.xlu0 %3757, %v3755
        %v3759 = vpop.permute.xlu0 %3758
        %v3762 = vunpack.c.l.s4 839922192
        %v3763 = vunpack.c.0.s8 %v3762
        %v3764 = vlaneseq
        %v3765 = vshrl.u32 %v3764, 7
        %v3766 = vsub.s32 %v3763, %v3765
        %v3767 = vrot.slane %v3759, %v3766
        %v3769 = vcombine.high %v3767, %v3767
        %v3771 = vmul.f32 %v3753, %v3767
        %v3772 = vmul.f32 %v3754, %v3769
        %v3773 = vadd.f32 %v3637, %v3771
        %v3774 = vadd.f32 %v3638, %v3772
        %vm3775 = vmand %vm2301, %vm452
        %v3776 = vsel %vm3775, 1, 0
        %v3777 = vlaneseq
        %v3778 = vshrl.u32 %v3777, 7
        %v3779 = vsub.s32 0, %v3778
        %v3780 = vrot.slane %v3776, %v3779
        %v3781 = vlaneseq
        %v3782 = vshrl.u32 %v3781, 7
        %v3783 = vsub.s32 1, %v3782
        %v3784 = vrot.slane %v3776, %v3783
        %vm3785 = vcmp.eq.s32.totalorder %v3780, 1
        %vm3786 = vcmp.eq.s32.totalorder %v3784, 1
        %v3787 = vsel %vm3785, %v2395, 0.0
        %v3788 = vsel %vm3786, %v2394, 0.0
        %v3789 = vld [vmem:[%s5] sm:$0xf]
        %3791 = vset.pattern.permute.xlu0 93
        %3792 = vperm.xlu0 %3791, %v3789
        %v3793 = vpop.permute.xlu0 %3792
        %v3796 = vunpack.c.l.s4 839922192
        %v3797 = vunpack.c.0.s8 %v3796
        %v3798 = vlaneseq
        %v3799 = vshrl.u32 %v3798, 7
        %v3800 = vsub.s32 %v3797, %v3799
        %v3801 = vrot.slane %v3793, %v3800
        %v3803 = vcombine.high %v3801, %v3801
        %v3805 = vmul.f32 %v3787, %v3801
        %v3806 = vmul.f32 %v3788, %v3803
        %v3807 = vadd.f32 %v3671, %v3805
        %v3808 = vadd.f32 %v3672, %v3806
        %v3809 = vsel %vm2301, 1, 0
        %v3810 = vlaneseq
        %v3811 = vshrl.u32 %v3810, 7
        %v3812 = vsub.s32 0, %v3811
        %v3813 = vrot.slane %v3809, %v3812
        %v3814 = vlaneseq
        %v3815 = vshrl.u32 %v3814, 7
        %v3816 = vsub.s32 1, %v3815
        %v3817 = vrot.slane %v3809, %v3816
        %vm3818 = vcmp.eq.s32.totalorder %v3813, 1
        %vm3819 = vcmp.eq.s32.totalorder %v3817, 1
        %v3820 = vsel %vm3818, %v2433, 0.0
        %v3821 = vsel %vm3819, %v2432, 0.0
        %v3822 = vld [vmem:[%s5] sm:$0xf]
        %3824 = vset.pattern.permute.xlu0 94
        %3825 = vperm.xlu0 %3824, %v3822
        %v3826 = vpop.permute.xlu0 %3825
        %v3829 = vunpack.c.l.s4 839922192
        %v3830 = vunpack.c.0.s8 %v3829
        %v3831 = vlaneseq
        %v3832 = vshrl.u32 %v3831, 7
        %v3833 = vsub.s32 %v3830, %v3832
        %v3834 = vrot.slane %v3826, %v3833
        %v3836 = vcombine.high %v3834, %v3834
        %v3838 = vmul.f32 %v3820, %v3834
        %v3839 = vmul.f32 %v3821, %v3836
        %v3840 = vadd.f32 %v3705, %v3838
        %v3841 = vadd.f32 %v3706, %v3839
        %vm3842 = vmand %vm2301, %vm455
        %v3843 = vsel %vm3842, 1, 0
        %v3844 = vlaneseq
        %v3845 = vshrl.u32 %v3844, 7
        %v3846 = vsub.s32 0, %v3845
        %v3847 = vrot.slane %v3843, %v3846
        %v3848 = vlaneseq
        %v3849 = vshrl.u32 %v3848, 7
        %v3850 = vsub.s32 1, %v3849
        %v3851 = vrot.slane %v3843, %v3850
        %vm3852 = vcmp.eq.s32.totalorder %v3847, 1
        %vm3853 = vcmp.eq.s32.totalorder %v3851, 1
        %v3854 = vsel %vm3852, %v2470, 0.0
        %v3855 = vsel %vm3853, %v2469, 0.0
        %v3856 = vld [vmem:[%s5] sm:$0xf]
        %3858 = vset.pattern.permute.xlu0 95
        %3859 = vperm.xlu0 %3858, %v3856
        %v3860 = vpop.permute.xlu0 %3859
        %v3863 = vunpack.c.l.s4 839922192
        %v3864 = vunpack.c.0.s8 %v3863
        %v3865 = vlaneseq
        %v3866 = vshrl.u32 %v3865, 7
        %v3867 = vsub.s32 %v3864, %v3866
        %v3868 = vrot.slane %v3860, %v3867
        %v3870 = vcombine.high %v3868, %v3868
        %v3872 = vmul.f32 %v3854, %v3868
        %v3873 = vmul.f32 %v3855, %v3870
        %v3874 = vadd.f32 %v3739, %v3872
        %v3875 = vadd.f32 %v3740, %v3873
        %vm3876 = vmand %vm2301, %vm2304
        %v3877 = vsel %vm3876, 1, 0
        %v3878 = vlaneseq
        %v3879 = vshrl.u32 %v3878, 7
        %v3880 = vsub.s32 0, %v3879
        %v3881 = vrot.slane %v3877, %v3880
        %v3882 = vlaneseq
        %v3883 = vshrl.u32 %v3882, 7
        %v3884 = vsub.s32 1, %v3883
        %v3885 = vrot.slane %v3877, %v3884
        %vm3886 = vcmp.eq.s32.totalorder %v3881, 1
        %vm3887 = vcmp.eq.s32.totalorder %v3885, 1
        %v3888 = vsel %vm3886, %v2511, 0.0
        %v3889 = vsel %vm3887, %v2510, 0.0
        %v3890 = vld [vmem:[%s5] sm:$0xf]
        %3892 = vset.pattern.permute.xlu0 96
        %3893 = vperm.xlu0 %3892, %v3890
        %v3894 = vpop.permute.xlu0 %3893
        %v3897 = vunpack.c.l.s4 839922192
        %v3898 = vunpack.c.0.s8 %v3897
        %v3899 = vlaneseq
        %v3900 = vshrl.u32 %v3899, 7
        %v3901 = vsub.s32 %v3898, %v3900
        %v3902 = vrot.slane %v3894, %v3901
        %v3904 = vcombine.high %v3902, %v3902
        %v3906 = vmul.f32 %v3888, %v3902
        %v3907 = vmul.f32 %v3889, %v3904
        %v3908 = vadd.f32 %v3773, %v3906
        %v3909 = vadd.f32 %v3774, %v3907
        %vm3910 = vmand %vm2301, %vm2305
        %v3911 = vsel %vm3910, 1, 0
        %v3912 = vlaneseq
        %v3913 = vshrl.u32 %v3912, 7
        %v3914 = vsub.s32 0, %v3913
        %v3915 = vrot.slane %v3911, %v3914
        %v3916 = vlaneseq
        %v3917 = vshrl.u32 %v3916, 7
        %v3918 = vsub.s32 1, %v3917
        %v3919 = vrot.slane %v3911, %v3918
        %vm3920 = vcmp.eq.s32.totalorder %v3915, 1
        %vm3921 = vcmp.eq.s32.totalorder %v3919, 1
        %v3922 = vsel %vm3920, %v2552, 0.0
        %v3923 = vsel %vm3921, %v2551, 0.0
        %v3924 = vld [vmem:[%s5] sm:$0xf]
        %3926 = vset.pattern.permute.xlu0 97
        %3927 = vperm.xlu0 %3926, %v3924
        %v3928 = vpop.permute.xlu0 %3927
        %v3931 = vunpack.c.l.s4 839922192
        %v3932 = vunpack.c.0.s8 %v3931
        %v3933 = vlaneseq
        %v3934 = vshrl.u32 %v3933, 7
        %v3935 = vsub.s32 %v3932, %v3934
        %v3936 = vrot.slane %v3928, %v3935
        %v3938 = vcombine.high %v3936, %v3936
        %v3940 = vmul.f32 %v3922, %v3936
        %v3941 = vmul.f32 %v3923, %v3938
        %v3942 = vadd.f32 %v3807, %v3940
        %v3943 = vadd.f32 %v3808, %v3941
        %v3944 = vld [vmem:[%s6] sm:$0xf]
        %v3945 = vadd.f32 %v3942, %v3840
        %v3946 = vadd.f32 %v3943, %v3841
        %v3947 = vadd.f32 %v3945, %v3874
        %v3948 = vadd.f32 %v3946, %v3875
        %v3949 = vadd.f32 %v3947, %v3908
        %v3950 = vadd.f32 %v3948, %v3909
        %3952 = vset.pattern.permute.xlu0 1
        %3953 = vperm.xlu0 %3952, %v3944
        %v3954 = vpop.permute.xlu0 %3953
        %v3956 = vadd.f32 %v3949, %v3954
        %v3957 = vadd.f32 %v3950, %v3954
        %v3960 = vrot.slane %v3956, 4
        %v3961 = vrot.slane %v3957, 4
        %3964 = vst [vmem:[#allocation3] sm:$0xf0] %v3960
        %3965 = vst [vmem:[#allocation3 + $0x8] sm:$0xf0] %v3961
        %v3966 = vld [vmem:[#allocation2 + $0x10] sm:$0xf]
        %v3967 = vld [vmem:[#allocation2 + $0x18] sm:$0xf]
        %3968 = vrot.lane.b32.xlu0 %v3966, 8
        %v3969 = vpop.permute.xlu0 %3968
        %3970 = vrot.lane.b32.xlu0 %v3967, 8
        %v3971 = vpop.permute.xlu0 %3970
        %v3972 = vsel %vm2632, %v3969, %v3971
        %v3973 = vsel %vm2632, %v3971, %v3969
        %v3974 = vsel %vm2645, %v3972, 0.0
        %v3975 = vsel %vm2646, %v3973, 0.0
        %v3976 = vld [vmem:[%s5] sm:$0xf]
        %3978 = vset.pattern.permute.xlu0 114
        %3979 = vperm.xlu0 %3978, %v3976
        %v3980 = vpop.permute.xlu0 %3979
        %v3983 = vunpack.c.l.s4 839922192
        %v3984 = vunpack.c.0.s8 %v3983
        %v3985 = vlaneseq
        %v3986 = vshrl.u32 %v3985, 7
        %v3987 = vsub.s32 %v3984, %v3986
        %v3988 = vrot.slane %v3980, %v3987
        %v3990 = vcombine.high %v3988, %v3988
        %v3992 = vmul.f32 %v3974, %v3988
        %v3993 = vmul.f32 %v3975, %v3990
        %v3994 = vsel %vm2718, %v3967, 0.0
        %v3995 = vsel %vm2719, %v3966, 0.0
        %v3996 = vld [vmem:[%s5] sm:$0xf]
        %3998 = vset.pattern.permute.xlu0 115
        %3999 = vperm.xlu0 %3998, %v3996
        %v4000 = vpop.permute.xlu0 %3999
        %v4003 = vunpack.c.l.s4 839922192
        %v4004 = vunpack.c.0.s8 %v4003
        %v4005 = vlaneseq
        %v4006 = vshrl.u32 %v4005, 7
        %v4007 = vsub.s32 %v4004, %v4006
        %v4008 = vrot.slane %v4000, %v4007
        %v4010 = vcombine.high %v4008, %v4008
        %v4012 = vmul.f32 %v3994, %v4008
        %v4013 = vmul.f32 %v3995, %v4010
        %4014 = vrot.lane.b32.xlu0 %v3966, 120
        %v4015 = vpop.permute.xlu0 %4014
        %4016 = vrot.lane.b32.xlu0 %v3967, 120
        %v4017 = vpop.permute.xlu0 %4016
        %v4018 = vsel %vm2786, %v4015, %v4017
        %v4019 = vsel %vm2786, %v4017, %v4015
        %v4020 = vsel %vm2799, %v4019, 0.0
        %v4021 = vsel %vm2800, %v4018, 0.0
        %v4022 = vld [vmem:[%s5] sm:$0xf]
        %4024 = vset.pattern.permute.xlu0 116
        %4025 = vperm.xlu0 %4024, %v4022
        %v4026 = vpop.permute.xlu0 %4025
        %v4029 = vunpack.c.l.s4 839922192
        %v4030 = vunpack.c.0.s8 %v4029
        %v4031 = vlaneseq
        %v4032 = vshrl.u32 %v4031, 7
        %v4033 = vsub.s32 %v4030, %v4032
        %v4034 = vrot.slane %v4026, %v4033
        %v4036 = vcombine.high %v4034, %v4034
        %v4038 = vmul.f32 %v4020, %v4034
        %v4039 = vmul.f32 %v4021, %v4036
        %v4040 = vsel %vm3108, %v3973, 0.0
        %v4041 = vsel %vm3109, %v3972, 0.0
        %v4042 = vld [vmem:[%s5] sm:$0xf]
        %4044 = vset.pattern.permute.xlu0 121
        %4045 = vperm.xlu0 %4044, %v4042
        %v4046 = vpop.permute.xlu0 %4045
        %v4049 = vunpack.c.l.s4 839922192
        %v4050 = vunpack.c.0.s8 %v4049
        %v4051 = vlaneseq
        %v4052 = vshrl.u32 %v4051, 7
        %v4053 = vsub.s32 %v4050, %v4052
        %v4054 = vrot.slane %v4046, %v4053
        %v4056 = vcombine.high %v4054, %v4054
        %v4058 = vmul.f32 %v4040, %v4054
        %v4059 = vmul.f32 %v4041, %v4056
        %v4060 = vld [vmem:[%s5] sm:$0xf]
        %4062 = vset.pattern.permute.xlu0 122
        %4063 = vperm.xlu0 %4062, %v4060
        %v4064 = vpop.permute.xlu0 %4063
        %v4067 = vunpack.c.l.s4 839922192
        %v4068 = vunpack.c.0.s8 %v4067
        %v4069 = vlaneseq
        %v4070 = vshrl.u32 %v4069, 7
        %v4071 = vsub.s32 %v4068, %v4070
        %v4072 = vrot.slane %v4064, %v4071
        %v4074 = vcombine.high %v4072, %v4072
        %v4076 = vmul.f32 %v3966, %v4072
        %v4077 = vmul.f32 %v3967, %v4074
        %v4078 = vadd.f32 %v3992, %v4076
        %v4079 = vadd.f32 %v3993, %v4077
        %v4080 = vsel %vm3211, %v4018, 0.0
        %v4081 = vsel %vm3212, %v4019, 0.0
        %v4082 = vld [vmem:[%s5] sm:$0xf]
        %4084 = vset.pattern.permute.xlu0 123
        %4085 = vperm.xlu0 %4084, %v4082
        %v4086 = vpop.permute.xlu0 %4085
        %v4089 = vunpack.c.l.s4 839922192
        %v4090 = vunpack.c.0.s8 %v4089
        %v4091 = vlaneseq
        %v4092 = vshrl.u32 %v4091, 7
        %v4093 = vsub.s32 %v4090, %v4092
        %v4094 = vrot.slane %v4086, %v4093
        %v4096 = vcombine.high %v4094, %v4094
        %v4098 = vmul.f32 %v4080, %v4094
        %v4099 = vmul.f32 %v4081, %v4096
        %v4100 = vadd.f32 %v4012, %v4098
        %v4101 = vadd.f32 %v4013, %v4099
        %v4102 = vsel %vm3514, %v3972, 0.0
        %v4103 = vsel %vm3515, %v3973, 0.0
        %v4104 = vld [vmem:[%s5 + $0x4] sm:$0xf]
        %4106 = vset.pattern.permute.xlu0 0
        %4107 = vperm.xlu0 %4106, %v4104
        %v4108 = vpop.permute.xlu0 %4107
        %v4111 = vunpack.c.l.s4 839922192
        %v4112 = vunpack.c.0.s8 %v4111
        %v4113 = vlaneseq
        %v4114 = vshrl.u32 %v4113, 7
        %v4115 = vsub.s32 %v4112, %v4114
        %v4116 = vrot.slane %v4108, %v4115
        %v4118 = vcombine.high %v4116, %v4116
        %v4120 = vmul.f32 %v4102, %v4116
        %v4121 = vmul.f32 %v4103, %v4118
        %v4122 = vadd.f32 %v4038, %v4120
        %v4123 = vadd.f32 %v4039, %v4121
        %v4124 = vsel %vm3581, %v3967, 0.0
        %v4125 = vsel %vm3582, %v3966, 0.0
        %v4126 = vld [vmem:[%s5 + $0x4] sm:$0xf]
        %4128 = vset.pattern.permute.xlu0 1
        %4129 = vperm.xlu0 %4128, %v4126
        %v4130 = vpop.permute.xlu0 %4129
        %v4133 = vunpack.c.l.s4 839922192
        %v4134 = vunpack.c.0.s8 %v4133
        %v4135 = vlaneseq
        %v4136 = vshrl.u32 %v4135, 7
        %v4137 = vsub.s32 %v4134, %v4136
        %v4138 = vrot.slane %v4130, %v4137
        %v4140 = vcombine.high %v4138, %v4138
        %v4142 = vmul.f32 %v4124, %v4138
        %v4143 = vmul.f32 %v4125, %v4140
        %v4144 = vadd.f32 %v4058, %v4142
        %v4145 = vadd.f32 %v4059, %v4143
        %v4146 = vsel %vm3649, %v4019, 0.0
        %v4147 = vsel %vm3650, %v4018, 0.0
        %v4148 = vld [vmem:[%s5 + $0x4] sm:$0xf]
        %4150 = vset.pattern.permute.xlu0 2
        %4151 = vperm.xlu0 %4150, %v4148
        %v4152 = vpop.permute.xlu0 %4151
        %v4155 = vunpack.c.l.s4 839922192
        %v4156 = vunpack.c.0.s8 %v4155
        %v4157 = vlaneseq
        %v4158 = vshrl.u32 %v4157, 7
        %v4159 = vsub.s32 %v4156, %v4158
        %v4160 = vrot.slane %v4152, %v4159
        %v4162 = vcombine.high %v4160, %v4160
        %v4164 = vmul.f32 %v4146, %v4160
        %v4165 = vmul.f32 %v4147, %v4162
        %v4166 = vadd.f32 %v4078, %v4164
        %v4167 = vadd.f32 %v4079, %v4165
        %v4168 = vld [vmem:[%s6] sm:$0xf]
        %v4169 = vadd.f32 %v4166, %v4100
        %v4170 = vadd.f32 %v4167, %v4101
        %v4171 = vadd.f32 %v4169, %v4122
        %v4172 = vadd.f32 %v4170, %v4123
        %v4173 = vadd.f32 %v4171, %v4144
        %v4174 = vadd.f32 %v4172, %v4145
        %4176 = vset.pattern.permute.xlu0 2
        %4177 = vperm.xlu0 %4176, %v4168
        %v4178 = vpop.permute.xlu0 %4177
        %v4180 = vadd.f32 %v4173, %v4178
        %v4181 = vadd.f32 %v4174, %v4178
        %4182 = vst [vmem:[#allocation3 + $0x10] sm:$0xf] %v4180
        %4183 = vst [vmem:[#allocation3 + $0x18] sm:$0xf] %v4181
        %v4184 = vld [vmem:[%s7] sm:$0xf]
        %v4185 = vld [vmem:[#allocation3] sm:$0xff]
        %v4186 = vld [vmem:[#allocation3 + $0x8] sm:$0xff]
        %v4187 = vld [vmem:[#allocation3 + $0x10] sm:$0xf]
        %v4188 = vld [vmem:[#allocation3 + $0x18] sm:$0xf]
        %v4189 = vld [vmem:[%s8] sm:$0xf]
        %4191 = vset.pattern.permute.xlu0 0
        %4192 = vperm.xlu0 %4191, %v4189
        %v4193 = vpop.permute.xlu0 %4192
        %vm4195 = vcmask 97280
        %v4197 = vsel %vm4195, %v4184, 0
        %v4200 = vsel %vm357, %v4187, 0
        %v4203 = vsel %vm357, %v4188, 0
        %4205 = vmatprep.subr.mxu0 %v4186
        %4206 = vmatpush1.msra.mxu0 %v4185
        %4207 = vmatprep.subr.mxu0 %v4203
        %4208 = vmatpush1.msra.mxu0 %v4200
        %4209 = vmatprep.subr.mxu0 0.0
        %4210 = vmatpush1.msra.mxu0 0.0
        %4211 = vmatprep.subr.mxu0 0.0
        %4212 = vmatpush1.msra.mxu0 0.0
        %4213 = vmatprep.subr.mxu0 0.0
        %4214 = vmatpush1.msra.mxu0 0.0
        %4215 = vmatprep.subr.mxu0 0.0
        %4216 = vmatpush1.msra.mxu0 0.0
        %4217 = vmatprep.subr.mxu0 0.0
        %4218 = vmatpush1.msra.mxu0 0.0
        %4219 = vmatprep.subr.mxu0 0.0
        %4220 = vmatpush1.msra.mxu0 0.0
        %4221 = vmatprep.subr.mxu0 0.0
        %4222 = vmatpush1.msra.mxu0 0.0
        %4223 = vmatprep.subr.mxu0 0.0
        %4224 = vmatpush1.msra.mxu0 0.0
        %4225 = vmatprep.subr.mxu0 0.0
        %4226 = vmatpush1.msra.mxu0 0.0
        %4227 = vmatprep.subr.mxu0 0.0
        %4228 = vmatpush1.msra.mxu0 0.0
        %4229 = vmatprep.subr.mxu0 0.0
        %4230 = vmatpush1.msra.mxu0 0.0
        %4231 = vmatprep.subr.mxu0 0.0
        %4232 = vmatpush1.msra.mxu0 0.0
        %4233 = vmatprep.subr.mxu0 0.0
        %4234 = vmatpush1.msra.mxu0 0.0
        %4235 = vmatprep.subr.mxu0 0.0
        %4236 = vmatpush1.msra.mxu0 0.0
        %4237 = vmatprep.subr.mxu0 0.0
        %4238 = vmatpush1.msra.mxu0 0.0
        %4239 = vmatprep.subr.mxu0 0.0
        %4240 = vmatpush1.msra.mxu0 0.0
        %4241 = vmatprep.subr.mxu0 0.0
        %4242 = vmatpush1.msra.mxu0 0.0
        %4243 = vmatprep.subr.mxu0 0.0
        %4244 = vmatpush1.msra.mxu0 0.0
        %4245 = vmatprep.subr.mxu0 0.0
        %4246 = vmatpush1.msra.mxu0 0.0
        %4247 = vmatprep.subr.mxu0 0.0
        %4248 = vmatpush1.msra.mxu0 0.0
        %4249 = vmatprep.subr.mxu0 0.0
        %4250 = vmatpush1.msra.mxu0 0.0
        %4251 = vmatprep.subr.mxu0 0.0
        %4252 = vmatpush1.msra.mxu0 0.0
        %4253 = vmatprep.subr.mxu0 0.0
        %4254 = vmatpush1.msra.mxu0 0.0
        %4255 = vmatprep.subr.mxu0 0.0
        %4256 = vmatpush1.msra.mxu0 0.0
        %4257 = vmatprep.subr.mxu0 0.0
        %4258 = vmatpush1.msra.mxu0 0.0
        %4259 = vmatprep.subr.mxu0 0.0
        %4260 = vmatpush1.msra.mxu0 0.0
        %4261 = vmatprep.subr.mxu0 0.0
        %4262 = vmatpush1.msra.mxu0 0.0
        %4263 = vmatprep.subr.mxu0 0.0
        %4264 = vmatpush1.msra.mxu0 0.0
        %4265 = vmatprep.subr.mxu0 0.0
        %4266 = vmatpush1.msra.mxu0 0.0
        %4267 = vmatprep.subr.mxu0 0.0
        %4268 = vmatpush1.msra.mxu0 0.0
        %4269 = vmatprep.mubr.f32.mxu0 0.0
        %4270 = vmatmul.mubr.f32.gmra.mrb[0].mxu0 %v4197
        %v4271 = vpop.f32.mrb[0].mxu0
        %v4272 = vadd.f32 %v4193, %v4271
        %v4273 = vpop.f32.mrb[0].mxu0
        %v4274 = vadd.f32 %v4193, %v4273
        %4275 = vdwg.mxu0
        %v4278 = vcombine.low %v4272, %v4274
        %4280 = vst [vmem:[%s325] sm:$0xff] %v4278
        %s4281 = sand.u32 %s225, 1
        %s4282 = scalar_lea.sflag [#allocation5], %s4281
        %s4283 = sand.u32 %s225, 1
        %s4284 = smul.addr %s4283, 8
        %s4285 = scalar_lea.vmem [#allocation4], %s4284
        // Predicated region
        $region57: #{tpu_custom_call.1} parent=55 // pred_check
          %p4286 = pneg %p235
        $region58: #{tpu_custom_call.1} parent=55 // pred_check_branch
          %4288 = sbr.rel (%p4286) target = $region60
        $region59: #{tpu_custom_call.1} parent=55 // pred_region
          %s4290 = ssub.s32 128, 128
          %4291 = vsyncadd %s4282, %s4290
          %s4292 = smul.addr %s23, 2
          %s4293 = smul.addr %s4292, 64
          %s4294 = scalar_lea.hbm %s9, %s4293
          %s4296 = sshll.u32 %s4285, 4
          %s4297 = int_to_ptr.vmem [resolvable:$true] %s4296
          %4299 = dma.vmem_to_hbm [thread:$0]  %s4297, 128, %s4294, %s4282
        $region60: #{tpu_custom_call.1} parent=55 // pred_fallthru
          _
      $region56: #{tpu_custom_call.1} parent=5 // pred_fallthru
        _
      %p4300 = scmp.le.s32.totalorder 2, %s18
      // Predicated region
      $region61: #{tpu_custom_call.1} parent=5 // pred_check
        %p4301 = pneg %p4300
      $region62: #{tpu_custom_call.1} parent=5 // pred_check_branch
        %4303 = sbr.rel (%p4301) target = $region64
      $region63: #{tpu_custom_call.1} parent=5 // pred_region
        %s4304 = ssub.s32 %s18, 2
        // Predicated region
        $region65: #{tpu_custom_call.1} parent=63 // pred_check
          %p4305 = pneg %p241
        $region66: #{tpu_custom_call.1} parent=63 // pred_check_branch
          %4307 = sbr.rel (%p4305) target = $region68
        $region67: #{tpu_custom_call.1} parent=63 // pred_region
          %s4308 = sand.u32 %s226, 1
          %s4309 = scalar_lea.sflag [#allocation5], %s4308
          %s4310 = sand.u32 %s226, 1
          %s4311 = smul.addr %s4310, 8
          %s4312 = scalar_lea.vmem [#allocation4], %s4311
          %4313 = dma.done %s4309, 128
        $region68: #{tpu_custom_call.1} parent=63 // pred_fallthru
          _
      $region64: #{tpu_custom_call.1} parent=5 // pred_fallthru
        _
    $region6: #{tpu_custom_call.1} parent=1 // loop_footer
      %s22 = sadd.s32 1, %s18
    $region7: #{tpu_custom_call.1} parent=1 // loop_footer_branch
      %17 = sbr.rel target = $region3
    $region8: #{tpu_custom_call.1} parent=1 // loop_exit
      _
    %4314 = vsyncpa [#allocation5], 1
    %s4315 = scalar_lea.sflag [#allocation5], 1
    %4316 = vsyncpa %s4315, 1

</llo_original>
